<compile_context>
chip_gen: v7x
topology: tpu7x:2x2x1
jax: 0.10.0
libtpu: 0.0.40
codegen_flags: <defaults>
</compile_context>

<pallas_src>
import jax
import jax.numpy as jnp
from jax import lax
from jax.experimental import pallas as pl
from jax.experimental.pallas import tpu as pltpu

EPS_BN = 1e-5
EPS_IN = 1e-5
EPS_GN = 1e-10
GROUPS = 16  # GroupBatchnorm2d default group_num


def _selective_conv_kernel(z_ref, w1_ref, b1_ref, w3_ref, b3_ref, wd_ref, bd_ref,
                           out_ref, pad1_ref, pad3_ref):
    B, Hp2, Wp2, C4 = pad1_ref.shape
    H, W = Hp2 - 2, Wp2 - 2
    N = B * H * W
    HW = H * W
    C2 = C4 // 2          # fused channel count 2C ([x | y])
    C = C2 // 2

    # --- zero ONLY the 1-pixel halo of the pad scratches; interiors are fully rewritten ---
    def zero_halo(ref):
        b, hp, wp, cp = ref.shape
        ref[:, 0:1, :, :] = jnp.zeros((b, 1, wp, cp), ref.dtype)
        ref[:, hp - 1:hp, :, :] = jnp.zeros((b, 1, wp, cp), ref.dtype)
        ref[:, :, 0:1, :] = jnp.zeros((b, hp, 1, cp), ref.dtype)
        ref[:, :, wp - 1:wp, :] = jnp.zeros((b, hp, 1, cp), ref.dtype)

    zero_halo(pad1_ref)
    zero_halo(pad3_ref)

    z = z_ref[...]                       # (N, 2C) f32, [x | y] channel-concatenated
    inv_n = 1.0 / N
    inv_hw = 1.0 / HW

    def batchnorm(v):                    # per-channel batch stats (training mode), one pass
        s = jnp.sum(v, axis=0, keepdims=True)
        q = jnp.sum(v * v, axis=0, keepdims=True)
        m = s * inv_n
        var = jnp.maximum(q * inv_n - m * m, 0.0)   # clamp: rsqrt(neg + eps) would NaN
        return (v - m) * lax.rsqrt(var + EPS_BN)

    def instnorm(v):                     # per-(B, channel) stats over (H, W), one pass
        v3 = v.reshape(B, HW, C2)
        s = jnp.sum(v3, axis=1, keepdims=True)
        q = jnp.sum(v3 * v3, axis=1, keepdims=True)
        m = s * inv_hw
        var = jnp.maximum(q * inv_hw - m * m, 0.0)
        return ((v3 - m) * lax.rsqrt(var + EPS_IN)).reshape(N, C2)

    def conv3x3(pad_ref, w_ref, b_ref, cin):
        # No materialized im2col: 9 accumulating MXU matmuls on shifted padded views.
        # Taps are cast to bf16 only at the MXU operand boundary; accumulation stays f32.
        acc = None
        for kh in range(3):
            for kw in range(3):
                t = kh * 3 + kw
                tap = pad_ref[:, kh:kh + H, kw:kw + W, :].reshape(N, cin)
                d = jnp.dot(tap.astype(jnp.bfloat16), w_ref[t],
                            preferred_element_type=jnp.float32)
                acc = d if acc is None else acc + d
        return acc + b_ref[...]

    # ---- stage 1: fused BN/IN on the [x|y] slab -> ONE block-diagonal 3x3 conv (Cin=4C) ----
    # pad1 channel layout: [BN(x), BN(y), IN(x), IN(y)]  (matches the fused weight rows)
    pad1_ref[:, 1:H + 1, 1:W + 1, :C2] = batchnorm(z).reshape(B, H, W, C2)
    pad1_ref[:, 1:H + 1, 1:W + 1, C2:] = instnorm(z).reshape(B, H, W, C2)
    res = conv3x3(pad1_ref, w1_ref, b1_ref, C4)            # (N, 2C) f32 = [resx | resy]

    # ---- GroupBatchnorm2d over cat(resx, resy): per-(B, group) joint stats, one pass ----
    cpg = C // GROUPS                     # channels per group
    n_el = 2 * cpg * HW                   # elements per (batch, group) in the cat view
    res3 = res.reshape(B, HW, C2)
    s_c = jnp.sum(res3, axis=1)                            # (B, 2C)
    q_c = jnp.sum(res3 * res3, axis=1)
    sx, sy = s_c[:, :C], s_c[:, C:]
    qx, qy = q_c[:, :C], q_c[:, C:]
    if cpg == 1:
        s_g, q_g = sx + sy, qx + qy                        # (B, GROUPS)
        expand = lambda g: g
    else:
        gsum = lambda v: jnp.sum(v.reshape(B, GROUPS, cpg), axis=-1)
        s_g, q_g = gsum(sx) + gsum(sy), gsum(qx) + gsum(qy)
        expand = lambda g: jnp.broadcast_to(g[:, :, None], (B, GROUPS, cpg)).reshape(B, C)
    mean_g = s_g / n_el
    var_g = jnp.maximum((q_g - s_g * mean_g) / (n_el - 1), 0.0)   # unbiased (torch.std)
    inv_g = 1.0 / (jnp.sqrt(var_g) + EPS_GN)               # tiny (B, GROUPS) tensor
    mean_c, inv_c = expand(mean_g), expand(inv_g)          # (B, C)
    mean_b = jnp.concatenate([mean_c, mean_c], axis=-1)[:, None, :]   # (B, 1, 2C)
    inv_b = jnp.concatenate([inv_c, inv_c], axis=-1)[:, None, :]
    gn = ((res3 - mean_b) * inv_b).reshape(N, C2)          # multiply by reciprocal, no divide

    # ---- stage 3: fused block-diag 3x3 conv -> fused 1x1 Dcon -> BN -> ReLU -> residual ----
    pad3_ref[:, 1:H + 1, 1:W + 1, :] = gn.reshape(B, H, W, C2)
    out3 = conv3x3(pad3_ref, w3_ref, b3_ref, C2)           # (N, 2C)

    d = jnp.dot(out3.astype(jnp.bfloat16), wd_ref[...],
                preferred_element_type=jnp.float32) + bd_ref[...]
    out_ref[...] = jnp.maximum(batchnorm(d), 0.0) + z      # fused (N, 2C) output slab


def selective_conv(x_nchw, y_nchw, p):
    B, C, H, W = x_nchw.shape
    assert C % GROUPS == 0 and C >= GROUPS
    N = B * H * W
    # contiguous (pixels, channels) slabs; NCHW <-> NHWC plumbing stays outside the kernel.
    x = jnp.transpose(x_nchw, (0, 2, 3, 1)).astype(jnp.float32).reshape(N, C)
    y = jnp.transpose(y_nchw, (0, 2, 3, 1)).astype(jnp.float32).reshape(N, C)
    z = jnp.concatenate([x, y], axis=1)                    # (N, 2C) fused [x | y]

    zc = jnp.zeros((9, C, C), jnp.float32)
    # stage-1 fused block-diagonal weights; input rows = [BN(x), BN(y), IN(x), IN(y)],
    # output cols = [resx | resy]
    w1 = jnp.concatenate([
        jnp.concatenate([p['w1x'], zc], axis=2),
        jnp.concatenate([zc, p['w1y']], axis=2),
        jnp.concatenate([p['w2x'], zc], axis=2),
        jnp.concatenate([zc, p['w2y']], axis=2)], axis=1).astype(jnp.bfloat16)   # (9,4C,2C)
    b1 = jnp.concatenate([p['b1x'] + p['b2x'], p['b1y'] + p['b2y']], axis=1).astype(jnp.float32)
    # stage-3 fused block-diagonal 3x3 weights
    w3 = jnp.concatenate([
        jnp.concatenate([p['w3x'], zc], axis=2),
        jnp.concatenate([zc, p['w3y']], axis=2)], axis=1).astype(jnp.bfloat16)   # (9,2C,2C)
    b3 = jnp.concatenate([p['b3x'], p['b3y']], axis=1).astype(jnp.float32)
    # fused block-diagonal 1x1 Dcon weights
    zc1 = jnp.zeros((C, C), jnp.float32)
    wd = jnp.concatenate([
        jnp.concatenate([p['wdx'], zc1], axis=1),
        jnp.concatenate([zc1, p['wdy']], axis=1)], axis=0).astype(jnp.bfloat16)  # (2C,2C)
    bd = jnp.concatenate([p['bdx'], p['bdy']], axis=1).astype(jnp.float32)

    vmem = pl.BlockSpec(memory_space=pltpu.MemorySpace.VMEM)
    out2 = pl.pallas_call(
        _selective_conv_kernel,
        out_shape=jax.ShapeDtypeStruct((N, 2 * C), jnp.float32),
        in_specs=[vmem] * 7,
        out_specs=vmem,
        scratch_shapes=[pltpu.VMEM((B, H + 2, W + 2, 4 * C), jnp.float32),  # stage-1 pad
                        pltpu.VMEM((B, H + 2, W + 2, 2 * C), jnp.float32)], # stage-3 pad
    )(z, w1, b1, w3, b3, wd, bd)
    outx = jnp.transpose(out2[:, :C].reshape(B, H, W, C), (0, 3, 1, 2))
    outy = jnp.transpose(out2[:, C:].reshape(B, H, W, C), (0, 3, 1, 2))
    return outx, outy


# -------- pure-JAX reference (mirrors PyTorch structure; bf16 matmul operands like kernel) --------
def reference(x_nchw, y_nchw, p):
    B, C, H, W = x_nchw.shape
    x = jnp.transpose(x_nchw, (0, 2, 3, 1)).astype(jnp.float32)
    y = jnp.transpose(y_nchw, (0, 2, 3, 1)).astype(jnp.float32)

    def bn(v):
        m = jnp.mean(v, axis=(0, 1, 2), keepdims=True)
        va = jnp.mean((v - m) ** 2, axis=(0, 1, 2), keepdims=True)
        return (v - m) / jnp.sqrt(va + EPS_BN)

    def inn(v):
        m = jnp.mean(v, axis=(1, 2), keepdims=True)
        va = jnp.mean((v - m) ** 2, axis=(1, 2), keepdims=True)
        return (v - m) / jnp.sqrt(va + EPS_IN)

    def c3(v, w, b):
        wk = w.reshape(3, 3, C, C).astype(jnp.bfloat16)
        r = jax.lax.conv_general_dilated(v.astype(jnp.bfloat16), wk, (1, 1), ((1, 1), (1, 1)),
                                         dimension_numbers=('NHWC', 'HWIO', 'NHWC'),
                                         preferred_element_type=jnp.float32)
        return r + b.reshape(1, 1, 1, C)

    def c1(v, w, b):
        return jnp.einsum('bhwc,cd->bhwd', v.astype(jnp.bfloat16), w.astype(jnp.bfloat16),
                          preferred_element_type=jnp.float32) + b.reshape(1, 1, 1, C)

    resx = c3(bn(x), p['w1x'], p['b1x']) + c3(inn(x), p['w2x'], p['b2x'])
    resy = c3(bn(y), p['w1y'], p['b1y']) + c3(inn(y), p['w2y'], p['b2y'])

    rxg = jnp.transpose(resx, (0, 3, 1, 2)).reshape(B, GROUPS, -1)
    ryg = jnp.transpose(resy, (0, 3, 1, 2)).reshape(B, GROUPS, -1)
    cat = jnp.concatenate([rxg, ryg], axis=-1)
    m = jnp.mean(cat, axis=2, keepdims=True)
    s = jnp.std(cat, axis=2, keepdims=True, ddof=1)
    catn = (cat - m) / (s + EPS_GN)
    xn, yn = jnp.split(catn, 2, axis=-1)
    x_in = jnp.transpose(xn.reshape(B, C, H, W), (0, 2, 3, 1))
    y_in = jnp.transpose(yn.reshape(B, C, H, W), (0, 2, 3, 1))

    ox = jnp.maximum(bn(c1(c3(x_in, p['w3x'], p['b3x']), p['wdx'], p['bdx'])), 0.0) + x
    oy = jnp.maximum(bn(c1(c3(y_in, p['w3y'], p['b3y']), p['wdy'], p['bdy'])), 0.0) + y
    return jnp.transpose(ox, (0, 3, 1, 2)), jnp.transpose(oy, (0, 3, 1, 2))


if __name__ == "__main__":
    # SelectiveConv(kernel_size=3, padding=1, in_channels=16, out_channels=16)
    # (GroupBatchnorm2d requires in_channels >= 16; Dconx's BatchNorm requires out == in.)
    B, C, H, W = 2, 16, 8, 8
    key = jax.random.PRNGKey(0)
    ks = jax.random.split(key, 20)

    def w3(k):
        bound = 1.0 / (C * 9) ** 0.5
        return jax.random.uniform(k, (9, C, C), jnp.float32, -bound, bound)

    def b3(k):
        bound = 1.0 / (C * 9) ** 0.5
        return jax.random.uniform(k, (1, C), jnp.float32, -bound, bound)

    def w1(k):
        bound = 1.0 / C ** 0.5
        return jax.random.uniform(k, (C, C), jnp.float32, -bound, bound)

    def b1(k):
        bound = 1.0 / C ** 0.5
        return jax.random.uniform(k, (1, C), jnp.float32, -bound, bound)

    params = {
        'w1x': w3(ks[0]), 'b1x': b3(ks[1]),
        'w2x': w3(ks[2]), 'b2x': b3(ks[3]),
        'w3x': w3(ks[4]), 'b3x': b3(ks[5]),
        'w1y': w3(ks[6]), 'b1y': b3(ks[7]),
        'w2y': w3(ks[8]), 'b2y': b3(ks[9]),
        'w3y': w3(ks[10]), 'b3y': b3(ks[11]),
        'wdx': w1(ks[12]), 'bdx': b1(ks[13]),
        'wdy': w1(ks[14]), 'bdy': b1(ks[15]),
    }
    x = jax.random.normal(ks[16], (B, C, H, W), jnp.float32)
    y = jax.random.normal(ks[17], (B, C, H, W), jnp.float32)

    outx, outy = selective_conv(x, y, params)
    jax.block_until_ready((outx, outy))

    rx, ry = reference(x, y, params)
    assert outx.shape == (B, C, H, W) and outy.shape == (B, C, H, W)
    assert bool(jnp.all(jnp.isfinite(outx))) and bool(jnp.all(jnp.isfinite(outy)))
    # bf16 MXU operands (f32 accumulation) in both kernel and reference -> 2e-3 tolerance
    assert jnp.allclose(outx, rx, rtol=2e-3, atol=2e-3), float(jnp.max(jnp.abs(outx - rx)))
    assert jnp.allclose(outy, ry, rtol=2e-3, atol=2e-3), float(jnp.max(jnp.abs(outy - ry)))
    print("KERNEL_OK")
</pallas_src>

<mosaic_0001>
module attributes {stable_mosaic.version = 11 : i64} {
  func.func @_selective_conv_kernel(%arg0: memref<128x32xf32, #tpu.memory_space<vmem>>, %arg1: memref<9x64x32xbf16, #tpu.memory_space<vmem>>, %arg2: memref<1x32xf32, #tpu.memory_space<vmem>>, %arg3: memref<9x32x32xbf16, #tpu.memory_space<vmem>>, %arg4: memref<1x32xf32, #tpu.memory_space<vmem>>, %arg5: memref<32x32xbf16, #tpu.memory_space<vmem>>, %arg6: memref<1x32xf32, #tpu.memory_space<vmem>>, %arg7: memref<128x32xf32, #tpu.memory_space<vmem>>, %arg8: memref<2x10x10x64xf32, #tpu.memory_space<vmem>>, %arg9: memref<2x10x10x32xf32, #tpu.memory_space<vmem>>) attributes {dimension_semantics = [], scalar_prefetch = 0 : i64, scratch_operands = 2 : i64, tpu.core_type = #tpu.core_type<tc>} {
    %cst = arith.constant 0.000000e+00 : f32
    %0 = vector.broadcast %cst : f32 to vector<2x1x10x64xf32>
    %c0 = arith.constant 0 : index
    %c0_0 = arith.constant 0 : index
    %c0_1 = arith.constant 0 : index
    %c0_2 = arith.constant 0 : index
    %1 = vector.load %arg8[%c0, %c0_0, %c0_1, %c0_2] : memref<2x10x10x64xf32, #tpu.memory_space<vmem>>, vector<2x1x10x64xf32>
    tpu.vector_store %arg8[%c0, %c0_0, %c0_1, %c0_2], %0 {strides = array<i32>} : memref<2x10x10x64xf32, #tpu.memory_space<vmem>>, vector<2x1x10x64xf32>,
    %cst_3 = arith.constant 0.000000e+00 : f32
    %2 = vector.broadcast %cst_3 : f32 to vector<2x1x10x64xf32>
    %c0_4 = arith.constant 0 : index
    %c9 = arith.constant 9 : index
    %c0_5 = arith.constant 0 : index
    %c0_6 = arith.constant 0 : index
    %3 = vector.load %arg8[%c0_4, %c9, %c0_5, %c0_6] : memref<2x10x10x64xf32, #tpu.memory_space<vmem>>, vector<2x1x10x64xf32>
    tpu.vector_store %arg8[%c0_4, %c9, %c0_5, %c0_6], %2 {strides = array<i32>} : memref<2x10x10x64xf32, #tpu.memory_space<vmem>>, vector<2x1x10x64xf32>,
    %cst_7 = arith.constant 0.000000e+00 : f32
    %4 = vector.broadcast %cst_7 : f32 to vector<2x10x1x64xf32>
    %c0_8 = arith.constant 0 : index
    %c0_9 = arith.constant 0 : index
    %c0_10 = arith.constant 0 : index
    %c0_11 = arith.constant 0 : index
    %5 = vector.load %arg8[%c0_8, %c0_9, %c0_10, %c0_11] : memref<2x10x10x64xf32, #tpu.memory_space<vmem>>, vector<2x10x1x64xf32>
    tpu.vector_store %arg8[%c0_8, %c0_9, %c0_10, %c0_11], %4 {strides = array<i32>} : memref<2x10x10x64xf32, #tpu.memory_space<vmem>>, vector<2x10x1x64xf32>,
    %cst_12 = arith.constant 0.000000e+00 : f32
    %6 = vector.broadcast %cst_12 : f32 to vector<2x10x1x64xf32>
    %c0_13 = arith.constant 0 : index
    %c0_14 = arith.constant 0 : index
    %c9_15 = arith.constant 9 : index
    %c0_16 = arith.constant 0 : index
    %7 = vector.load %arg8[%c0_13, %c0_14, %c9_15, %c0_16] : memref<2x10x10x64xf32, #tpu.memory_space<vmem>>, vector<2x10x1x64xf32>
    tpu.vector_store %arg8[%c0_13, %c0_14, %c9_15, %c0_16], %6 {strides = array<i32>} : memref<2x10x10x64xf32, #tpu.memory_space<vmem>>, vector<2x10x1x64xf32>,
    %cst_17 = arith.constant 0.000000e+00 : f32
    %8 = vector.broadcast %cst_17 : f32 to vector<2x1x10x32xf32>
    %c0_18 = arith.constant 0 : index
    %c0_19 = arith.constant 0 : index
    %c0_20 = arith.constant 0 : index
    %c0_21 = arith.constant 0 : index
    %9 = vector.load %arg9[%c0_18, %c0_19, %c0_20, %c0_21] : memref<2x10x10x32xf32, #tpu.memory_space<vmem>>, vector<2x1x10x32xf32>
    tpu.vector_store %arg9[%c0_18, %c0_19, %c0_20, %c0_21], %8 {strides = array<i32>} : memref<2x10x10x32xf32, #tpu.memory_space<vmem>>, vector<2x1x10x32xf32>,
    %cst_22 = arith.constant 0.000000e+00 : f32
    %10 = vector.broadcast %cst_22 : f32 to vector<2x1x10x32xf32>
    %c0_23 = arith.constant 0 : index
    %c9_24 = arith.constant 9 : index
    %c0_25 = arith.constant 0 : index
    %c0_26 = arith.constant 0 : index
    %11 = vector.load %arg9[%c0_23, %c9_24, %c0_25, %c0_26] : memref<2x10x10x32xf32, #tpu.memory_space<vmem>>, vector<2x1x10x32xf32>
    tpu.vector_store %arg9[%c0_23, %c9_24, %c0_25, %c0_26], %10 {strides = array<i32>} : memref<2x10x10x32xf32, #tpu.memory_space<vmem>>, vector<2x1x10x32xf32>,
    %cst_27 = arith.constant 0.000000e+00 : f32
    %12 = vector.broadcast %cst_27 : f32 to vector<2x10x1x32xf32>
    %c0_28 = arith.constant 0 : index
    %c0_29 = arith.constant 0 : index
    %c0_30 = arith.constant 0 : index
    %c0_31 = arith.constant 0 : index
    %13 = vector.load %arg9[%c0_28, %c0_29, %c0_30, %c0_31] : memref<2x10x10x32xf32, #tpu.memory_space<vmem>>, vector<2x10x1x32xf32>
    tpu.vector_store %arg9[%c0_28, %c0_29, %c0_30, %c0_31], %12 {strides = array<i32>} : memref<2x10x10x32xf32, #tpu.memory_space<vmem>>, vector<2x10x1x32xf32>,
    %cst_32 = arith.constant 0.000000e+00 : f32
    %14 = vector.broadcast %cst_32 : f32 to vector<2x10x1x32xf32>
    %c0_33 = arith.constant 0 : index
    %c0_34 = arith.constant 0 : index
    %c9_35 = arith.constant 9 : index
    %c0_36 = arith.constant 0 : index
    %15 = vector.load %arg9[%c0_33, %c0_34, %c9_35, %c0_36] : memref<2x10x10x32xf32, #tpu.memory_space<vmem>>, vector<2x10x1x32xf32>
    tpu.vector_store %arg9[%c0_33, %c0_34, %c9_35, %c0_36], %14 {strides = array<i32>} : memref<2x10x10x32xf32, #tpu.memory_space<vmem>>, vector<2x10x1x32xf32>,
    %c0_37 = arith.constant 0 : index
    %c0_38 = arith.constant 0 : index
    %16 = vector.load %arg0[%c0_37, %c0_38] : memref<128x32xf32, #tpu.memory_space<vmem>>, vector<128x32xf32>
    %cst_39 = arith.constant dense<0.000000e+00> : vector<32xf32>
    %17 = vector.multi_reduction <add>, %16, %cst_39 [0] : vector<128x32xf32> to vector<32xf32>
    %18 = vector.shape_cast %17 : vector<32xf32> to vector<1x32xf32>
    %19 = arith.mulf %16, %16 : vector<128x32xf32>
    %cst_40 = arith.constant dense<0.000000e+00> : vector<32xf32>
    %20 = vector.multi_reduction <add>, %19, %cst_40 [0] : vector<128x32xf32> to vector<32xf32>
    %21 = vector.shape_cast %20 : vector<32xf32> to vector<1x32xf32>
    %cst_41 = arith.constant 7.812500e-03 : f32
    %22 = vector.broadcast %cst_41 : f32 to vector<1x32xf32>
    %23 = arith.mulf %18, %22 : vector<1x32xf32>
    %cst_42 = arith.constant 7.812500e-03 : f32
    %24 = vector.broadcast %cst_42 : f32 to vector<1x32xf32>
    %25 = arith.mulf %21, %24 : vector<1x32xf32>
    %26 = arith.mulf %23, %23 : vector<1x32xf32>
    %27 = arith.subf %25, %26 : vector<1x32xf32>
    %cst_43 = arith.constant 0.000000e+00 : f32
    %28 = vector.broadcast %cst_43 : f32 to vector<1x32xf32>
    %29 = arith.maximumf %27, %28 : vector<1x32xf32>
    %30 = vector.broadcast %23 : vector<1x32xf32> to vector<128x32xf32>
    %31 = arith.subf %16, %30 : vector<128x32xf32>
    %cst_44 = arith.constant 9.99999974E-6 : f32
    %32 = vector.broadcast %cst_44 : f32 to vector<1x32xf32>
    %33 = arith.addf %29, %32 : vector<1x32xf32>
    %34 = math.rsqrt %33 : vector<1x32xf32>
    %35 = vector.broadcast %34 : vector<1x32xf32> to vector<128x32xf32>
    %36 = arith.mulf %31, %35 : vector<128x32xf32>
    %37 = vector.shape_cast %36 : vector<128x32xf32> to vector<2x8x8x32xf32>
    %c0_45 = arith.constant 0 : index
    %c1 = arith.constant 1 : index
    %c1_46 = arith.constant 1 : index
    %c0_47 = arith.constant 0 : index
    %38 = vector.load %arg8[%c0_45, %c1, %c1_46, %c0_47] : memref<2x10x10x64xf32, #tpu.memory_space<vmem>>, vector<2x8x8x32xf32>
    tpu.vector_store %arg8[%c0_45, %c1, %c1_46, %c0_47], %37 {strides = array<i32>} : memref<2x10x10x64xf32, #tpu.memory_space<vmem>>, vector<2x8x8x32xf32>,
    %39 = vector.shape_cast %16 : vector<128x32xf32> to vector<2x64x32xf32>
    %cst_48 = arith.constant dense<0.000000e+00> : vector<2x32xf32>
    %40 = vector.multi_reduction <add>, %39, %cst_48 [1] : vector<2x64x32xf32> to vector<2x32xf32>
    %41 = vector.shape_cast %40 : vector<2x32xf32> to vector<2x1x32xf32>
    %42 = arith.mulf %39, %39 : vector<2x64x32xf32>
    %cst_49 = arith.constant dense<0.000000e+00> : vector<2x32xf32>
    %43 = vector.multi_reduction <add>, %42, %cst_49 [1] : vector<2x64x32xf32> to vector<2x32xf32>
    %44 = vector.shape_cast %43 : vector<2x32xf32> to vector<2x1x32xf32>
    %cst_50 = arith.constant 1.562500e-02 : f32
    %45 = vector.broadcast %cst_50 : f32 to vector<2x1x32xf32>
    %46 = arith.mulf %41, %45 : vector<2x1x32xf32>
    %cst_51 = arith.constant 1.562500e-02 : f32
    %47 = vector.broadcast %cst_51 : f32 to vector<2x1x32xf32>
    %48 = arith.mulf %44, %47 : vector<2x1x32xf32>
    %49 = arith.mulf %46, %46 : vector<2x1x32xf32>
    %50 = arith.subf %48, %49 : vector<2x1x32xf32>
    %cst_52 = arith.constant 0.000000e+00 : f32
    %51 = vector.broadcast %cst_52 : f32 to vector<2x1x32xf32>
    %52 = arith.maximumf %50, %51 : vector<2x1x32xf32>
    %53 = vector.broadcast %46 : vector<2x1x32xf32> to vector<2x64x32xf32>
    %54 = arith.subf %39, %53 : vector<2x64x32xf32>
    %cst_53 = arith.constant 9.99999974E-6 : f32
    %55 = vector.broadcast %cst_53 : f32 to vector<2x1x32xf32>
    %56 = arith.addf %52, %55 : vector<2x1x32xf32>
    %57 = math.rsqrt %56 : vector<2x1x32xf32>
    %58 = vector.broadcast %57 : vector<2x1x32xf32> to vector<2x64x32xf32>
    %59 = arith.mulf %54, %58 : vector<2x64x32xf32>
    %60 = vector.shape_cast %59 : vector<2x64x32xf32> to vector<128x32xf32>
    %61 = vector.shape_cast %60 : vector<128x32xf32> to vector<2x8x8x32xf32>
    %c0_54 = arith.constant 0 : index
    %c1_55 = arith.constant 1 : index
    %c1_56 = arith.constant 1 : index
    %c32 = arith.constant 32 : index
    %62 = vector.load %arg8[%c0_54, %c1_55, %c1_56, %c32] : memref<2x10x10x64xf32, #tpu.memory_space<vmem>>, vector<2x8x8x32xf32>
    tpu.vector_store %arg8[%c0_54, %c1_55, %c1_56, %c32], %61 {strides = array<i32>} : memref<2x10x10x64xf32, #tpu.memory_space<vmem>>, vector<2x8x8x32xf32>,
    %c0_57 = arith.constant 0 : index
    %c0_58 = arith.constant 0 : index
    %c0_59 = arith.constant 0 : index
    %c0_60 = arith.constant 0 : index
    %63 = vector.load %arg8[%c0_57, %c0_58, %c0_59, %c0_60] : memref<2x10x10x64xf32, #tpu.memory_space<vmem>>, vector<2x8x8x64xf32>
    %64 = vector.shape_cast %63 : vector<2x8x8x64xf32> to vector<128x64xf32>
    %65 = arith.truncf %64 : vector<128x64xf32> to vector<128x64xbf16>
    %c0_61 = arith.constant 0 : index
    %c0_62 = arith.constant 0 : index
    %c0_63 = arith.constant 0 : index
    %66 = vector.load %arg1[%c0_61, %c0_62, %c0_63] : memref<9x64x32xbf16, #tpu.memory_space<vmem>>, vector<1x64x32xbf16>
    %67 = vector.shape_cast %66 : vector<1x64x32xbf16> to vector<64x32xbf16>
    %cst_64 = arith.constant dense<0.000000e+00> : vector<128x32xf32>
    %68 = tpu.matmul %65, %67, %cst_64 {dimension_numbers = #tpu.dot_dimension_numbers<[1], [0], [0], [1], [0, 0, 1, 1], [], []>} : vector<128x64xbf16>, vector<64x32xbf16>, vector<128x32xf32> -> vector<128x32xf32>
    %c0_65 = arith.constant 0 : index
    %c0_66 = arith.constant 0 : index
    %c1_67 = arith.constant 1 : index
    %c0_68 = arith.constant 0 : index
    %69 = vector.load %arg8[%c0_65, %c0_66, %c1_67, %c0_68] : memref<2x10x10x64xf32, #tpu.memory_space<vmem>>, vector<2x8x8x64xf32>
    %70 = vector.shape_cast %69 : vector<2x8x8x64xf32> to vector<128x64xf32>
    %71 = arith.truncf %70 : vector<128x64xf32> to vector<128x64xbf16>
    %c1_69 = arith.constant 1 : index
    %c0_70 = arith.constant 0 : index
    %c0_71 = arith.constant 0 : index
    %72 = vector.load %arg1[%c1_69, %c0_70, %c0_71] : memref<9x64x32xbf16, #tpu.memory_space<vmem>>, vector<1x64x32xbf16>
    %73 = vector.shape_cast %72 : vector<1x64x32xbf16> to vector<64x32xbf16>
    %cst_72 = arith.constant dense<0.000000e+00> : vector<128x32xf32>
    %74 = tpu.matmul %71, %73, %cst_72 {dimension_numbers = #tpu.dot_dimension_numbers<[1], [0], [0], [1], [0, 0, 1, 1], [], []>} : vector<128x64xbf16>, vector<64x32xbf16>, vector<128x32xf32> -> vector<128x32xf32>
    %75 = arith.addf %68, %74 : vector<128x32xf32>
    %c0_73 = arith.constant 0 : index
    %c0_74 = arith.constant 0 : index
    %c2 = arith.constant 2 : index
    %c0_75 = arith.constant 0 : index
    %76 = vector.load %arg8[%c0_73, %c0_74, %c2, %c0_75] : memref<2x10x10x64xf32, #tpu.memory_space<vmem>>, vector<2x8x8x64xf32>
    %77 = vector.shape_cast %76 : vector<2x8x8x64xf32> to vector<128x64xf32>
    %78 = arith.truncf %77 : vector<128x64xf32> to vector<128x64xbf16>
    %c2_76 = arith.constant 2 : index
    %c0_77 = arith.constant 0 : index
    %c0_78 = arith.constant 0 : index
    %79 = vector.load %arg1[%c2_76, %c0_77, %c0_78] : memref<9x64x32xbf16, #tpu.memory_space<vmem>>, vector<1x64x32xbf16>
    %80 = vector.shape_cast %79 : vector<1x64x32xbf16> to vector<64x32xbf16>
    %cst_79 = arith.constant dense<0.000000e+00> : vector<128x32xf32>
    %81 = tpu.matmul %78, %80, %cst_79 {dimension_numbers = #tpu.dot_dimension_numbers<[1], [0], [0], [1], [0, 0, 1, 1], [], []>} : vector<128x64xbf16>, vector<64x32xbf16>, vector<128x32xf32> -> vector<128x32xf32>
    %82 = arith.addf %75, %81 : vector<128x32xf32>
    %c0_80 = arith.constant 0 : index
    %c1_81 = arith.constant 1 : index
    %c0_82 = arith.constant 0 : index
    %c0_83 = arith.constant 0 : index
    %83 = vector.load %arg8[%c0_80, %c1_81, %c0_82, %c0_83] : memref<2x10x10x64xf32, #tpu.memory_space<vmem>>, vector<2x8x8x64xf32>
    %84 = vector.shape_cast %83 : vector<2x8x8x64xf32> to vector<128x64xf32>
    %85 = arith.truncf %84 : vector<128x64xf32> to vector<128x64xbf16>
    %c3 = arith.constant 3 : index
    %c0_84 = arith.constant 0 : index
    %c0_85 = arith.constant 0 : index
    %86 = vector.load %arg1[%c3, %c0_84, %c0_85] : memref<9x64x32xbf16, #tpu.memory_space<vmem>>, vector<1x64x32xbf16>
    %87 = vector.shape_cast %86 : vector<1x64x32xbf16> to vector<64x32xbf16>
    %cst_86 = arith.constant dense<0.000000e+00> : vector<128x32xf32>
    %88 = tpu.matmul %85, %87, %cst_86 {dimension_numbers = #tpu.dot_dimension_numbers<[1], [0], [0], [1], [0, 0, 1, 1], [], []>} : vector<128x64xbf16>, vector<64x32xbf16>, vector<128x32xf32> -> vector<128x32xf32>
    %89 = arith.addf %82, %88 : vector<128x32xf32>
    %c0_87 = arith.constant 0 : index
    %c1_88 = arith.constant 1 : index
    %c1_89 = arith.constant 1 : index
    %c0_90 = arith.constant 0 : index
    %90 = vector.load %arg8[%c0_87, %c1_88, %c1_89, %c0_90] : memref<2x10x10x64xf32, #tpu.memory_space<vmem>>, vector<2x8x8x64xf32>
    %91 = vector.shape_cast %90 : vector<2x8x8x64xf32> to vector<128x64xf32>
    %92 = arith.truncf %91 : vector<128x64xf32> to vector<128x64xbf16>
    %c4 = arith.constant 4 : index
    %c0_91 = arith.constant 0 : index
    %c0_92 = arith.constant 0 : index
    %93 = vector.load %arg1[%c4, %c0_91, %c0_92] : memref<9x64x32xbf16, #tpu.memory_space<vmem>>, vector<1x64x32xbf16>
    %94 = vector.shape_cast %93 : vector<1x64x32xbf16> to vector<64x32xbf16>
    %cst_93 = arith.constant dense<0.000000e+00> : vector<128x32xf32>
    %95 = tpu.matmul %92, %94, %cst_93 {dimension_numbers = #tpu.dot_dimension_numbers<[1], [0], [0], [1], [0, 0, 1, 1], [], []>} : vector<128x64xbf16>, vector<64x32xbf16>, vector<128x32xf32> -> vector<128x32xf32>
    %96 = arith.addf %89, %95 : vector<128x32xf32>
    %c0_94 = arith.constant 0 : index
    %c1_95 = arith.constant 1 : index
    %c2_96 = arith.constant 2 : index
    %c0_97 = arith.constant 0 : index
    %97 = vector.load %arg8[%c0_94, %c1_95, %c2_96, %c0_97] : memref<2x10x10x64xf32, #tpu.memory_space<vmem>>, vector<2x8x8x64xf32>
    %98 = vector.shape_cast %97 : vector<2x8x8x64xf32> to vector<128x64xf32>
    %99 = arith.truncf %98 : vector<128x64xf32> to vector<128x64xbf16>
    %c5 = arith.constant 5 : index
    %c0_98 = arith.constant 0 : index
    %c0_99 = arith.constant 0 : index
    %100 = vector.load %arg1[%c5, %c0_98, %c0_99] : memref<9x64x32xbf16, #tpu.memory_space<vmem>>, vector<1x64x32xbf16>
    %101 = vector.shape_cast %100 : vector<1x64x32xbf16> to vector<64x32xbf16>
    %cst_100 = arith.constant dense<0.000000e+00> : vector<128x32xf32>
    %102 = tpu.matmul %99, %101, %cst_100 {dimension_numbers = #tpu.dot_dimension_numbers<[1], [0], [0], [1], [0, 0, 1, 1], [], []>} : vector<128x64xbf16>, vector<64x32xbf16>, vector<128x32xf32> -> vector<128x32xf32>
    %103 = arith.addf %96, %102 : vector<128x32xf32>
    %c0_101 = arith.constant 0 : index
    %c2_102 = arith.constant 2 : index
    %c0_103 = arith.constant 0 : index
    %c0_104 = arith.constant 0 : index
    %104 = vector.load %arg8[%c0_101, %c2_102, %c0_103, %c0_104] : memref<2x10x10x64xf32, #tpu.memory_space<vmem>>, vector<2x8x8x64xf32>
    %105 = vector.shape_cast %104 : vector<2x8x8x64xf32> to vector<128x64xf32>
    %106 = arith.truncf %105 : vector<128x64xf32> to vector<128x64xbf16>
    %c6 = arith.constant 6 : index
    %c0_105 = arith.constant 0 : index
    %c0_106 = arith.constant 0 : index
    %107 = vector.load %arg1[%c6, %c0_105, %c0_106] : memref<9x64x32xbf16, #tpu.memory_space<vmem>>, vector<1x64x32xbf16>
    %108 = vector.shape_cast %107 : vector<1x64x32xbf16> to vector<64x32xbf16>
    %cst_107 = arith.constant dense<0.000000e+00> : vector<128x32xf32>
    %109 = tpu.matmul %106, %108, %cst_107 {dimension_numbers = #tpu.dot_dimension_numbers<[1], [0], [0], [1], [0, 0, 1, 1], [], []>} : vector<128x64xbf16>, vector<64x32xbf16>, vector<128x32xf32> -> vector<128x32xf32>
    %110 = arith.addf %103, %109 : vector<128x32xf32>
    %c0_108 = arith.constant 0 : index
    %c2_109 = arith.constant 2 : index
    %c1_110 = arith.constant 1 : index
    %c0_111 = arith.constant 0 : index
    %111 = vector.load %arg8[%c0_108, %c2_109, %c1_110, %c0_111] : memref<2x10x10x64xf32, #tpu.memory_space<vmem>>, vector<2x8x8x64xf32>
    %112 = vector.shape_cast %111 : vector<2x8x8x64xf32> to vector<128x64xf32>
    %113 = arith.truncf %112 : vector<128x64xf32> to vector<128x64xbf16>
    %c7 = arith.constant 7 : index
    %c0_112 = arith.constant 0 : index
    %c0_113 = arith.constant 0 : index
    %114 = vector.load %arg1[%c7, %c0_112, %c0_113] : memref<9x64x32xbf16, #tpu.memory_space<vmem>>, vector<1x64x32xbf16>
    %115 = vector.shape_cast %114 : vector<1x64x32xbf16> to vector<64x32xbf16>
    %cst_114 = arith.constant dense<0.000000e+00> : vector<128x32xf32>
    %116 = tpu.matmul %113, %115, %cst_114 {dimension_numbers = #tpu.dot_dimension_numbers<[1], [0], [0], [1], [0, 0, 1, 1], [], []>} : vector<128x64xbf16>, vector<64x32xbf16>, vector<128x32xf32> -> vector<128x32xf32>
    %117 = arith.addf %110, %116 : vector<128x32xf32>
    %c0_115 = arith.constant 0 : index
    %c2_116 = arith.constant 2 : index
    %c2_117 = arith.constant 2 : index
    %c0_118 = arith.constant 0 : index
    %118 = vector.load %arg8[%c0_115, %c2_116, %c2_117, %c0_118] : memref<2x10x10x64xf32, #tpu.memory_space<vmem>>, vector<2x8x8x64xf32>
    %119 = vector.shape_cast %118 : vector<2x8x8x64xf32> to vector<128x64xf32>
    %120 = arith.truncf %119 : vector<128x64xf32> to vector<128x64xbf16>
    %c8 = arith.constant 8 : index
    %c0_119 = arith.constant 0 : index
    %c0_120 = arith.constant 0 : index
    %121 = vector.load %arg1[%c8, %c0_119, %c0_120] : memref<9x64x32xbf16, #tpu.memory_space<vmem>>, vector<1x64x32xbf16>
    %122 = vector.shape_cast %121 : vector<1x64x32xbf16> to vector<64x32xbf16>
    %cst_121 = arith.constant dense<0.000000e+00> : vector<128x32xf32>
    %123 = tpu.matmul %120, %122, %cst_121 {dimension_numbers = #tpu.dot_dimension_numbers<[1], [0], [0], [1], [0, 0, 1, 1], [], []>} : vector<128x64xbf16>, vector<64x32xbf16>, vector<128x32xf32> -> vector<128x32xf32>
    %124 = arith.addf %117, %123 : vector<128x32xf32>
    %c0_122 = arith.constant 0 : index
    %c0_123 = arith.constant 0 : index
    %125 = vector.load %arg2[%c0_122, %c0_123] : memref<1x32xf32, #tpu.memory_space<vmem>>, vector<1x32xf32>
    %126 = vector.broadcast %125 : vector<1x32xf32> to vector<128x32xf32>
    %127 = arith.addf %124, %126 : vector<128x32xf32>
    %128 = vector.shape_cast %127 : vector<128x32xf32> to vector<2x64x32xf32>
    %cst_124 = arith.constant dense<0.000000e+00> : vector<2x32xf32>
    %129 = vector.multi_reduction <add>, %128, %cst_124 [1] : vector<2x64x32xf32> to vector<2x32xf32>
    %130 = arith.mulf %128, %128 : vector<2x64x32xf32>
    %cst_125 = arith.constant dense<0.000000e+00> : vector<2x32xf32>
    %131 = vector.multi_reduction <add>, %130, %cst_125 [1] : vector<2x64x32xf32> to vector<2x32xf32>
    %132 = vector.extract_strided_slice %129 {offsets = [0, 0], sizes = [2, 16], strides = [1, 1]} : vector<2x32xf32> to vector<2x16xf32>
    %133 = vector.extract_strided_slice %129 {offsets = [0, 16], sizes = [2, 16], strides = [1, 1]} : vector<2x32xf32> to vector<2x16xf32>
    %134 = vector.extract_strided_slice %131 {offsets = [0, 0], sizes = [2, 16], strides = [1, 1]} : vector<2x32xf32> to vector<2x16xf32>
    %135 = vector.extract_strided_slice %131 {offsets = [0, 16], sizes = [2, 16], strides = [1, 1]} : vector<2x32xf32> to vector<2x16xf32>
    %136 = arith.addf %132, %133 : vector<2x16xf32>
    %137 = arith.addf %134, %135 : vector<2x16xf32>
    %cst_126 = arith.constant 1.280000e+02 : f32
    %138 = vector.broadcast %cst_126 : f32 to vector<2x16xf32>
    %139 = arith.divf %136, %138 : vector<2x16xf32>
    %140 = arith.mulf %136, %139 : vector<2x16xf32>
    %141 = arith.subf %137, %140 : vector<2x16xf32>
    %cst_127 = arith.constant 1.270000e+02 : f32
    %142 = vector.broadcast %cst_127 : f32 to vector<2x16xf32>
    %143 = arith.divf %141, %142 : vector<2x16xf32>
    %cst_128 = arith.constant 0.000000e+00 : f32
    %144 = vector.broadcast %cst_128 : f32 to vector<2x16xf32>
    %145 = arith.maximumf %143, %144 : vector<2x16xf32>
    %146 = math.sqrt %145 : vector<2x16xf32>
    %cst_129 = arith.constant 1.000000e-10 : f32
    %147 = vector.broadcast %cst_129 : f32 to vector<2x16xf32>
    %148 = arith.addf %146, %147 : vector<2x16xf32>
    %cst_130 = arith.constant 1.000000e+00 : f32
    %149 = vector.broadcast %cst_130 : f32 to vector<2x16xf32>
    %150 = arith.divf %149, %148 : vector<2x16xf32>
    %151 = tpu.concatenate %139, %139 in 1 : vector<2x16xf32>, vector<2x16xf32> -> vector<2x32xf32>
    %152 = vector.shape_cast %151 : vector<2x32xf32> to vector<2x1x32xf32>
    %153 = tpu.concatenate %150, %150 in 1 : vector<2x16xf32>, vector<2x16xf32> -> vector<2x32xf32>
    %154 = vector.shape_cast %153 : vector<2x32xf32> to vector<2x1x32xf32>
    %155 = vector.broadcast %152 : vector<2x1x32xf32> to vector<2x64x32xf32>
    %156 = arith.subf %128, %155 : vector<2x64x32xf32>
    %157 = vector.broadcast %154 : vector<2x1x32xf32> to vector<2x64x32xf32>
    %158 = arith.mulf %156, %157 : vector<2x64x32xf32>
    %159 = vector.shape_cast %158 : vector<2x64x32xf32> to vector<128x32xf32>
    %160 = vector.shape_cast %159 : vector<128x32xf32> to vector<2x8x8x32xf32>
    %c0_131 = arith.constant 0 : index
    %c1_132 = arith.constant 1 : index
    %c1_133 = arith.constant 1 : index
    %c0_134 = arith.constant 0 : index
    %161 = vector.load %arg9[%c0_131, %c1_132, %c1_133, %c0_134] : memref<2x10x10x32xf32, #tpu.memory_space<vmem>>, vector<2x8x8x32xf32>
    tpu.vector_store %arg9[%c0_131, %c1_132, %c1_133, %c0_134], %160 {strides = array<i32>} : memref<2x10x10x32xf32, #tpu.memory_space<vmem>>, vector<2x8x8x32xf32>,
    %c0_135 = arith.constant 0 : index
    %c0_136 = arith.constant 0 : index
    %c0_137 = arith.constant 0 : index
    %c0_138 = arith.constant 0 : index
    %162 = vector.load %arg9[%c0_135, %c0_136, %c0_137, %c0_138] : memref<2x10x10x32xf32, #tpu.memory_space<vmem>>, vector<2x8x8x32xf32>
    %163 = vector.shape_cast %162 : vector<2x8x8x32xf32> to vector<128x32xf32>
    %164 = arith.truncf %163 : vector<128x32xf32> to vector<128x32xbf16>
    %c0_139 = arith.constant 0 : index
    %c0_140 = arith.constant 0 : index
    %c0_141 = arith.constant 0 : index
    %165 = vector.load %arg3[%c0_139, %c0_140, %c0_141] : memref<9x32x32xbf16, #tpu.memory_space<vmem>>, vector<1x32x32xbf16>
    %166 = vector.shape_cast %165 : vector<1x32x32xbf16> to vector<32x32xbf16>
    %cst_142 = arith.constant dense<0.000000e+00> : vector<128x32xf32>
    %167 = tpu.matmul %164, %166, %cst_142 {dimension_numbers = #tpu.dot_dimension_numbers<[1], [0], [0], [1], [0, 0, 1, 1], [], []>} : vector<128x32xbf16>, vector<32x32xbf16>, vector<128x32xf32> -> vector<128x32xf32>
    %c0_143 = arith.constant 0 : index
    %c0_144 = arith.constant 0 : index
    %c1_145 = arith.constant 1 : index
    %c0_146 = arith.constant 0 : index
    %168 = vector.load %arg9[%c0_143, %c0_144, %c1_145, %c0_146] : memref<2x10x10x32xf32, #tpu.memory_space<vmem>>, vector<2x8x8x32xf32>
    %169 = vector.shape_cast %168 : vector<2x8x8x32xf32> to vector<128x32xf32>
    %170 = arith.truncf %169 : vector<128x32xf32> to vector<128x32xbf16>
    %c1_147 = arith.constant 1 : index
    %c0_148 = arith.constant 0 : index
    %c0_149 = arith.constant 0 : index
    %171 = vector.load %arg3[%c1_147, %c0_148, %c0_149] : memref<9x32x32xbf16, #tpu.memory_space<vmem>>, vector<1x32x32xbf16>
    %172 = vector.shape_cast %171 : vector<1x32x32xbf16> to vector<32x32xbf16>
    %cst_150 = arith.constant dense<0.000000e+00> : vector<128x32xf32>
    %173 = tpu.matmul %170, %172, %cst_150 {dimension_numbers = #tpu.dot_dimension_numbers<[1], [0], [0], [1], [0, 0, 1, 1], [], []>} : vector<128x32xbf16>, vector<32x32xbf16>, vector<128x32xf32> -> vector<128x32xf32>
    %174 = arith.addf %167, %173 : vector<128x32xf32>
    %c0_151 = arith.constant 0 : index
    %c0_152 = arith.constant 0 : index
    %c2_153 = arith.constant 2 : index
    %c0_154 = arith.constant 0 : index
    %175 = vector.load %arg9[%c0_151, %c0_152, %c2_153, %c0_154] : memref<2x10x10x32xf32, #tpu.memory_space<vmem>>, vector<2x8x8x32xf32>
    %176 = vector.shape_cast %175 : vector<2x8x8x32xf32> to vector<128x32xf32>
    %177 = arith.truncf %176 : vector<128x32xf32> to vector<128x32xbf16>
    %c2_155 = arith.constant 2 : index
    %c0_156 = arith.constant 0 : index
    %c0_157 = arith.constant 0 : index
    %178 = vector.load %arg3[%c2_155, %c0_156, %c0_157] : memref<9x32x32xbf16, #tpu.memory_space<vmem>>, vector<1x32x32xbf16>
    %179 = vector.shape_cast %178 : vector<1x32x32xbf16> to vector<32x32xbf16>
    %cst_158 = arith.constant dense<0.000000e+00> : vector<128x32xf32>
    %180 = tpu.matmul %177, %179, %cst_158 {dimension_numbers = #tpu.dot_dimension_numbers<[1], [0], [0], [1], [0, 0, 1, 1], [], []>} : vector<128x32xbf16>, vector<32x32xbf16>, vector<128x32xf32> -> vector<128x32xf32>
    %181 = arith.addf %174, %180 : vector<128x32xf32>
    %c0_159 = arith.constant 0 : index
    %c1_160 = arith.constant 1 : index
    %c0_161 = arith.constant 0 : index
    %c0_162 = arith.constant 0 : index
    %182 = vector.load %arg9[%c0_159, %c1_160, %c0_161, %c0_162] : memref<2x10x10x32xf32, #tpu.memory_space<vmem>>, vector<2x8x8x32xf32>
    %183 = vector.shape_cast %182 : vector<2x8x8x32xf32> to vector<128x32xf32>
    %184 = arith.truncf %183 : vector<128x32xf32> to vector<128x32xbf16>
    %c3_163 = arith.constant 3 : index
    %c0_164 = arith.constant 0 : index
    %c0_165 = arith.constant 0 : index
    %185 = vector.load %arg3[%c3_163, %c0_164, %c0_165] : memref<9x32x32xbf16, #tpu.memory_space<vmem>>, vector<1x32x32xbf16>
    %186 = vector.shape_cast %185 : vector<1x32x32xbf16> to vector<32x32xbf16>
    %cst_166 = arith.constant dense<0.000000e+00> : vector<128x32xf32>
    %187 = tpu.matmul %184, %186, %cst_166 {dimension_numbers = #tpu.dot_dimension_numbers<[1], [0], [0], [1], [0, 0, 1, 1], [], []>} : vector<128x32xbf16>, vector<32x32xbf16>, vector<128x32xf32> -> vector<128x32xf32>
    %188 = arith.addf %181, %187 : vector<128x32xf32>
    %c0_167 = arith.constant 0 : index
    %c1_168 = arith.constant 1 : index
    %c1_169 = arith.constant 1 : index
    %c0_170 = arith.constant 0 : index
    %189 = vector.load %arg9[%c0_167, %c1_168, %c1_169, %c0_170] : memref<2x10x10x32xf32, #tpu.memory_space<vmem>>, vector<2x8x8x32xf32>
    %190 = vector.shape_cast %189 : vector<2x8x8x32xf32> to vector<128x32xf32>
    %191 = arith.truncf %190 : vector<128x32xf32> to vector<128x32xbf16>
    %c4_171 = arith.constant 4 : index
    %c0_172 = arith.constant 0 : index
    %c0_173 = arith.constant 0 : index
    %192 = vector.load %arg3[%c4_171, %c0_172, %c0_173] : memref<9x32x32xbf16, #tpu.memory_space<vmem>>, vector<1x32x32xbf16>
    %193 = vector.shape_cast %192 : vector<1x32x32xbf16> to vector<32x32xbf16>
    %cst_174 = arith.constant dense<0.000000e+00> : vector<128x32xf32>
    %194 = tpu.matmul %191, %193, %cst_174 {dimension_numbers = #tpu.dot_dimension_numbers<[1], [0], [0], [1], [0, 0, 1, 1], [], []>} : vector<128x32xbf16>, vector<32x32xbf16>, vector<128x32xf32> -> vector<128x32xf32>
    %195 = arith.addf %188, %194 : vector<128x32xf32>
    %c0_175 = arith.constant 0 : index
    %c1_176 = arith.constant 1 : index
    %c2_177 = arith.constant 2 : index
    %c0_178 = arith.constant 0 : index
    %196 = vector.load %arg9[%c0_175, %c1_176, %c2_177, %c0_178] : memref<2x10x10x32xf32, #tpu.memory_space<vmem>>, vector<2x8x8x32xf32>
    %197 = vector.shape_cast %196 : vector<2x8x8x32xf32> to vector<128x32xf32>
    %198 = arith.truncf %197 : vector<128x32xf32> to vector<128x32xbf16>
    %c5_179 = arith.constant 5 : index
    %c0_180 = arith.constant 0 : index
    %c0_181 = arith.constant 0 : index
    %199 = vector.load %arg3[%c5_179, %c0_180, %c0_181] : memref<9x32x32xbf16, #tpu.memory_space<vmem>>, vector<1x32x32xbf16>
    %200 = vector.shape_cast %199 : vector<1x32x32xbf16> to vector<32x32xbf16>
    %cst_182 = arith.constant dense<0.000000e+00> : vector<128x32xf32>
    %201 = tpu.matmul %198, %200, %cst_182 {dimension_numbers = #tpu.dot_dimension_numbers<[1], [0], [0], [1], [0, 0, 1, 1], [], []>} : vector<128x32xbf16>, vector<32x32xbf16>, vector<128x32xf32> -> vector<128x32xf32>
    %202 = arith.addf %195, %201 : vector<128x32xf32>
    %c0_183 = arith.constant 0 : index
    %c2_184 = arith.constant 2 : index
    %c0_185 = arith.constant 0 : index
    %c0_186 = arith.constant 0 : index
    %203 = vector.load %arg9[%c0_183, %c2_184, %c0_185, %c0_186] : memref<2x10x10x32xf32, #tpu.memory_space<vmem>>, vector<2x8x8x32xf32>
    %204 = vector.shape_cast %203 : vector<2x8x8x32xf32> to vector<128x32xf32>
    %205 = arith.truncf %204 : vector<128x32xf32> to vector<128x32xbf16>
    %c6_187 = arith.constant 6 : index
    %c0_188 = arith.constant 0 : index
    %c0_189 = arith.constant 0 : index
    %206 = vector.load %arg3[%c6_187, %c0_188, %c0_189] : memref<9x32x32xbf16, #tpu.memory_space<vmem>>, vector<1x32x32xbf16>
    %207 = vector.shape_cast %206 : vector<1x32x32xbf16> to vector<32x32xbf16>
    %cst_190 = arith.constant dense<0.000000e+00> : vector<128x32xf32>
    %208 = tpu.matmul %205, %207, %cst_190 {dimension_numbers = #tpu.dot_dimension_numbers<[1], [0], [0], [1], [0, 0, 1, 1], [], []>} : vector<128x32xbf16>, vector<32x32xbf16>, vector<128x32xf32> -> vector<128x32xf32>
    %209 = arith.addf %202, %208 : vector<128x32xf32>
    %c0_191 = arith.constant 0 : index
    %c2_192 = arith.constant 2 : index
    %c1_193 = arith.constant 1 : index
    %c0_194 = arith.constant 0 : index
    %210 = vector.load %arg9[%c0_191, %c2_192, %c1_193, %c0_194] : memref<2x10x10x32xf32, #tpu.memory_space<vmem>>, vector<2x8x8x32xf32>
    %211 = vector.shape_cast %210 : vector<2x8x8x32xf32> to vector<128x32xf32>
    %212 = arith.truncf %211 : vector<128x32xf32> to vector<128x32xbf16>
    %c7_195 = arith.constant 7 : index
    %c0_196 = arith.constant 0 : index
    %c0_197 = arith.constant 0 : index
    %213 = vector.load %arg3[%c7_195, %c0_196, %c0_197] : memref<9x32x32xbf16, #tpu.memory_space<vmem>>, vector<1x32x32xbf16>
    %214 = vector.shape_cast %213 : vector<1x32x32xbf16> to vector<32x32xbf16>
    %cst_198 = arith.constant dense<0.000000e+00> : vector<128x32xf32>
    %215 = tpu.matmul %212, %214, %cst_198 {dimension_numbers = #tpu.dot_dimension_numbers<[1], [0], [0], [1], [0, 0, 1, 1], [], []>} : vector<128x32xbf16>, vector<32x32xbf16>, vector<128x32xf32> -> vector<128x32xf32>
    %216 = arith.addf %209, %215 : vector<128x32xf32>
    %c0_199 = arith.constant 0 : index
    %c2_200 = arith.constant 2 : index
    %c2_201 = arith.constant 2 : index
    %c0_202 = arith.constant 0 : index
    %217 = vector.load %arg9[%c0_199, %c2_200, %c2_201, %c0_202] : memref<2x10x10x32xf32, #tpu.memory_space<vmem>>, vector<2x8x8x32xf32>
    %218 = vector.shape_cast %217 : vector<2x8x8x32xf32> to vector<128x32xf32>
    %219 = arith.truncf %218 : vector<128x32xf32> to vector<128x32xbf16>
    %c8_203 = arith.constant 8 : index
    %c0_204 = arith.constant 0 : index
    %c0_205 = arith.constant 0 : index
    %220 = vector.load %arg3[%c8_203, %c0_204, %c0_205] : memref<9x32x32xbf16, #tpu.memory_space<vmem>>, vector<1x32x32xbf16>
    %221 = vector.shape_cast %220 : vector<1x32x32xbf16> to vector<32x32xbf16>
    %cst_206 = arith.constant dense<0.000000e+00> : vector<128x32xf32>
    %222 = tpu.matmul %219, %221, %cst_206 {dimension_numbers = #tpu.dot_dimension_numbers<[1], [0], [0], [1], [0, 0, 1, 1], [], []>} : vector<128x32xbf16>, vector<32x32xbf16>, vector<128x32xf32> -> vector<128x32xf32>
    %223 = arith.addf %216, %222 : vector<128x32xf32>
    %c0_207 = arith.constant 0 : index
    %c0_208 = arith.constant 0 : index
    %224 = vector.load %arg4[%c0_207, %c0_208] : memref<1x32xf32, #tpu.memory_space<vmem>>, vector<1x32xf32>
    %225 = vector.broadcast %224 : vector<1x32xf32> to vector<128x32xf32>
    %226 = arith.addf %223, %225 : vector<128x32xf32>
    %227 = arith.truncf %226 : vector<128x32xf32> to vector<128x32xbf16>
    %c0_209 = arith.constant 0 : index
    %c0_210 = arith.constant 0 : index
    %228 = vector.load %arg5[%c0_209, %c0_210] : memref<32x32xbf16, #tpu.memory_space<vmem>>, vector<32x32xbf16>
    %cst_211 = arith.constant dense<0.000000e+00> : vector<128x32xf32>
    %229 = tpu.matmul %227, %228, %cst_211 {dimension_numbers = #tpu.dot_dimension_numbers<[1], [0], [0], [1], [0, 0, 1, 1], [], []>} : vector<128x32xbf16>, vector<32x32xbf16>, vector<128x32xf32> -> vector<128x32xf32>
    %c0_212 = arith.constant 0 : index
    %c0_213 = arith.constant 0 : index
    %230 = vector.load %arg6[%c0_212, %c0_213] : memref<1x32xf32, #tpu.memory_space<vmem>>, vector<1x32xf32>
    %231 = vector.broadcast %230 : vector<1x32xf32> to vector<128x32xf32>
    %232 = arith.addf %229, %231 : vector<128x32xf32>
    %cst_214 = arith.constant dense<0.000000e+00> : vector<32xf32>
    %233 = vector.multi_reduction <add>, %232, %cst_214 [0] : vector<128x32xf32> to vector<32xf32>
    %234 = vector.shape_cast %233 : vector<32xf32> to vector<1x32xf32>
    %235 = arith.mulf %232, %232 : vector<128x32xf32>
    %cst_215 = arith.constant dense<0.000000e+00> : vector<32xf32>
    %236 = vector.multi_reduction <add>, %235, %cst_215 [0] : vector<128x32xf32> to vector<32xf32>
    %237 = vector.shape_cast %236 : vector<32xf32> to vector<1x32xf32>
    %cst_216 = arith.constant 7.812500e-03 : f32
    %238 = vector.broadcast %cst_216 : f32 to vector<1x32xf32>
    %239 = arith.mulf %234, %238 : vector<1x32xf32>
    %cst_217 = arith.constant 7.812500e-03 : f32
    %240 = vector.broadcast %cst_217 : f32 to vector<1x32xf32>
    %241 = arith.mulf %237, %240 : vector<1x32xf32>
    %242 = arith.mulf %239, %239 : vector<1x32xf32>
    %243 = arith.subf %241, %242 : vector<1x32xf32>
    %cst_218 = arith.constant 0.000000e+00 : f32
    %244 = vector.broadcast %cst_218 : f32 to vector<1x32xf32>
    %245 = arith.maximumf %243, %244 : vector<1x32xf32>
    %246 = vector.broadcast %239 : vector<1x32xf32> to vector<128x32xf32>
    %247 = arith.subf %232, %246 : vector<128x32xf32>
    %cst_219 = arith.constant 9.99999974E-6 : f32
    %248 = vector.broadcast %cst_219 : f32 to vector<1x32xf32>
    %249 = arith.addf %245, %248 : vector<1x32xf32>
    %250 = math.rsqrt %249 : vector<1x32xf32>
    %251 = vector.broadcast %250 : vector<1x32xf32> to vector<128x32xf32>
    %252 = arith.mulf %247, %251 : vector<128x32xf32>
    %cst_220 = arith.constant 0.000000e+00 : f32
    %253 = vector.broadcast %cst_220 : f32 to vector<128x32xf32>
    %254 = arith.maximumf %252, %253 : vector<128x32xf32>
    %255 = arith.addf %254, %16 : vector<128x32xf32>
    %c0_221 = arith.constant 0 : index
    %c0_222 = arith.constant 0 : index
    %256 = vector.load %arg7[%c0_221, %c0_222] : memref<128x32xf32, #tpu.memory_space<vmem>>, vector<128x32xf32>
    tpu.vector_store %arg7[%c0_221, %c0_222], %255 {strides = array<i32>} : memref<128x32xf32, #tpu.memory_space<vmem>>, vector<128x32xf32>,
    return
  }
}

</mosaic_0001>

<llo_original>
// kernel: tpu_custom_call.1
$region0: #{tpu_custom_call.1}
  #allocation0 [shape = 'u32[]', space=smem, size = 0x4, offset = 0x4, fixed_abs, tag = 'smem constant byte address 0x4 - core index']
  #allocation1 [shape = 'u32[144,128]{1,0:T(1,128)}', space=vmem, size = 0x12000, scoped, tag = 'internal scratch']
  #allocation2 [shape = 'f32[2,10,10,64]{3,2,1,0:T(8,128)}', space=vmem, size = 0x28000, scoped, tag = 'scratch operand']
  #allocation3 [shape = 'f32[2,10,10,32]{3,2,1,0:T(8,128)}', space=vmem, size = 0x28000, scoped, tag = 'scratch operand']
  %s0 = inlined_call_operand.vmem [shape: f32[128,32], index: 0, kind: input, shape index: {}]
  %s1 = inlined_call_operand.vmem [shape: bf16[9,64,32], index: 1, kind: input, shape index: {}]
  %s2 = inlined_call_operand.vmem [shape: f32[1,32], index: 2, kind: input, shape index: {}]
  %s3 = inlined_call_operand.vmem [shape: bf16[9,32,32], index: 3, kind: input, shape index: {}]
  %s4 = inlined_call_operand.vmem [shape: f32[1,32], index: 4, kind: input, shape index: {}]
  %s5 = inlined_call_operand.vmem [shape: bf16[32,32], index: 5, kind: input, shape index: {}]
  %s6 = inlined_call_operand.vmem [shape: f32[1,32], index: 6, kind: input, shape index: {}]
  %s7 = inlined_call_operand.vmem [shape: f32[128,32], index: 7, kind: output, shape index: {}]
  %s8 = sld [smem:[#allocation0]]
  $region38: #{tpu_custom_call.1} parent=0
    _
  %s10 = ssub.s32 1, %s8
  %s11 = scalar_select 0, %s10, %s8
  // Predicated region
  $region2: #{tpu_custom_call.1} parent=0 // pred_check
    _
  $region3: #{tpu_custom_call.1} parent=0 // pred_check_branch
    %13 = sbr.rel (0) target = $region5
  $region4: #{tpu_custom_call.1} parent=0 // pred_region
    _
  $region5: #{tpu_custom_call.1} parent=0 // pred_fallthru
    _
  // Predicated region
  $region6: #{tpu_custom_call.1} parent=0 // pred_check
    _
  $region7: #{tpu_custom_call.1} parent=0 // pred_check_branch
    %15 = sbr.rel (0) target = $region9
  $region8: #{tpu_custom_call.1} parent=0 // pred_region
    _
  $region9: #{tpu_custom_call.1} parent=0 // pred_fallthru
    _
  // Predicated region
  $region10: #{tpu_custom_call.1} parent=0 // pred_check
    _
  $region11: #{tpu_custom_call.1} parent=0 // pred_check_branch
    %17 = sbr.rel (0) target = $region13
  $region12: #{tpu_custom_call.1} parent=0 // pred_region
    _
  $region13: #{tpu_custom_call.1} parent=0 // pred_fallthru
    _
  // Predicated region
  $region14: #{tpu_custom_call.1} parent=0 // pred_check
    _
  $region15: #{tpu_custom_call.1} parent=0 // pred_check_branch
    %19 = sbr.rel (0) target = $region17
  $region16: #{tpu_custom_call.1} parent=0 // pred_region
    _
  $region17: #{tpu_custom_call.1} parent=0 // pred_fallthru
    _
  // Predicated region
  $region18: #{tpu_custom_call.1} parent=0 // pred_check
    _
  $region19: #{tpu_custom_call.1} parent=0 // pred_check_branch
    %21 = sbr.rel (0) target = $region21
  $region20: #{tpu_custom_call.1} parent=0 // pred_region
    _
  $region21: #{tpu_custom_call.1} parent=0 // pred_fallthru
    _
  // Predicated region
  $region22: #{tpu_custom_call.1} parent=0 // pred_check
    _
  $region23: #{tpu_custom_call.1} parent=0 // pred_check_branch
    %23 = sbr.rel (0) target = $region25
  $region24: #{tpu_custom_call.1} parent=0 // pred_region
    _
  $region25: #{tpu_custom_call.1} parent=0 // pred_fallthru
    _
  // Predicated region
  $region26: #{tpu_custom_call.1} parent=0 // pred_check
    _
  $region27: #{tpu_custom_call.1} parent=0 // pred_check_branch
    %25 = sbr.rel (0) target = $region29
  $region28: #{tpu_custom_call.1} parent=0 // pred_region
    _
  $region29: #{tpu_custom_call.1} parent=0 // pred_fallthru
    _
  %vm27 = vcmask 523264
  %28 = vst.msk [vmem:[#allocation2] sm:$0xff] %vm27, 0.0
  %vm29 = vcmask 517120
  %30 = vst.msk [vmem:[#allocation2 + $0x8] sm:$0x3] %vm29, 0.0
  %31 = vst.msk [vmem:[#allocation2 + $0xa0] sm:$0xff] %vm27, 0.0
  %32 = vst.msk [vmem:[#allocation2 + $0xa8] sm:$0x3] %vm29, 0.0
  %s33 = scalar_lea.vmem [#allocation2], 144
  %34 = vst.msk [vmem:[%s33] sm:$0xff] %vm27, 0.0
  %35 = vst.msk [vmem:[%s33 + $0x8] sm:$0x3] %vm29, 0.0
  %36 = vst.msk [vmem:[%s33 + $0xa0] sm:$0xff] %vm27, 0.0
  %37 = vst.msk [vmem:[%s33 + $0xa8] sm:$0x3] %vm29, 0.0
  %vm38 = vcmask 516096
  %39 = vst.msk [vmem:[#allocation2] sm:$0x1] %vm38, 0.0
  %40 = vst.msk [vmem:[#allocation2 + $0x10] sm:$0x1] %vm38, 0.0
  %41 = vst.msk [vmem:[#allocation2 + $0x20] sm:$0x1] %vm38, 0.0
  %42 = vst.msk [vmem:[#allocation2 + $0x30] sm:$0x1] %vm38, 0.0
  %43 = vst.msk [vmem:[#allocation2 + $0x40] sm:$0x1] %vm38, 0.0
  %44 = vst.msk [vmem:[#allocation2 + $0x50] sm:$0x1] %vm38, 0.0
  %45 = vst.msk [vmem:[#allocation2 + $0x60] sm:$0x1] %vm38, 0.0
  %46 = vst.msk [vmem:[#allocation2 + $0x70] sm:$0x1] %vm38, 0.0
  %47 = vst.msk [vmem:[#allocation2 + $0x80] sm:$0x1] %vm38, 0.0
  %48 = vst.msk [vmem:[#allocation2 + $0x90] sm:$0x1] %vm38, 0.0
  %49 = vst.msk [vmem:[#allocation2 + $0xa0] sm:$0x1] %vm38, 0.0
  %50 = vst.msk [vmem:[#allocation2 + $0xb0] sm:$0x1] %vm38, 0.0
  %51 = vst.msk [vmem:[#allocation2 + $0xc0] sm:$0x1] %vm38, 0.0
  %52 = vst.msk [vmem:[#allocation2 + $0xd0] sm:$0x1] %vm38, 0.0
  %53 = vst.msk [vmem:[#allocation2 + $0xe0] sm:$0x1] %vm38, 0.0
  %54 = vst.msk [vmem:[#allocation2 + $0xf0] sm:$0x1] %vm38, 0.0
  %55 = vst.msk [vmem:[#allocation2 + $0x100] sm:$0x1] %vm38, 0.0
  %56 = vst.msk [vmem:[#allocation2 + $0x110] sm:$0x1] %vm38, 0.0
  %57 = vst.msk [vmem:[#allocation2 + $0x120] sm:$0x1] %vm38, 0.0
  %58 = vst.msk [vmem:[#allocation2 + $0x130] sm:$0x1] %vm38, 0.0
  %59 = vst.msk [vmem:[#allocation2 + $0x9] sm:$0x1] %vm38, 0.0
  %60 = vst.msk [vmem:[#allocation2 + $0x19] sm:$0x1] %vm38, 0.0
  %61 = vst.msk [vmem:[#allocation2 + $0x29] sm:$0x1] %vm38, 0.0
  %62 = vst.msk [vmem:[#allocation2 + $0x39] sm:$0x1] %vm38, 0.0
  %63 = vst.msk [vmem:[#allocation2 + $0x49] sm:$0x1] %vm38, 0.0
  %64 = vst.msk [vmem:[#allocation2 + $0x59] sm:$0x1] %vm38, 0.0
  %65 = vst.msk [vmem:[#allocation2 + $0x69] sm:$0x1] %vm38, 0.0
  %66 = vst.msk [vmem:[#allocation2 + $0x79] sm:$0x1] %vm38, 0.0
  %67 = vst.msk [vmem:[#allocation2 + $0x89] sm:$0x1] %vm38, 0.0
  %68 = vst.msk [vmem:[#allocation2 + $0x99] sm:$0x1] %vm38, 0.0
  %69 = vst.msk [vmem:[#allocation2 + $0xa9] sm:$0x1] %vm38, 0.0
  %70 = vst.msk [vmem:[#allocation2 + $0xb9] sm:$0x1] %vm38, 0.0
  %71 = vst.msk [vmem:[#allocation2 + $0xc9] sm:$0x1] %vm38, 0.0
  %72 = vst.msk [vmem:[#allocation2 + $0xd9] sm:$0x1] %vm38, 0.0
  %73 = vst.msk [vmem:[#allocation2 + $0xe9] sm:$0x1] %vm38, 0.0
  %74 = vst.msk [vmem:[#allocation2 + $0xf9] sm:$0x1] %vm38, 0.0
  %75 = vst.msk [vmem:[#allocation2 + $0x109] sm:$0x1] %vm38, 0.0
  %76 = vst.msk [vmem:[#allocation2 + $0x119] sm:$0x1] %vm38, 0.0
  %77 = vst.msk [vmem:[#allocation2 + $0x129] sm:$0x1] %vm38, 0.0
  %78 = vst.msk [vmem:[#allocation2 + $0x139] sm:$0x1] %vm38, 0.0
  %vm79 = vcmask 261120
  %80 = vst.msk [vmem:[#allocation3] sm:$0xff] %vm79, 0.0
  %vm81 = vcmask 254976
  %82 = vst.msk [vmem:[#allocation3 + $0x8] sm:$0x3] %vm81, 0.0
  %83 = vst.msk [vmem:[#allocation3 + $0xa0] sm:$0xff] %vm79, 0.0
  %84 = vst.msk [vmem:[#allocation3 + $0xa8] sm:$0x3] %vm81, 0.0
  %s85 = scalar_lea.vmem [#allocation3], 144
  %86 = vst.msk [vmem:[%s85] sm:$0xff] %vm79, 0.0
  %87 = vst.msk [vmem:[%s85 + $0x8] sm:$0x3] %vm81, 0.0
  %88 = vst.msk [vmem:[%s85 + $0xa0] sm:$0xff] %vm79, 0.0
  %89 = vst.msk [vmem:[%s85 + $0xa8] sm:$0x3] %vm81, 0.0
  %vm90 = vcmask 253952
  %91 = vst.msk [vmem:[#allocation3] sm:$0x1] %vm90, 0.0
  %92 = vst.msk [vmem:[#allocation3 + $0x10] sm:$0x1] %vm90, 0.0
  %93 = vst.msk [vmem:[#allocation3 + $0x20] sm:$0x1] %vm90, 0.0
  %94 = vst.msk [vmem:[#allocation3 + $0x30] sm:$0x1] %vm90, 0.0
  %95 = vst.msk [vmem:[#allocation3 + $0x40] sm:$0x1] %vm90, 0.0
  %96 = vst.msk [vmem:[#allocation3 + $0x50] sm:$0x1] %vm90, 0.0
  %97 = vst.msk [vmem:[#allocation3 + $0x60] sm:$0x1] %vm90, 0.0
  %98 = vst.msk [vmem:[#allocation3 + $0x70] sm:$0x1] %vm90, 0.0
  %99 = vst.msk [vmem:[#allocation3 + $0x80] sm:$0x1] %vm90, 0.0
  %100 = vst.msk [vmem:[#allocation3 + $0x90] sm:$0x1] %vm90, 0.0
  %101 = vst.msk [vmem:[#allocation3 + $0xa0] sm:$0x1] %vm90, 0.0
  %102 = vst.msk [vmem:[#allocation3 + $0xb0] sm:$0x1] %vm90, 0.0
  %103 = vst.msk [vmem:[#allocation3 + $0xc0] sm:$0x1] %vm90, 0.0
  %104 = vst.msk [vmem:[#allocation3 + $0xd0] sm:$0x1] %vm90, 0.0
  %105 = vst.msk [vmem:[#allocation3 + $0xe0] sm:$0x1] %vm90, 0.0
  %106 = vst.msk [vmem:[#allocation3 + $0xf0] sm:$0x1] %vm90, 0.0
  %107 = vst.msk [vmem:[#allocation3 + $0x100] sm:$0x1] %vm90, 0.0
  %108 = vst.msk [vmem:[#allocation3 + $0x110] sm:$0x1] %vm90, 0.0
  %109 = vst.msk [vmem:[#allocation3 + $0x120] sm:$0x1] %vm90, 0.0
  %110 = vst.msk [vmem:[#allocation3 + $0x130] sm:$0x1] %vm90, 0.0
  %111 = vst.msk [vmem:[#allocation3 + $0x9] sm:$0x1] %vm90, 0.0
  %112 = vst.msk [vmem:[#allocation3 + $0x19] sm:$0x1] %vm90, 0.0
  %113 = vst.msk [vmem:[#allocation3 + $0x29] sm:$0x1] %vm90, 0.0
  %114 = vst.msk [vmem:[#allocation3 + $0x39] sm:$0x1] %vm90, 0.0
  %115 = vst.msk [vmem:[#allocation3 + $0x49] sm:$0x1] %vm90, 0.0
  %116 = vst.msk [vmem:[#allocation3 + $0x59] sm:$0x1] %vm90, 0.0
  %117 = vst.msk [vmem:[#allocation3 + $0x69] sm:$0x1] %vm90, 0.0
  %118 = vst.msk [vmem:[#allocation3 + $0x79] sm:$0x1] %vm90, 0.0
  %119 = vst.msk [vmem:[#allocation3 + $0x89] sm:$0x1] %vm90, 0.0
  %120 = vst.msk [vmem:[#allocation3 + $0x99] sm:$0x1] %vm90, 0.0
  %121 = vst.msk [vmem:[#allocation3 + $0xa9] sm:$0x1] %vm90, 0.0
  %122 = vst.msk [vmem:[#allocation3 + $0xb9] sm:$0x1] %vm90, 0.0
  %123 = vst.msk [vmem:[#allocation3 + $0xc9] sm:$0x1] %vm90, 0.0
  %124 = vst.msk [vmem:[#allocation3 + $0xd9] sm:$0x1] %vm90, 0.0
  %125 = vst.msk [vmem:[#allocation3 + $0xe9] sm:$0x1] %vm90, 0.0
  %126 = vst.msk [vmem:[#allocation3 + $0xf9] sm:$0x1] %vm90, 0.0
  %127 = vst.msk [vmem:[#allocation3 + $0x109] sm:$0x1] %vm90, 0.0
  %128 = vst.msk [vmem:[#allocation3 + $0x119] sm:$0x1] %vm90, 0.0
  %129 = vst.msk [vmem:[#allocation3 + $0x129] sm:$0x1] %vm90, 0.0
  %130 = vst.msk [vmem:[#allocation3 + $0x139] sm:$0x1] %vm90, 0.0
  %v131 = vld [vmem:[%s0] sm:$0xff]
  %v132 = vld [vmem:[%s0 + $0x8] sm:$0xff]
  %v133 = vld [vmem:[%s0 + $0x10] sm:$0xff]
  %v134 = vld [vmem:[%s0 + $0x18] sm:$0xff]
  %v135 = vld [vmem:[%s0 + $0x20] sm:$0xff]
  %v136 = vld [vmem:[%s0 + $0x28] sm:$0xff]
  %v137 = vld [vmem:[%s0 + $0x30] sm:$0xff]
  %v138 = vld [vmem:[%s0 + $0x38] sm:$0xff]
  %v139 = vld [vmem:[%s0 + $0x40] sm:$0xff]
  %v140 = vld [vmem:[%s0 + $0x48] sm:$0xff]
  %v141 = vld [vmem:[%s0 + $0x50] sm:$0xff]
  %v142 = vld [vmem:[%s0 + $0x58] sm:$0xff]
  %v143 = vld [vmem:[%s0 + $0x60] sm:$0xff]
  %v144 = vld [vmem:[%s0 + $0x68] sm:$0xff]
  %v145 = vld [vmem:[%s0 + $0x70] sm:$0xff]
  %v146 = vld [vmem:[%s0 + $0x78] sm:$0xff]
  %v147 = vsel %vm79, %v131, 0.0
  %v148 = vsel %vm79, %v132, 0.0
  %v149 = vadd.f32 %v147, %v148
  %v150 = vsel %vm79, %v133, 0.0
  %v151 = vadd.f32 %v149, %v150
  %v152 = vsel %vm79, %v134, 0.0
  %v153 = vadd.f32 %v151, %v152
  %v154 = vsel %vm79, %v135, 0.0
  %v155 = vadd.f32 %v153, %v154
  %v156 = vsel %vm79, %v136, 0.0
  %v157 = vadd.f32 %v155, %v156
  %v158 = vsel %vm79, %v137, 0.0
  %v159 = vadd.f32 %v157, %v158
  %v160 = vsel %vm79, %v138, 0.0
  %v161 = vadd.f32 %v159, %v160
  %v162 = vsel %vm79, %v139, 0.0
  %v163 = vadd.f32 %v161, %v162
  %v164 = vsel %vm79, %v140, 0.0
  %v165 = vadd.f32 %v163, %v164
  %v166 = vsel %vm79, %v141, 0.0
  %v167 = vadd.f32 %v165, %v166
  %v168 = vsel %vm79, %v142, 0.0
  %v169 = vadd.f32 %v167, %v168
  %v170 = vsel %vm79, %v143, 0.0
  %v171 = vadd.f32 %v169, %v170
  %v172 = vsel %vm79, %v144, 0.0
  %v173 = vadd.f32 %v171, %v172
  %v174 = vsel %vm79, %v145, 0.0
  %v175 = vadd.f32 %v173, %v174
  %v176 = vsel %vm79, %v146, 0.0
  %v177 = vadd.f32 %v175, %v176
  %v178 = vrot.slane %v177, 4
  %v179 = vadd.f32 %v177, %v178
  %v180 = vrot.slane %v179, 2
  %v181 = vadd.f32 %v179, %v180
  %v182 = vrot.slane %v181, 1
  %v183 = vadd.f32 %v181, %v182
  %v184 = vmul.f32 %v131, %v131
  %v185 = vmul.f32 %v132, %v132
  %v186 = vmul.f32 %v133, %v133
  %v187 = vmul.f32 %v134, %v134
  %v188 = vmul.f32 %v135, %v135
  %v189 = vmul.f32 %v136, %v136
  %v190 = vmul.f32 %v137, %v137
  %v191 = vmul.f32 %v138, %v138
  %v192 = vmul.f32 %v139, %v139
  %v193 = vmul.f32 %v140, %v140
  %v194 = vmul.f32 %v141, %v141
  %v195 = vmul.f32 %v142, %v142
  %v196 = vmul.f32 %v143, %v143
  %v197 = vmul.f32 %v144, %v144
  %v198 = vmul.f32 %v145, %v145
  %v199 = vmul.f32 %v146, %v146
  %v200 = vsel %vm79, %v184, 0.0
  %v201 = vsel %vm79, %v185, 0.0
  %v202 = vadd.f32 %v200, %v201
  %v203 = vsel %vm79, %v186, 0.0
  %v204 = vadd.f32 %v202, %v203
  %v205 = vsel %vm79, %v187, 0.0
  %v206 = vadd.f32 %v204, %v205
  %v207 = vsel %vm79, %v188, 0.0
  %v208 = vadd.f32 %v206, %v207
  %v209 = vsel %vm79, %v189, 0.0
  %v210 = vadd.f32 %v208, %v209
  %v211 = vsel %vm79, %v190, 0.0
  %v212 = vadd.f32 %v210, %v211
  %v213 = vsel %vm79, %v191, 0.0
  %v214 = vadd.f32 %v212, %v213
  %v215 = vsel %vm79, %v192, 0.0
  %v216 = vadd.f32 %v214, %v215
  %v217 = vsel %vm79, %v193, 0.0
  %v218 = vadd.f32 %v216, %v217
  %v219 = vsel %vm79, %v194, 0.0
  %v220 = vadd.f32 %v218, %v219
  %v221 = vsel %vm79, %v195, 0.0
  %v222 = vadd.f32 %v220, %v221
  %v223 = vsel %vm79, %v196, 0.0
  %v224 = vadd.f32 %v222, %v223
  %v225 = vsel %vm79, %v197, 0.0
  %v226 = vadd.f32 %v224, %v225
  %v227 = vsel %vm79, %v198, 0.0
  %v228 = vadd.f32 %v226, %v227
  %v229 = vsel %vm79, %v199, 0.0
  %v230 = vadd.f32 %v228, %v229
  %v231 = vrot.slane %v230, 4
  %v232 = vadd.f32 %v230, %v231
  %v233 = vrot.slane %v232, 2
  %v234 = vadd.f32 %v232, %v233
  %v235 = vrot.slane %v234, 1
  %v236 = vadd.f32 %v234, %v235
  %v237 = vmul.f32 %v183, 0.0078125
  %v238 = vmul.f32 %v236, 0.0078125
  %v239 = vmul.f32 %v237, %v237
  %v240 = vsub.f32 %v238, %v239
  %v241 = vmax.f32 %v240, 0.0
  %v242 = vsub.f32 %v131, %v237
  %v243 = vsub.f32 %v132, %v237
  %v244 = vsub.f32 %v133, %v237
  %v245 = vsub.f32 %v134, %v237
  %v246 = vsub.f32 %v135, %v237
  %v247 = vsub.f32 %v136, %v237
  %v248 = vsub.f32 %v137, %v237
  %v249 = vsub.f32 %v138, %v237
  %v250 = vsub.f32 %v139, %v237
  %v251 = vsub.f32 %v140, %v237
  %v252 = vsub.f32 %v141, %v237
  %v253 = vsub.f32 %v142, %v237
  %v254 = vsub.f32 %v143, %v237
  %v255 = vsub.f32 %v144, %v237
  %v256 = vsub.f32 %v145, %v237
  %v257 = vsub.f32 %v146, %v237
  %v258 = vadd.f32 %v241, 1e-05
  %v259 = vrsqrt.pop %v258
  %v260 = vmul.f32 %v242, %v259
  %v261 = vmul.f32 %v243, %v259
  %v262 = vmul.f32 %v244, %v259
  %v263 = vmul.f32 %v245, %v259
  %v264 = vmul.f32 %v246, %v259
  %v265 = vmul.f32 %v247, %v259
  %v266 = vmul.f32 %v248, %v259
  %v267 = vmul.f32 %v249, %v259
  %v268 = vmul.f32 %v250, %v259
  %v269 = vmul.f32 %v251, %v259
  %v270 = vmul.f32 %v252, %v259
  %v271 = vmul.f32 %v253, %v259
  %v272 = vmul.f32 %v254, %v259
  %v273 = vmul.f32 %v255, %v259
  %v274 = vmul.f32 %v256, %v259
  %v275 = vmul.f32 %v257, %v259
  %s276 = scalar_lea.vmem [#allocation2], 16
  %277 = vst.msk [vmem:[%s276 + $0x1] sm:$0xff] %vm79, %v260
  %278 = vst.msk [vmem:[%s276 + $0x11] sm:$0xff] %vm79, %v261
  %279 = vst.msk [vmem:[%s276 + $0x21] sm:$0xff] %vm79, %v262
  %280 = vst.msk [vmem:[%s276 + $0x31] sm:$0xff] %vm79, %v263
  %281 = vst.msk [vmem:[%s276 + $0x41] sm:$0xff] %vm79, %v264
  %282 = vst.msk [vmem:[%s276 + $0x51] sm:$0xff] %vm79, %v265
  %283 = vst.msk [vmem:[%s276 + $0x61] sm:$0xff] %vm79, %v266
  %284 = vst.msk [vmem:[%s276 + $0x71] sm:$0xff] %vm79, %v267
  %285 = vst.msk [vmem:[%s276 + $0xa1] sm:$0xff] %vm79, %v268
  %286 = vst.msk [vmem:[%s276 + $0xb1] sm:$0xff] %vm79, %v269
  %287 = vst.msk [vmem:[%s276 + $0xc1] sm:$0xff] %vm79, %v270
  %288 = vst.msk [vmem:[%s276 + $0xd1] sm:$0xff] %vm79, %v271
  %289 = vst.msk [vmem:[%s276 + $0xe1] sm:$0xff] %vm79, %v272
  %290 = vst.msk [vmem:[%s276 + $0xf1] sm:$0xff] %vm79, %v273
  %291 = vst.msk [vmem:[%s276 + $0x101] sm:$0xff] %vm79, %v274
  %292 = vst.msk [vmem:[%s276 + $0x111] sm:$0xff] %vm79, %v275
  %v293 = vrot.slane %v161, 4
  %v294 = vadd.f32 %v161, %v293
  %v295 = vrot.slane %v294, 2
  %v296 = vadd.f32 %v294, %v295
  %v297 = vrot.slane %v296, 1
  %v298 = vadd.f32 %v296, %v297
  %v299 = vadd.f32 %v162, %v164
  %v300 = vadd.f32 %v299, %v166
  %v301 = vadd.f32 %v300, %v168
  %v302 = vadd.f32 %v301, %v170
  %v303 = vadd.f32 %v302, %v172
  %v304 = vadd.f32 %v303, %v174
  %v305 = vadd.f32 %v304, %v176
  %v306 = vrot.slane %v305, 4
  %v307 = vadd.f32 %v305, %v306
  %v308 = vrot.slane %v307, 2
  %v309 = vadd.f32 %v307, %v308
  %v310 = vrot.slane %v309, 1
  %v311 = vadd.f32 %v309, %v310
  %v312 = vrot.slane %v214, 4
  %v313 = vadd.f32 %v214, %v312
  %v314 = vrot.slane %v313, 2
  %v315 = vadd.f32 %v313, %v314
  %v316 = vrot.slane %v315, 1
  %v317 = vadd.f32 %v315, %v316
  %v318 = vadd.f32 %v215, %v217
  %v319 = vadd.f32 %v318, %v219
  %v320 = vadd.f32 %v319, %v221
  %v321 = vadd.f32 %v320, %v223
  %v322 = vadd.f32 %v321, %v225
  %v323 = vadd.f32 %v322, %v227
  %v324 = vadd.f32 %v323, %v229
  %v325 = vrot.slane %v324, 4
  %v326 = vadd.f32 %v324, %v325
  %v327 = vrot.slane %v326, 2
  %v328 = vadd.f32 %v326, %v327
  %v329 = vrot.slane %v328, 1
  %v330 = vadd.f32 %v328, %v329
  %v331 = vmul.f32 %v298, 0.015625
  %v332 = vmul.f32 %v311, 0.015625
  %v333 = vmul.f32 %v317, 0.015625
  %v334 = vmul.f32 %v330, 0.015625
  %v335 = vmul.f32 %v331, %v331
  %v336 = vmul.f32 %v332, %v332
  %v337 = vsub.f32 %v333, %v335
  %v338 = vsub.f32 %v334, %v336
  %v339 = vmax.f32 %v337, 0.0
  %v340 = vmax.f32 %v338, 0.0
  %v341 = vsub.f32 %v131, %v331
  %v342 = vsub.f32 %v132, %v331
  %v343 = vsub.f32 %v133, %v331
  %v344 = vsub.f32 %v134, %v331
  %v345 = vsub.f32 %v135, %v331
  %v346 = vsub.f32 %v136, %v331
  %v347 = vsub.f32 %v137, %v331
  %v348 = vsub.f32 %v138, %v331
  %v349 = vsub.f32 %v139, %v332
  %v350 = vsub.f32 %v140, %v332
  %v351 = vsub.f32 %v141, %v332
  %v352 = vsub.f32 %v142, %v332
  %v353 = vsub.f32 %v143, %v332
  %v354 = vsub.f32 %v144, %v332
  %v355 = vsub.f32 %v145, %v332
  %v356 = vsub.f32 %v146, %v332
  %v357 = vadd.f32 %v339, 1e-05
  %v358 = vadd.f32 %v340, 1e-05
  %v359 = vrsqrt.pop %v357
  %v360 = vrsqrt.pop %v358
  %v361 = vmul.f32 %v341, %v359
  %v362 = vmul.f32 %v342, %v359
  %v363 = vmul.f32 %v343, %v359
  %v364 = vmul.f32 %v344, %v359
  %v365 = vmul.f32 %v345, %v359
  %v366 = vmul.f32 %v346, %v359
  %v367 = vmul.f32 %v347, %v359
  %v368 = vmul.f32 %v348, %v359
  %v369 = vmul.f32 %v349, %v360
  %v370 = vmul.f32 %v350, %v360
  %v371 = vmul.f32 %v351, %v360
  %v372 = vmul.f32 %v352, %v360
  %v373 = vmul.f32 %v353, %v360
  %v374 = vmul.f32 %v354, %v360
  %v375 = vmul.f32 %v355, %v360
  %v376 = vmul.f32 %v356, %v360
  %393 = vrot.lane.b32.xlu0 %v361, 32
  %v394 = vpop.permute.xlu0 %393
  %395 = vrot.lane.b32.xlu0 %v362, 32
  %v396 = vpop.permute.xlu0 %395
  %397 = vrot.lane.b32.xlu0 %v363, 32
  %v398 = vpop.permute.xlu0 %397
  %399 = vrot.lane.b32.xlu0 %v364, 32
  %v400 = vpop.permute.xlu0 %399
  %401 = vrot.lane.b32.xlu0 %v365, 32
  %v402 = vpop.permute.xlu0 %401
  %403 = vrot.lane.b32.xlu0 %v366, 32
  %v404 = vpop.permute.xlu0 %403
  %405 = vrot.lane.b32.xlu0 %v367, 32
  %v406 = vpop.permute.xlu0 %405
  %407 = vrot.lane.b32.xlu0 %v368, 32
  %v408 = vpop.permute.xlu0 %407
  %409 = vrot.lane.b32.xlu0 %v369, 32
  %v410 = vpop.permute.xlu0 %409
  %411 = vrot.lane.b32.xlu0 %v370, 32
  %v412 = vpop.permute.xlu0 %411
  %413 = vrot.lane.b32.xlu0 %v371, 32
  %v414 = vpop.permute.xlu0 %413
  %415 = vrot.lane.b32.xlu0 %v372, 32
  %v416 = vpop.permute.xlu0 %415
  %417 = vrot.lane.b32.xlu0 %v373, 32
  %v418 = vpop.permute.xlu0 %417
  %419 = vrot.lane.b32.xlu0 %v374, 32
  %v420 = vpop.permute.xlu0 %419
  %421 = vrot.lane.b32.xlu0 %v375, 32
  %v422 = vpop.permute.xlu0 %421
  %423 = vrot.lane.b32.xlu0 %v376, 32
  %v424 = vpop.permute.xlu0 %423
  %vm441 = vcmask 523520
  %442 = vst.msk [vmem:[%s276 + $0x1] sm:$0xff] %vm441, %v394
  %443 = vst.msk [vmem:[%s276 + $0x11] sm:$0xff] %vm441, %v396
  %444 = vst.msk [vmem:[%s276 + $0x21] sm:$0xff] %vm441, %v398
  %445 = vst.msk [vmem:[%s276 + $0x31] sm:$0xff] %vm441, %v400
  %446 = vst.msk [vmem:[%s276 + $0x41] sm:$0xff] %vm441, %v402
  %447 = vst.msk [vmem:[%s276 + $0x51] sm:$0xff] %vm441, %v404
  %448 = vst.msk [vmem:[%s276 + $0x61] sm:$0xff] %vm441, %v406
  %449 = vst.msk [vmem:[%s276 + $0x71] sm:$0xff] %vm441, %v408
  %450 = vst.msk [vmem:[%s276 + $0xa1] sm:$0xff] %vm441, %v410
  %451 = vst.msk [vmem:[%s276 + $0xb1] sm:$0xff] %vm441, %v412
  %452 = vst.msk [vmem:[%s276 + $0xc1] sm:$0xff] %vm441, %v414
  %453 = vst.msk [vmem:[%s276 + $0xd1] sm:$0xff] %vm441, %v416
  %454 = vst.msk [vmem:[%s276 + $0xe1] sm:$0xff] %vm441, %v418
  %455 = vst.msk [vmem:[%s276 + $0xf1] sm:$0xff] %vm441, %v420
  %456 = vst.msk [vmem:[%s276 + $0x101] sm:$0xff] %vm441, %v422
  %457 = vst.msk [vmem:[%s276 + $0x111] sm:$0xff] %vm441, %v424
  %v458 = vld [vmem:[#allocation2] sm:$0xff]
  %v459 = vld [vmem:[#allocation2 + $0x10] sm:$0xff]
  %v460 = vld [vmem:[#allocation2 + $0x20] sm:$0xff]
  %v461 = vld [vmem:[#allocation2 + $0x30] sm:$0xff]
  %v462 = vld [vmem:[#allocation2 + $0x40] sm:$0xff]
  %v463 = vld [vmem:[#allocation2 + $0x50] sm:$0xff]
  %v464 = vld [vmem:[#allocation2 + $0x60] sm:$0xff]
  %v465 = vld [vmem:[#allocation2 + $0x70] sm:$0xff]
  %v466 = vld [vmem:[#allocation2 + $0xa0] sm:$0xff]
  %v467 = vld [vmem:[#allocation2 + $0xb0] sm:$0xff]
  %v468 = vld [vmem:[#allocation2 + $0xc0] sm:$0xff]
  %v469 = vld [vmem:[#allocation2 + $0xd0] sm:$0xff]
  %v470 = vld [vmem:[#allocation2 + $0xe0] sm:$0xff]
  %v471 = vld [vmem:[#allocation2 + $0xf0] sm:$0xff]
  %v472 = vld [vmem:[#allocation2 + $0x100] sm:$0xff]
  %v473 = vld [vmem:[#allocation2 + $0x110] sm:$0xff]
  %v474 = vpack.c.bf16 %v459, %v458
  %v475 = vpack.c.bf16 %v461, %v460
  %v476 = vpack.c.bf16 %v463, %v462
  %v477 = vpack.c.bf16 %v465, %v464
  %v478 = vpack.c.bf16 %v467, %v466
  %v479 = vpack.c.bf16 %v469, %v468
  %v480 = vpack.c.bf16 %v471, %v470
  %v481 = vpack.c.bf16 %v473, %v472
  %v482 = vld [vmem:[%s1] sm:$0xf]
  %v483 = vld [vmem:[%s1 + $0x4] sm:$0xf]
  %v484 = vld [vmem:[%s1 + $0x8] sm:$0xf]
  %v485 = vld [vmem:[%s1 + $0xc] sm:$0xf]
  %v486 = vld [vmem:[%s1 + $0x10] sm:$0xf]
  %v487 = vld [vmem:[%s1 + $0x14] sm:$0xf]
  %v488 = vld [vmem:[%s1 + $0x18] sm:$0xf]
  %v489 = vld [vmem:[%s1 + $0x1c] sm:$0xf]
  %v490 = vld [vmem:[#allocation2 + $0x1] sm:$0xff]
  %v491 = vld [vmem:[#allocation2 + $0x11] sm:$0xff]
  %v492 = vld [vmem:[#allocation2 + $0x21] sm:$0xff]
  %v493 = vld [vmem:[#allocation2 + $0x31] sm:$0xff]
  %v494 = vld [vmem:[#allocation2 + $0x41] sm:$0xff]
  %v495 = vld [vmem:[#allocation2 + $0x51] sm:$0xff]
  %v496 = vld [vmem:[#allocation2 + $0x61] sm:$0xff]
  %v497 = vld [vmem:[#allocation2 + $0x71] sm:$0xff]
  %v498 = vld [vmem:[#allocation2 + $0xa1] sm:$0xff]
  %v499 = vld [vmem:[#allocation2 + $0xb1] sm:$0xff]
  %v500 = vld [vmem:[#allocation2 + $0xc1] sm:$0xff]
  %v501 = vld [vmem:[#allocation2 + $0xd1] sm:$0xff]
  %v502 = vld [vmem:[#allocation2 + $0xe1] sm:$0xff]
  %v503 = vld [vmem:[#allocation2 + $0xf1] sm:$0xff]
  %v504 = vld [vmem:[#allocation2 + $0x101] sm:$0xff]
  %v505 = vld [vmem:[#allocation2 + $0x111] sm:$0xff]
  %v506 = vpack.c.bf16 %v491, %v490
  %v507 = vpack.c.bf16 %v493, %v492
  %v508 = vpack.c.bf16 %v495, %v494
  %v509 = vpack.c.bf16 %v497, %v496
  %v510 = vpack.c.bf16 %v499, %v498
  %v511 = vpack.c.bf16 %v501, %v500
  %v512 = vpack.c.bf16 %v503, %v502
  %v513 = vpack.c.bf16 %v505, %v504
  %s514 = scalar_lea.vmem %s1, 32
  %v515 = vld [vmem:[%s514] sm:$0xf]
  %v516 = vld [vmem:[%s514 + $0x4] sm:$0xf]
  %v517 = vld [vmem:[%s514 + $0x8] sm:$0xf]
  %v518 = vld [vmem:[%s514 + $0xc] sm:$0xf]
  %v519 = vld [vmem:[%s514 + $0x10] sm:$0xf]
  %v520 = vld [vmem:[%s514 + $0x14] sm:$0xf]
  %v521 = vld [vmem:[%s514 + $0x18] sm:$0xf]
  %v522 = vld [vmem:[%s514 + $0x1c] sm:$0xf]
  %v531 = vunpack.c.l.b16 %v515
  %v532 = vunpack.c.l.b16 %v516
  %v533 = vunpack.c.l.b16 %v517
  %v534 = vunpack.c.l.b16 %v518
  %v535 = vunpack.c.l.b16 %v519
  %v536 = vunpack.c.l.b16 %v520
  %v537 = vunpack.c.l.b16 %v521
  %v538 = vunpack.c.l.b16 %v522
  %v539 = vpack.c.b16 %v532, %v531
  %v540 = vpack.c.b16 %v534, %v533
  %v541 = vpack.c.b16 %v536, %v535
  %v542 = vpack.c.b16 %v538, %v537
  %v548 = vsel %vm27, %v506, 0
  %v551 = vsel %vm27, %v507, 0
  %v554 = vsel %vm27, %v508, 0
  %v557 = vsel %vm27, %v509, 0
  %v560 = vsel %vm27, %v510, 0
  %v563 = vsel %vm27, %v511, 0
  %v566 = vsel %vm27, %v512, 0
  %v569 = vsel %vm27, %v513, 0
  %571 = vmatprep.subr.bf16.mxu0 0
  %572 = vmatpush1.bf16.msra.mxu0 %v539
  %573 = vmatprep.subr.bf16.mxu0 0
  %574 = vmatpush1.bf16.msra.mxu0 %v540
  %575 = vmatprep.subr.bf16.mxu0 0
  %576 = vmatpush1.bf16.msra.mxu0 %v541
  %577 = vmatprep.subr.bf16.mxu0 0
  %578 = vmatpush1.bf16.msra.mxu0 %v542
  %579 = vmatprep.subr.bf16.mxu0 0
  %580 = vmatpush1.bf16.msra.mxu0 0
  %581 = vmatprep.subr.bf16.mxu0 0
  %582 = vmatpush1.bf16.msra.mxu0 0
  %583 = vmatprep.subr.bf16.mxu0 0
  %584 = vmatpush1.bf16.msra.mxu0 0
  %585 = vmatprep.subr.bf16.mxu0 0
  %586 = vmatpush1.bf16.msra.mxu0 0
  %587 = vmatprep.subr.bf16.mxu0 0
  %588 = vmatpush1.bf16.msra.mxu0 0
  %589 = vmatprep.subr.bf16.mxu0 0
  %590 = vmatpush1.bf16.msra.mxu0 0
  %591 = vmatprep.subr.bf16.mxu0 0
  %592 = vmatpush1.bf16.msra.mxu0 0
  %593 = vmatprep.subr.bf16.mxu0 0
  %594 = vmatpush1.bf16.msra.mxu0 0
  %595 = vmatprep.subr.bf16.mxu0 0
  %596 = vmatpush1.bf16.msra.mxu0 0
  %597 = vmatprep.subr.bf16.mxu0 0
  %598 = vmatpush1.bf16.msra.mxu0 0
  %599 = vmatprep.subr.bf16.mxu0 0
  %600 = vmatpush1.bf16.msra.mxu0 0
  %601 = vmatprep.subr.bf16.mxu0 0
  %602 = vmatpush1.bf16.msra.mxu0 0
  %603 = vmatprep.mubr.bf16.mxu0 0
  %604 = vmatmul.mubr.bf16.gmra.mrb[0].mxu0 %v548
  %v605 = vpop.f32.mrb[0].mxu0
  %v606 = vadd.f32 0.0, %v605
  %v607 = vpop.f32.mrb[0].mxu0
  %v608 = vpop.f32.mrb[0].mxu0
  %v609 = vadd.f32 0.0, %v608
  %v610 = vpop.f32.mrb[0].mxu0
  %611 = vmatprep.mubr.bf16.mxu0 0
  %612 = vmatmul.mubr.bf16.gmra.mrb[0].mxu0 %v551
  %v613 = vpop.f32.mrb[0].mxu0
  %v614 = vadd.f32 0.0, %v613
  %v615 = vpop.f32.mrb[0].mxu0
  %v616 = vpop.f32.mrb[0].mxu0
  %v617 = vadd.f32 0.0, %v616
  %v618 = vpop.f32.mrb[0].mxu0
  %619 = vmatprep.mubr.bf16.mxu0 0
  %620 = vmatmul.mubr.bf16.gmra.mrb[0].mxu0 %v554
  %v621 = vpop.f32.mrb[0].mxu0
  %v622 = vadd.f32 0.0, %v621
  %v623 = vpop.f32.mrb[0].mxu0
  %v624 = vpop.f32.mrb[0].mxu0
  %v625 = vadd.f32 0.0, %v624
  %v626 = vpop.f32.mrb[0].mxu0
  %627 = vmatprep.mubr.bf16.mxu0 0
  %628 = vmatmul.mubr.bf16.gmra.mrb[0].mxu0 %v557
  %v629 = vpop.f32.mrb[0].mxu0
  %v630 = vadd.f32 0.0, %v629
  %v631 = vpop.f32.mrb[0].mxu0
  %v632 = vpop.f32.mrb[0].mxu0
  %v633 = vadd.f32 0.0, %v632
  %v634 = vpop.f32.mrb[0].mxu0
  %635 = vmatprep.mubr.bf16.mxu0 0
  %636 = vmatmul.mubr.bf16.gmra.mrb[0].mxu0 %v560
  %v637 = vpop.f32.mrb[0].mxu0
  %v638 = vadd.f32 0.0, %v637
  %v639 = vpop.f32.mrb[0].mxu0
  %v640 = vpop.f32.mrb[0].mxu0
  %v641 = vadd.f32 0.0, %v640
  %v642 = vpop.f32.mrb[0].mxu0
  %643 = vmatprep.mubr.bf16.mxu0 0
  %644 = vmatmul.mubr.bf16.gmra.mrb[0].mxu0 %v563
  %v645 = vpop.f32.mrb[0].mxu0
  %v646 = vadd.f32 0.0, %v645
  %v647 = vpop.f32.mrb[0].mxu0
  %v648 = vpop.f32.mrb[0].mxu0
  %v649 = vadd.f32 0.0, %v648
  %v650 = vpop.f32.mrb[0].mxu0
  %651 = vmatprep.mubr.bf16.mxu0 0
  %652 = vmatmul.mubr.bf16.gmra.mrb[0].mxu0 %v566
  %v653 = vpop.f32.mrb[0].mxu0
  %v654 = vadd.f32 0.0, %v653
  %v655 = vpop.f32.mrb[0].mxu0
  %v656 = vpop.f32.mrb[0].mxu0
  %v657 = vadd.f32 0.0, %v656
  %v658 = vpop.f32.mrb[0].mxu0
  %659 = vmatprep.mubr.bf16.mxu0 0
  %660 = vmatmul.mubr.bf16.gmra.mrb[0].mxu0 %v569
  %v661 = vpop.f32.mrb[0].mxu0
  %v662 = vadd.f32 0.0, %v661
  %v663 = vpop.f32.mrb[0].mxu0
  %v664 = vpop.f32.mrb[0].mxu0
  %v665 = vadd.f32 0.0, %v664
  %v666 = vpop.f32.mrb[0].mxu0
  %667 = vdwg.mxu0
  %v676 = vunpack.c.l.b16 %v482
  %v677 = vunpack.c.l.b16 %v483
  %v678 = vunpack.c.l.b16 %v484
  %v679 = vunpack.c.l.b16 %v485
  %v680 = vunpack.c.l.b16 %v486
  %v681 = vunpack.c.l.b16 %v487
  %v682 = vunpack.c.l.b16 %v488
  %v683 = vunpack.c.l.b16 %v489
  %v684 = vpack.c.b16 %v677, %v676
  %v685 = vpack.c.b16 %v679, %v678
  %v686 = vpack.c.b16 %v681, %v680
  %v687 = vpack.c.b16 %v683, %v682
  %v693 = vsel %vm27, %v474, 0
  %v696 = vsel %vm27, %v475, 0
  %v699 = vsel %vm27, %v476, 0
  %v702 = vsel %vm27, %v477, 0
  %v705 = vsel %vm27, %v478, 0
  %v708 = vsel %vm27, %v479, 0
  %v711 = vsel %vm27, %v480, 0
  %v714 = vsel %vm27, %v481, 0
  %716 = vmatprep.subr.bf16.mxu0 0
  %717 = vmatpush1.bf16.msra.mxu0 %v684
  %718 = vmatprep.subr.bf16.mxu0 0
  %719 = vmatpush1.bf16.msra.mxu0 %v685
  %720 = vmatprep.subr.bf16.mxu0 0
  %721 = vmatpush1.bf16.msra.mxu0 %v686
  %722 = vmatprep.subr.bf16.mxu0 0
  %723 = vmatpush1.bf16.msra.mxu0 %v687
  %724 = vmatprep.subr.bf16.mxu0 0
  %725 = vmatpush1.bf16.msra.mxu0 0
  %726 = vmatprep.subr.bf16.mxu0 0
  %727 = vmatpush1.bf16.msra.mxu0 0
  %728 = vmatprep.subr.bf16.mxu0 0
  %729 = vmatpush1.bf16.msra.mxu0 0
  %730 = vmatprep.subr.bf16.mxu0 0
  %731 = vmatpush1.bf16.msra.mxu0 0
  %732 = vmatprep.subr.bf16.mxu0 0
  %733 = vmatpush1.bf16.msra.mxu0 0
  %734 = vmatprep.subr.bf16.mxu0 0
  %735 = vmatpush1.bf16.msra.mxu0 0
  %736 = vmatprep.subr.bf16.mxu0 0
  %737 = vmatpush1.bf16.msra.mxu0 0
  %738 = vmatprep.subr.bf16.mxu0 0
  %739 = vmatpush1.bf16.msra.mxu0 0
  %740 = vmatprep.subr.bf16.mxu0 0
  %741 = vmatpush1.bf16.msra.mxu0 0
  %742 = vmatprep.subr.bf16.mxu0 0
  %743 = vmatpush1.bf16.msra.mxu0 0
  %744 = vmatprep.subr.bf16.mxu0 0
  %745 = vmatpush1.bf16.msra.mxu0 0
  %746 = vmatprep.subr.bf16.mxu0 0
  %747 = vmatpush1.bf16.msra.mxu0 0
  %748 = vmatprep.mubr.bf16.mxu0 0
  %749 = vmatmul.mubr.bf16.gmra.mrb[0].mxu0 %v693
  %v750 = vpop.f32.mrb[0].mxu0
  %v751 = vadd.f32 %v606, %v750
  %v752 = vpop.f32.mrb[0].mxu0
  %v753 = vpop.f32.mrb[0].mxu0
  %v754 = vadd.f32 %v609, %v753
  %v755 = vpop.f32.mrb[0].mxu0
  %756 = vmatprep.mubr.bf16.mxu0 0
  %757 = vmatmul.mubr.bf16.gmra.mrb[0].mxu0 %v696
  %v758 = vpop.f32.mrb[0].mxu0
  %v759 = vadd.f32 %v614, %v758
  %v760 = vpop.f32.mrb[0].mxu0
  %v761 = vpop.f32.mrb[0].mxu0
  %v762 = vadd.f32 %v617, %v761
  %v763 = vpop.f32.mrb[0].mxu0
  %764 = vmatprep.mubr.bf16.mxu0 0
  %765 = vmatmul.mubr.bf16.gmra.mrb[0].mxu0 %v699
  %v766 = vpop.f32.mrb[0].mxu0
  %v767 = vadd.f32 %v622, %v766
  %v768 = vpop.f32.mrb[0].mxu0
  %v769 = vpop.f32.mrb[0].mxu0
  %v770 = vadd.f32 %v625, %v769
  %v771 = vpop.f32.mrb[0].mxu0
  %772 = vmatprep.mubr.bf16.mxu0 0
  %773 = vmatmul.mubr.bf16.gmra.mrb[0].mxu0 %v702
  %v774 = vpop.f32.mrb[0].mxu0
  %v775 = vadd.f32 %v630, %v774
  %v776 = vpop.f32.mrb[0].mxu0
  %v777 = vpop.f32.mrb[0].mxu0
  %v778 = vadd.f32 %v633, %v777
  %v779 = vpop.f32.mrb[0].mxu0
  %780 = vmatprep.mubr.bf16.mxu0 0
  %781 = vmatmul.mubr.bf16.gmra.mrb[0].mxu0 %v705
  %v782 = vpop.f32.mrb[0].mxu0
  %v783 = vadd.f32 %v638, %v782
  %v784 = vpop.f32.mrb[0].mxu0
  %v785 = vpop.f32.mrb[0].mxu0
  %v786 = vadd.f32 %v641, %v785
  %v787 = vpop.f32.mrb[0].mxu0
  %788 = vmatprep.mubr.bf16.mxu0 0
  %789 = vmatmul.mubr.bf16.gmra.mrb[0].mxu0 %v708
  %v790 = vpop.f32.mrb[0].mxu0
  %v791 = vadd.f32 %v646, %v790
  %v792 = vpop.f32.mrb[0].mxu0
  %v793 = vpop.f32.mrb[0].mxu0
  %v794 = vadd.f32 %v649, %v793
  %v795 = vpop.f32.mrb[0].mxu0
  %796 = vmatprep.mubr.bf16.mxu0 0
  %797 = vmatmul.mubr.bf16.gmra.mrb[0].mxu0 %v711
  %v798 = vpop.f32.mrb[0].mxu0
  %v799 = vadd.f32 %v654, %v798
  %v800 = vpop.f32.mrb[0].mxu0
  %v801 = vpop.f32.mrb[0].mxu0
  %v802 = vadd.f32 %v657, %v801
  %v803 = vpop.f32.mrb[0].mxu0
  %804 = vmatprep.mubr.bf16.mxu0 0
  %805 = vmatmul.mubr.bf16.gmra.mrb[0].mxu0 %v714
  %v806 = vpop.f32.mrb[0].mxu0
  %v807 = vadd.f32 %v662, %v806
  %v808 = vpop.f32.mrb[0].mxu0
  %v809 = vpop.f32.mrb[0].mxu0
  %v810 = vadd.f32 %v665, %v809
  %v811 = vpop.f32.mrb[0].mxu0
  %812 = vdwg.mxu0
  %v813 = vld [vmem:[#allocation2 + $0x2] sm:$0xff]
  %v814 = vld [vmem:[#allocation2 + $0x12] sm:$0xff]
  %v815 = vld [vmem:[#allocation2 + $0x22] sm:$0xff]
  %v816 = vld [vmem:[#allocation2 + $0x32] sm:$0xff]
  %v817 = vld [vmem:[#allocation2 + $0x42] sm:$0xff]
  %v818 = vld [vmem:[#allocation2 + $0x52] sm:$0xff]
  %v819 = vld [vmem:[#allocation2 + $0x62] sm:$0xff]
  %v820 = vld [vmem:[#allocation2 + $0x72] sm:$0xff]
  %v821 = vld [vmem:[#allocation2 + $0xa2] sm:$0xff]
  %v822 = vld [vmem:[#allocation2 + $0xb2] sm:$0xff]
  %v823 = vld [vmem:[#allocation2 + $0xc2] sm:$0xff]
  %v824 = vld [vmem:[#allocation2 + $0xd2] sm:$0xff]
  %v825 = vld [vmem:[#allocation2 + $0xe2] sm:$0xff]
  %v826 = vld [vmem:[#allocation2 + $0xf2] sm:$0xff]
  %v827 = vld [vmem:[#allocation2 + $0x102] sm:$0xff]
  %v828 = vld [vmem:[#allocation2 + $0x112] sm:$0xff]
  %v829 = vpack.c.bf16 %v814, %v813
  %v830 = vpack.c.bf16 %v816, %v815
  %v831 = vpack.c.bf16 %v818, %v817
  %v832 = vpack.c.bf16 %v820, %v819
  %v833 = vpack.c.bf16 %v822, %v821
  %v834 = vpack.c.bf16 %v824, %v823
  %v835 = vpack.c.bf16 %v826, %v825
  %v836 = vpack.c.bf16 %v828, %v827
  %s837 = scalar_lea.vmem %s1, 64
  %v838 = vld [vmem:[%s837] sm:$0xf]
  %v839 = vld [vmem:[%s837 + $0x4] sm:$0xf]
  %v840 = vld [vmem:[%s837 + $0x8] sm:$0xf]
  %v841 = vld [vmem:[%s837 + $0xc] sm:$0xf]
  %v842 = vld [vmem:[%s837 + $0x10] sm:$0xf]
  %v843 = vld [vmem:[%s837 + $0x14] sm:$0xf]
  %v844 = vld [vmem:[%s837 + $0x18] sm:$0xf]
  %v845 = vld [vmem:[%s837 + $0x1c] sm:$0xf]
  %v854 = vunpack.c.l.b16 %v838
  %v855 = vunpack.c.l.b16 %v839
  %v856 = vunpack.c.l.b16 %v840
  %v857 = vunpack.c.l.b16 %v841
  %v858 = vunpack.c.l.b16 %v842
  %v859 = vunpack.c.l.b16 %v843
  %v860 = vunpack.c.l.b16 %v844
  %v861 = vunpack.c.l.b16 %v845
  %v862 = vpack.c.b16 %v855, %v854
  %v863 = vpack.c.b16 %v857, %v856
  %v864 = vpack.c.b16 %v859, %v858
  %v865 = vpack.c.b16 %v861, %v860
  %v871 = vsel %vm27, %v829, 0
  %v874 = vsel %vm27, %v830, 0
  %v877 = vsel %vm27, %v831, 0
  %v880 = vsel %vm27, %v832, 0
  %v883 = vsel %vm27, %v833, 0
  %v886 = vsel %vm27, %v834, 0
  %v889 = vsel %vm27, %v835, 0
  %v892 = vsel %vm27, %v836, 0
  %894 = vmatprep.subr.bf16.mxu0 0
  %895 = vmatpush1.bf16.msra.mxu0 %v862
  %896 = vmatprep.subr.bf16.mxu0 0
  %897 = vmatpush1.bf16.msra.mxu0 %v863
  %898 = vmatprep.subr.bf16.mxu0 0
  %899 = vmatpush1.bf16.msra.mxu0 %v864
  %900 = vmatprep.subr.bf16.mxu0 0
  %901 = vmatpush1.bf16.msra.mxu0 %v865
  %902 = vmatprep.subr.bf16.mxu0 0
  %903 = vmatpush1.bf16.msra.mxu0 0
  %904 = vmatprep.subr.bf16.mxu0 0
  %905 = vmatpush1.bf16.msra.mxu0 0
  %906 = vmatprep.subr.bf16.mxu0 0
  %907 = vmatpush1.bf16.msra.mxu0 0
  %908 = vmatprep.subr.bf16.mxu0 0
  %909 = vmatpush1.bf16.msra.mxu0 0
  %910 = vmatprep.subr.bf16.mxu0 0
  %911 = vmatpush1.bf16.msra.mxu0 0
  %912 = vmatprep.subr.bf16.mxu0 0
  %913 = vmatpush1.bf16.msra.mxu0 0
  %914 = vmatprep.subr.bf16.mxu0 0
  %915 = vmatpush1.bf16.msra.mxu0 0
  %916 = vmatprep.subr.bf16.mxu0 0
  %917 = vmatpush1.bf16.msra.mxu0 0
  %918 = vmatprep.subr.bf16.mxu0 0
  %919 = vmatpush1.bf16.msra.mxu0 0
  %920 = vmatprep.subr.bf16.mxu0 0
  %921 = vmatpush1.bf16.msra.mxu0 0
  %922 = vmatprep.subr.bf16.mxu0 0
  %923 = vmatpush1.bf16.msra.mxu0 0
  %924 = vmatprep.subr.bf16.mxu0 0
  %925 = vmatpush1.bf16.msra.mxu0 0
  %926 = vmatprep.mubr.bf16.mxu0 0
  %927 = vmatmul.mubr.bf16.gmra.mrb[0].mxu0 %v871
  %v928 = vpop.f32.mrb[0].mxu0
  %v929 = vadd.f32 0.0, %v928
  %v930 = vpop.f32.mrb[0].mxu0
  %v931 = vpop.f32.mrb[0].mxu0
  %v932 = vadd.f32 0.0, %v931
  %v933 = vpop.f32.mrb[0].mxu0
  %934 = vmatprep.mubr.bf16.mxu0 0
  %935 = vmatmul.mubr.bf16.gmra.mrb[0].mxu0 %v874
  %v936 = vpop.f32.mrb[0].mxu0
  %v937 = vadd.f32 0.0, %v936
  %v938 = vpop.f32.mrb[0].mxu0
  %v939 = vpop.f32.mrb[0].mxu0
  %v940 = vadd.f32 0.0, %v939
  %v941 = vpop.f32.mrb[0].mxu0
  %942 = vmatprep.mubr.bf16.mxu0 0
  %943 = vmatmul.mubr.bf16.gmra.mrb[0].mxu0 %v877
  %v944 = vpop.f32.mrb[0].mxu0
  %v945 = vadd.f32 0.0, %v944
  %v946 = vpop.f32.mrb[0].mxu0
  %v947 = vpop.f32.mrb[0].mxu0
  %v948 = vadd.f32 0.0, %v947
  %v949 = vpop.f32.mrb[0].mxu0
  %950 = vmatprep.mubr.bf16.mxu0 0
  %951 = vmatmul.mubr.bf16.gmra.mrb[0].mxu0 %v880
  %v952 = vpop.f32.mrb[0].mxu0
  %v953 = vadd.f32 0.0, %v952
  %v954 = vpop.f32.mrb[0].mxu0
  %v955 = vpop.f32.mrb[0].mxu0
  %v956 = vadd.f32 0.0, %v955
  %v957 = vpop.f32.mrb[0].mxu0
  %958 = vmatprep.mubr.bf16.mxu0 0
  %959 = vmatmul.mubr.bf16.gmra.mrb[0].mxu0 %v883
  %v960 = vpop.f32.mrb[0].mxu0
  %v961 = vadd.f32 0.0, %v960
  %v962 = vpop.f32.mrb[0].mxu0
  %v963 = vpop.f32.mrb[0].mxu0
  %v964 = vadd.f32 0.0, %v963
  %v965 = vpop.f32.mrb[0].mxu0
  %966 = vmatprep.mubr.bf16.mxu0 0
  %967 = vmatmul.mubr.bf16.gmra.mrb[0].mxu0 %v886
  %v968 = vpop.f32.mrb[0].mxu0
  %v969 = vadd.f32 0.0, %v968
  %v970 = vpop.f32.mrb[0].mxu0
  %v971 = vpop.f32.mrb[0].mxu0
  %v972 = vadd.f32 0.0, %v971
  %v973 = vpop.f32.mrb[0].mxu0
  %974 = vmatprep.mubr.bf16.mxu0 0
  %975 = vmatmul.mubr.bf16.gmra.mrb[0].mxu0 %v889
  %v976 = vpop.f32.mrb[0].mxu0
  %v977 = vadd.f32 0.0, %v976
  %v978 = vpop.f32.mrb[0].mxu0
  %v979 = vpop.f32.mrb[0].mxu0
  %v980 = vadd.f32 0.0, %v979
  %v981 = vpop.f32.mrb[0].mxu0
  %982 = vmatprep.mubr.bf16.mxu0 0
  %983 = vmatmul.mubr.bf16.gmra.mrb[0].mxu0 %v892
  %v984 = vpop.f32.mrb[0].mxu0
  %v985 = vadd.f32 0.0, %v984
  %v986 = vpop.f32.mrb[0].mxu0
  %v987 = vpop.f32.mrb[0].mxu0
  %v988 = vadd.f32 0.0, %v987
  %v989 = vpop.f32.mrb[0].mxu0
  %990 = vdwg.mxu0
  %v991 = vadd.f32 %v751, %v929
  %v992 = vadd.f32 %v754, %v932
  %v993 = vadd.f32 %v759, %v937
  %v994 = vadd.f32 %v762, %v940
  %v995 = vadd.f32 %v767, %v945
  %v996 = vadd.f32 %v770, %v948
  %v997 = vadd.f32 %v775, %v953
  %v998 = vadd.f32 %v778, %v956
  %v999 = vadd.f32 %v783, %v961
  %v1000 = vadd.f32 %v786, %v964
  %v1001 = vadd.f32 %v791, %v969
  %v1002 = vadd.f32 %v794, %v972
  %v1003 = vadd.f32 %v799, %v977
  %v1004 = vadd.f32 %v802, %v980
  %v1005 = vadd.f32 %v807, %v985
  %v1006 = vadd.f32 %v810, %v988
  %v1007 = vld [vmem:[%s276] sm:$0xff]
  %v1008 = vld [vmem:[%s276 + $0x10] sm:$0xff]
  %v1009 = vld [vmem:[%s276 + $0x20] sm:$0xff]
  %v1010 = vld [vmem:[%s276 + $0x30] sm:$0xff]
  %v1011 = vld [vmem:[%s276 + $0x40] sm:$0xff]
  %v1012 = vld [vmem:[%s276 + $0x50] sm:$0xff]
  %v1013 = vld [vmem:[%s276 + $0x60] sm:$0xff]
  %v1014 = vld [vmem:[%s276 + $0x70] sm:$0xff]
  %v1015 = vld [vmem:[%s276 + $0xa0] sm:$0xff]
  %v1016 = vld [vmem:[%s276 + $0xb0] sm:$0xff]
  %v1017 = vld [vmem:[%s276 + $0xc0] sm:$0xff]
  %v1018 = vld [vmem:[%s276 + $0xd0] sm:$0xff]
  %v1019 = vld [vmem:[%s276 + $0xe0] sm:$0xff]
  %v1020 = vld [vmem:[%s276 + $0xf0] sm:$0xff]
  %v1021 = vld [vmem:[%s276 + $0x100] sm:$0xff]
  %v1022 = vld [vmem:[%s276 + $0x110] sm:$0xff]
  %v1023 = vpack.c.bf16 %v1008, %v1007
  %v1024 = vpack.c.bf16 %v1010, %v1009
  %v1025 = vpack.c.bf16 %v1012, %v1011
  %v1026 = vpack.c.bf16 %v1014, %v1013
  %v1027 = vpack.c.bf16 %v1016, %v1015
  %v1028 = vpack.c.bf16 %v1018, %v1017
  %v1029 = vpack.c.bf16 %v1020, %v1019
  %v1030 = vpack.c.bf16 %v1022, %v1021
  %s1031 = scalar_lea.vmem %s1, 96
  %v1032 = vld [vmem:[%s1031] sm:$0xf]
  %v1033 = vld [vmem:[%s1031 + $0x4] sm:$0xf]
  %v1034 = vld [vmem:[%s1031 + $0x8] sm:$0xf]
  %v1035 = vld [vmem:[%s1031 + $0xc] sm:$0xf]
  %v1036 = vld [vmem:[%s1031 + $0x10] sm:$0xf]
  %v1037 = vld [vmem:[%s1031 + $0x14] sm:$0xf]
  %v1038 = vld [vmem:[%s1031 + $0x18] sm:$0xf]
  %v1039 = vld [vmem:[%s1031 + $0x1c] sm:$0xf]
  %v1048 = vunpack.c.l.b16 %v1032
  %v1049 = vunpack.c.l.b16 %v1033
  %v1050 = vunpack.c.l.b16 %v1034
  %v1051 = vunpack.c.l.b16 %v1035
  %v1052 = vunpack.c.l.b16 %v1036
  %v1053 = vunpack.c.l.b16 %v1037
  %v1054 = vunpack.c.l.b16 %v1038
  %v1055 = vunpack.c.l.b16 %v1039
  %v1056 = vpack.c.b16 %v1049, %v1048
  %v1057 = vpack.c.b16 %v1051, %v1050
  %v1058 = vpack.c.b16 %v1053, %v1052
  %v1059 = vpack.c.b16 %v1055, %v1054
  %v1065 = vsel %vm27, %v1023, 0
  %v1068 = vsel %vm27, %v1024, 0
  %v1071 = vsel %vm27, %v1025, 0
  %v1074 = vsel %vm27, %v1026, 0
  %v1077 = vsel %vm27, %v1027, 0
  %v1080 = vsel %vm27, %v1028, 0
  %v1083 = vsel %vm27, %v1029, 0
  %v1086 = vsel %vm27, %v1030, 0
  %1088 = vmatprep.subr.bf16.mxu0 0
  %1089 = vmatpush1.bf16.msra.mxu0 %v1056
  %1090 = vmatprep.subr.bf16.mxu0 0
  %1091 = vmatpush1.bf16.msra.mxu0 %v1057
  %1092 = vmatprep.subr.bf16.mxu0 0
  %1093 = vmatpush1.bf16.msra.mxu0 %v1058
  %1094 = vmatprep.subr.bf16.mxu0 0
  %1095 = vmatpush1.bf16.msra.mxu0 %v1059
  %1096 = vmatprep.subr.bf16.mxu0 0
  %1097 = vmatpush1.bf16.msra.mxu0 0
  %1098 = vmatprep.subr.bf16.mxu0 0
  %1099 = vmatpush1.bf16.msra.mxu0 0
  %1100 = vmatprep.subr.bf16.mxu0 0
  %1101 = vmatpush1.bf16.msra.mxu0 0
  %1102 = vmatprep.subr.bf16.mxu0 0
  %1103 = vmatpush1.bf16.msra.mxu0 0
  %1104 = vmatprep.subr.bf16.mxu0 0
  %1105 = vmatpush1.bf16.msra.mxu0 0
  %1106 = vmatprep.subr.bf16.mxu0 0
  %1107 = vmatpush1.bf16.msra.mxu0 0
  %1108 = vmatprep.subr.bf16.mxu0 0
  %1109 = vmatpush1.bf16.msra.mxu0 0
  %1110 = vmatprep.subr.bf16.mxu0 0
  %1111 = vmatpush1.bf16.msra.mxu0 0
  %1112 = vmatprep.subr.bf16.mxu0 0
  %1113 = vmatpush1.bf16.msra.mxu0 0
  %1114 = vmatprep.subr.bf16.mxu0 0
  %1115 = vmatpush1.bf16.msra.mxu0 0
  %1116 = vmatprep.subr.bf16.mxu0 0
  %1117 = vmatpush1.bf16.msra.mxu0 0
  %1118 = vmatprep.subr.bf16.mxu0 0
  %1119 = vmatpush1.bf16.msra.mxu0 0
  %1120 = vmatprep.mubr.bf16.mxu0 0
  %1121 = vmatmul.mubr.bf16.gmra.mrb[0].mxu0 %v1065
  %v1122 = vpop.f32.mrb[0].mxu0
  %v1123 = vadd.f32 0.0, %v1122
  %v1124 = vpop.f32.mrb[0].mxu0
  %v1125 = vpop.f32.mrb[0].mxu0
  %v1126 = vadd.f32 0.0, %v1125
  %v1127 = vpop.f32.mrb[0].mxu0
  %1128 = vmatprep.mubr.bf16.mxu0 0
  %1129 = vmatmul.mubr.bf16.gmra.mrb[0].mxu0 %v1068
  %v1130 = vpop.f32.mrb[0].mxu0
  %v1131 = vadd.f32 0.0, %v1130
  %v1132 = vpop.f32.mrb[0].mxu0
  %v1133 = vpop.f32.mrb[0].mxu0
  %v1134 = vadd.f32 0.0, %v1133
  %v1135 = vpop.f32.mrb[0].mxu0
  %1136 = vmatprep.mubr.bf16.mxu0 0
  %1137 = vmatmul.mubr.bf16.gmra.mrb[0].mxu0 %v1071
  %v1138 = vpop.f32.mrb[0].mxu0
  %v1139 = vadd.f32 0.0, %v1138
  %v1140 = vpop.f32.mrb[0].mxu0
  %v1141 = vpop.f32.mrb[0].mxu0
  %v1142 = vadd.f32 0.0, %v1141
  %v1143 = vpop.f32.mrb[0].mxu0
  %1144 = vmatprep.mubr.bf16.mxu0 0
  %1145 = vmatmul.mubr.bf16.gmra.mrb[0].mxu0 %v1074
  %v1146 = vpop.f32.mrb[0].mxu0
  %v1147 = vadd.f32 0.0, %v1146
  %v1148 = vpop.f32.mrb[0].mxu0
  %v1149 = vpop.f32.mrb[0].mxu0
  %v1150 = vadd.f32 0.0, %v1149
  %v1151 = vpop.f32.mrb[0].mxu0
  %1152 = vmatprep.mubr.bf16.mxu0 0
  %1153 = vmatmul.mubr.bf16.gmra.mrb[0].mxu0 %v1077
  %v1154 = vpop.f32.mrb[0].mxu0
  %v1155 = vadd.f32 0.0, %v1154
  %v1156 = vpop.f32.mrb[0].mxu0
  %v1157 = vpop.f32.mrb[0].mxu0
  %v1158 = vadd.f32 0.0, %v1157
  %v1159 = vpop.f32.mrb[0].mxu0
  %1160 = vmatprep.mubr.bf16.mxu0 0
  %1161 = vmatmul.mubr.bf16.gmra.mrb[0].mxu0 %v1080
  %v1162 = vpop.f32.mrb[0].mxu0
  %v1163 = vadd.f32 0.0, %v1162
  %v1164 = vpop.f32.mrb[0].mxu0
  %v1165 = vpop.f32.mrb[0].mxu0
  %v1166 = vadd.f32 0.0, %v1165
  %v1167 = vpop.f32.mrb[0].mxu0
  %1168 = vmatprep.mubr.bf16.mxu0 0
  %1169 = vmatmul.mubr.bf16.gmra.mrb[0].mxu0 %v1083
  %v1170 = vpop.f32.mrb[0].mxu0
  %v1171 = vadd.f32 0.0, %v1170
  %v1172 = vpop.f32.mrb[0].mxu0
  %v1173 = vpop.f32.mrb[0].mxu0
  %v1174 = vadd.f32 0.0, %v1173
  %v1175 = vpop.f32.mrb[0].mxu0
  %1176 = vmatprep.mubr.bf16.mxu0 0
  %1177 = vmatmul.mubr.bf16.gmra.mrb[0].mxu0 %v1086
  %v1178 = vpop.f32.mrb[0].mxu0
  %v1179 = vadd.f32 0.0, %v1178
  %v1180 = vpop.f32.mrb[0].mxu0
  %v1181 = vpop.f32.mrb[0].mxu0
  %v1182 = vadd.f32 0.0, %v1181
  %v1183 = vpop.f32.mrb[0].mxu0
  %1184 = vdwg.mxu0
  %v1185 = vadd.f32 %v991, %v1123
  %v1186 = vadd.f32 %v992, %v1126
  %v1187 = vadd.f32 %v993, %v1131
  %v1188 = vadd.f32 %v994, %v1134
  %v1189 = vadd.f32 %v995, %v1139
  %v1190 = vadd.f32 %v996, %v1142
  %v1191 = vadd.f32 %v997, %v1147
  %v1192 = vadd.f32 %v998, %v1150
  %v1193 = vadd.f32 %v999, %v1155
  %v1194 = vadd.f32 %v1000, %v1158
  %v1195 = vadd.f32 %v1001, %v1163
  %v1196 = vadd.f32 %v1002, %v1166
  %v1197 = vadd.f32 %v1003, %v1171
  %v1198 = vadd.f32 %v1004, %v1174
  %v1199 = vadd.f32 %v1005, %v1179
  %v1200 = vadd.f32 %v1006, %v1182
  %v1201 = vld [vmem:[%s276 + $0x1] sm:$0xff]
  %v1202 = vld [vmem:[%s276 + $0x11] sm:$0xff]
  %v1203 = vld [vmem:[%s276 + $0x21] sm:$0xff]
  %v1204 = vld [vmem:[%s276 + $0x31] sm:$0xff]
  %v1205 = vld [vmem:[%s276 + $0x41] sm:$0xff]
  %v1206 = vld [vmem:[%s276 + $0x51] sm:$0xff]
  %v1207 = vld [vmem:[%s276 + $0x61] sm:$0xff]
  %v1208 = vld [vmem:[%s276 + $0x71] sm:$0xff]
  %v1209 = vld [vmem:[%s276 + $0xa1] sm:$0xff]
  %v1210 = vld [vmem:[%s276 + $0xb1] sm:$0xff]
  %v1211 = vld [vmem:[%s276 + $0xc1] sm:$0xff]
  %v1212 = vld [vmem:[%s276 + $0xd1] sm:$0xff]
  %v1213 = vld [vmem:[%s276 + $0xe1] sm:$0xff]
  %v1214 = vld [vmem:[%s276 + $0xf1] sm:$0xff]
  %v1215 = vld [vmem:[%s276 + $0x101] sm:$0xff]
  %v1216 = vld [vmem:[%s276 + $0x111] sm:$0xff]
  %v1217 = vpack.c.bf16 %v1202, %v1201
  %v1218 = vpack.c.bf16 %v1204, %v1203
  %v1219 = vpack.c.bf16 %v1206, %v1205
  %v1220 = vpack.c.bf16 %v1208, %v1207
  %v1221 = vpack.c.bf16 %v1210, %v1209
  %v1222 = vpack.c.bf16 %v1212, %v1211
  %v1223 = vpack.c.bf16 %v1214, %v1213
  %v1224 = vpack.c.bf16 %v1216, %v1215
  %s1225 = scalar_lea.vmem %s1, 128
  %v1226 = vld [vmem:[%s1225] sm:$0xf]
  %v1227 = vld [vmem:[%s1225 + $0x4] sm:$0xf]
  %v1228 = vld [vmem:[%s1225 + $0x8] sm:$0xf]
  %v1229 = vld [vmem:[%s1225 + $0xc] sm:$0xf]
  %v1230 = vld [vmem:[%s1225 + $0x10] sm:$0xf]
  %v1231 = vld [vmem:[%s1225 + $0x14] sm:$0xf]
  %v1232 = vld [vmem:[%s1225 + $0x18] sm:$0xf]
  %v1233 = vld [vmem:[%s1225 + $0x1c] sm:$0xf]
  %v1242 = vunpack.c.l.b16 %v1226
  %v1243 = vunpack.c.l.b16 %v1227
  %v1244 = vunpack.c.l.b16 %v1228
  %v1245 = vunpack.c.l.b16 %v1229
  %v1246 = vunpack.c.l.b16 %v1230
  %v1247 = vunpack.c.l.b16 %v1231
  %v1248 = vunpack.c.l.b16 %v1232
  %v1249 = vunpack.c.l.b16 %v1233
  %v1250 = vpack.c.b16 %v1243, %v1242
  %v1251 = vpack.c.b16 %v1245, %v1244
  %v1252 = vpack.c.b16 %v1247, %v1246
  %v1253 = vpack.c.b16 %v1249, %v1248
  %v1259 = vsel %vm27, %v1217, 0
  %v1262 = vsel %vm27, %v1218, 0
  %v1265 = vsel %vm27, %v1219, 0
  %v1268 = vsel %vm27, %v1220, 0
  %v1271 = vsel %vm27, %v1221, 0
  %v1274 = vsel %vm27, %v1222, 0
  %v1277 = vsel %vm27, %v1223, 0
  %v1280 = vsel %vm27, %v1224, 0
  %1282 = vmatprep.subr.bf16.mxu0 0
  %1283 = vmatpush1.bf16.msra.mxu0 %v1250
  %1284 = vmatprep.subr.bf16.mxu0 0
  %1285 = vmatpush1.bf16.msra.mxu0 %v1251
  %1286 = vmatprep.subr.bf16.mxu0 0
  %1287 = vmatpush1.bf16.msra.mxu0 %v1252
  %1288 = vmatprep.subr.bf16.mxu0 0
  %1289 = vmatpush1.bf16.msra.mxu0 %v1253
  %1290 = vmatprep.subr.bf16.mxu0 0
  %1291 = vmatpush1.bf16.msra.mxu0 0
  %1292 = vmatprep.subr.bf16.mxu0 0
  %1293 = vmatpush1.bf16.msra.mxu0 0
  %1294 = vmatprep.subr.bf16.mxu0 0
  %1295 = vmatpush1.bf16.msra.mxu0 0
  %1296 = vmatprep.subr.bf16.mxu0 0
  %1297 = vmatpush1.bf16.msra.mxu0 0
  %1298 = vmatprep.subr.bf16.mxu0 0
  %1299 = vmatpush1.bf16.msra.mxu0 0
  %1300 = vmatprep.subr.bf16.mxu0 0
  %1301 = vmatpush1.bf16.msra.mxu0 0
  %1302 = vmatprep.subr.bf16.mxu0 0
  %1303 = vmatpush1.bf16.msra.mxu0 0
  %1304 = vmatprep.subr.bf16.mxu0 0
  %1305 = vmatpush1.bf16.msra.mxu0 0
  %1306 = vmatprep.subr.bf16.mxu0 0
  %1307 = vmatpush1.bf16.msra.mxu0 0
  %1308 = vmatprep.subr.bf16.mxu0 0
  %1309 = vmatpush1.bf16.msra.mxu0 0
  %1310 = vmatprep.subr.bf16.mxu0 0
  %1311 = vmatpush1.bf16.msra.mxu0 0
  %1312 = vmatprep.subr.bf16.mxu0 0
  %1313 = vmatpush1.bf16.msra.mxu0 0
  %1314 = vmatprep.mubr.bf16.mxu0 0
  %1315 = vmatmul.mubr.bf16.gmra.mrb[0].mxu0 %v1259
  %v1316 = vpop.f32.mrb[0].mxu0
  %v1317 = vadd.f32 0.0, %v1316
  %v1318 = vpop.f32.mrb[0].mxu0
  %v1319 = vpop.f32.mrb[0].mxu0
  %v1320 = vadd.f32 0.0, %v1319
  %v1321 = vpop.f32.mrb[0].mxu0
  %1322 = vmatprep.mubr.bf16.mxu0 0
  %1323 = vmatmul.mubr.bf16.gmra.mrb[0].mxu0 %v1262
  %v1324 = vpop.f32.mrb[0].mxu0
  %v1325 = vadd.f32 0.0, %v1324
  %v1326 = vpop.f32.mrb[0].mxu0
  %v1327 = vpop.f32.mrb[0].mxu0
  %v1328 = vadd.f32 0.0, %v1327
  %v1329 = vpop.f32.mrb[0].mxu0
  %1330 = vmatprep.mubr.bf16.mxu0 0
  %1331 = vmatmul.mubr.bf16.gmra.mrb[0].mxu0 %v1265
  %v1332 = vpop.f32.mrb[0].mxu0
  %v1333 = vadd.f32 0.0, %v1332
  %v1334 = vpop.f32.mrb[0].mxu0
  %v1335 = vpop.f32.mrb[0].mxu0
  %v1336 = vadd.f32 0.0, %v1335
  %v1337 = vpop.f32.mrb[0].mxu0
  %1338 = vmatprep.mubr.bf16.mxu0 0
  %1339 = vmatmul.mubr.bf16.gmra.mrb[0].mxu0 %v1268
  %v1340 = vpop.f32.mrb[0].mxu0
  %v1341 = vadd.f32 0.0, %v1340
  %v1342 = vpop.f32.mrb[0].mxu0
  %v1343 = vpop.f32.mrb[0].mxu0
  %v1344 = vadd.f32 0.0, %v1343
  %v1345 = vpop.f32.mrb[0].mxu0
  %1346 = vmatprep.mubr.bf16.mxu0 0
  %1347 = vmatmul.mubr.bf16.gmra.mrb[0].mxu0 %v1271
  %v1348 = vpop.f32.mrb[0].mxu0
  %v1349 = vadd.f32 0.0, %v1348
  %v1350 = vpop.f32.mrb[0].mxu0
  %v1351 = vpop.f32.mrb[0].mxu0
  %v1352 = vadd.f32 0.0, %v1351
  %v1353 = vpop.f32.mrb[0].mxu0
  %1354 = vmatprep.mubr.bf16.mxu0 0
  %1355 = vmatmul.mubr.bf16.gmra.mrb[0].mxu0 %v1274
  %v1356 = vpop.f32.mrb[0].mxu0
  %v1357 = vadd.f32 0.0, %v1356
  %v1358 = vpop.f32.mrb[0].mxu0
  %v1359 = vpop.f32.mrb[0].mxu0
  %v1360 = vadd.f32 0.0, %v1359
  %v1361 = vpop.f32.mrb[0].mxu0
  %1362 = vmatprep.mubr.bf16.mxu0 0
  %1363 = vmatmul.mubr.bf16.gmra.mrb[0].mxu0 %v1277
  %v1364 = vpop.f32.mrb[0].mxu0
  %v1365 = vadd.f32 0.0, %v1364
  %v1366 = vpop.f32.mrb[0].mxu0
  %v1367 = vpop.f32.mrb[0].mxu0
  %v1368 = vadd.f32 0.0, %v1367
  %v1369 = vpop.f32.mrb[0].mxu0
  %1370 = vmatprep.mubr.bf16.mxu0 0
  %1371 = vmatmul.mubr.bf16.gmra.mrb[0].mxu0 %v1280
  %v1372 = vpop.f32.mrb[0].mxu0
  %v1373 = vadd.f32 0.0, %v1372
  %v1374 = vpop.f32.mrb[0].mxu0
  %v1375 = vpop.f32.mrb[0].mxu0
  %v1376 = vadd.f32 0.0, %v1375
  %v1377 = vpop.f32.mrb[0].mxu0
  %1378 = vdwg.mxu0
  %v1379 = vadd.f32 %v1185, %v1317
  %v1380 = vadd.f32 %v1186, %v1320
  %v1381 = vadd.f32 %v1187, %v1325
  %v1382 = vadd.f32 %v1188, %v1328
  %v1383 = vadd.f32 %v1189, %v1333
  %v1384 = vadd.f32 %v1190, %v1336
  %v1385 = vadd.f32 %v1191, %v1341
  %v1386 = vadd.f32 %v1192, %v1344
  %v1387 = vadd.f32 %v1193, %v1349
  %v1388 = vadd.f32 %v1194, %v1352
  %v1389 = vadd.f32 %v1195, %v1357
  %v1390 = vadd.f32 %v1196, %v1360
  %v1391 = vadd.f32 %v1197, %v1365
  %v1392 = vadd.f32 %v1198, %v1368
  %v1393 = vadd.f32 %v1199, %v1373
  %v1394 = vadd.f32 %v1200, %v1376
  %v1395 = vld [vmem:[%s276 + $0x2] sm:$0xff]
  %v1396 = vld [vmem:[%s276 + $0x12] sm:$0xff]
  %v1397 = vld [vmem:[%s276 + $0x22] sm:$0xff]
  %v1398 = vld [vmem:[%s276 + $0x32] sm:$0xff]
  %v1399 = vld [vmem:[%s276 + $0x42] sm:$0xff]
  %v1400 = vld [vmem:[%s276 + $0x52] sm:$0xff]
  %v1401 = vld [vmem:[%s276 + $0x62] sm:$0xff]
  %v1402 = vld [vmem:[%s276 + $0x72] sm:$0xff]
  %v1403 = vld [vmem:[%s276 + $0xa2] sm:$0xff]
  %v1404 = vld [vmem:[%s276 + $0xb2] sm:$0xff]
  %v1405 = vld [vmem:[%s276 + $0xc2] sm:$0xff]
  %v1406 = vld [vmem:[%s276 + $0xd2] sm:$0xff]
  %v1407 = vld [vmem:[%s276 + $0xe2] sm:$0xff]
  %v1408 = vld [vmem:[%s276 + $0xf2] sm:$0xff]
  %v1409 = vld [vmem:[%s276 + $0x102] sm:$0xff]
  %v1410 = vld [vmem:[%s276 + $0x112] sm:$0xff]
  %v1411 = vpack.c.bf16 %v1396, %v1395
  %v1412 = vpack.c.bf16 %v1398, %v1397
  %v1413 = vpack.c.bf16 %v1400, %v1399
  %v1414 = vpack.c.bf16 %v1402, %v1401
  %v1415 = vpack.c.bf16 %v1404, %v1403
  %v1416 = vpack.c.bf16 %v1406, %v1405
  %v1417 = vpack.c.bf16 %v1408, %v1407
  %v1418 = vpack.c.bf16 %v1410, %v1409
  %s1419 = scalar_lea.vmem %s1, 160
  %v1420 = vld [vmem:[%s1419] sm:$0xf]
  %v1421 = vld [vmem:[%s1419 + $0x4] sm:$0xf]
  %v1422 = vld [vmem:[%s1419 + $0x8] sm:$0xf]
  %v1423 = vld [vmem:[%s1419 + $0xc] sm:$0xf]
  %v1424 = vld [vmem:[%s1419 + $0x10] sm:$0xf]
  %v1425 = vld [vmem:[%s1419 + $0x14] sm:$0xf]
  %v1426 = vld [vmem:[%s1419 + $0x18] sm:$0xf]
  %v1427 = vld [vmem:[%s1419 + $0x1c] sm:$0xf]
  %v1436 = vunpack.c.l.b16 %v1420
  %v1437 = vunpack.c.l.b16 %v1421
  %v1438 = vunpack.c.l.b16 %v1422
  %v1439 = vunpack.c.l.b16 %v1423
  %v1440 = vunpack.c.l.b16 %v1424
  %v1441 = vunpack.c.l.b16 %v1425
  %v1442 = vunpack.c.l.b16 %v1426
  %v1443 = vunpack.c.l.b16 %v1427
  %v1444 = vpack.c.b16 %v1437, %v1436
  %v1445 = vpack.c.b16 %v1439, %v1438
  %v1446 = vpack.c.b16 %v1441, %v1440
  %v1447 = vpack.c.b16 %v1443, %v1442
  %v1453 = vsel %vm27, %v1411, 0
  %v1456 = vsel %vm27, %v1412, 0
  %v1459 = vsel %vm27, %v1413, 0
  %v1462 = vsel %vm27, %v1414, 0
  %v1465 = vsel %vm27, %v1415, 0
  %v1468 = vsel %vm27, %v1416, 0
  %v1471 = vsel %vm27, %v1417, 0
  %v1474 = vsel %vm27, %v1418, 0
  %1476 = vmatprep.subr.bf16.mxu0 0
  %1477 = vmatpush1.bf16.msra.mxu0 %v1444
  %1478 = vmatprep.subr.bf16.mxu0 0
  %1479 = vmatpush1.bf16.msra.mxu0 %v1445
  %1480 = vmatprep.subr.bf16.mxu0 0
  %1481 = vmatpush1.bf16.msra.mxu0 %v1446
  %1482 = vmatprep.subr.bf16.mxu0 0
  %1483 = vmatpush1.bf16.msra.mxu0 %v1447
  %1484 = vmatprep.subr.bf16.mxu0 0
  %1485 = vmatpush1.bf16.msra.mxu0 0
  %1486 = vmatprep.subr.bf16.mxu0 0
  %1487 = vmatpush1.bf16.msra.mxu0 0
  %1488 = vmatprep.subr.bf16.mxu0 0
  %1489 = vmatpush1.bf16.msra.mxu0 0
  %1490 = vmatprep.subr.bf16.mxu0 0
  %1491 = vmatpush1.bf16.msra.mxu0 0
  %1492 = vmatprep.subr.bf16.mxu0 0
  %1493 = vmatpush1.bf16.msra.mxu0 0
  %1494 = vmatprep.subr.bf16.mxu0 0
  %1495 = vmatpush1.bf16.msra.mxu0 0
  %1496 = vmatprep.subr.bf16.mxu0 0
  %1497 = vmatpush1.bf16.msra.mxu0 0
  %1498 = vmatprep.subr.bf16.mxu0 0
  %1499 = vmatpush1.bf16.msra.mxu0 0
  %1500 = vmatprep.subr.bf16.mxu0 0
  %1501 = vmatpush1.bf16.msra.mxu0 0
  %1502 = vmatprep.subr.bf16.mxu0 0
  %1503 = vmatpush1.bf16.msra.mxu0 0
  %1504 = vmatprep.subr.bf16.mxu0 0
  %1505 = vmatpush1.bf16.msra.mxu0 0
  %1506 = vmatprep.subr.bf16.mxu0 0
  %1507 = vmatpush1.bf16.msra.mxu0 0
  %1508 = vmatprep.mubr.bf16.mxu0 0
  %1509 = vmatmul.mubr.bf16.gmra.mrb[0].mxu0 %v1453
  %v1510 = vpop.f32.mrb[0].mxu0
  %v1511 = vadd.f32 0.0, %v1510
  %v1512 = vpop.f32.mrb[0].mxu0
  %v1513 = vpop.f32.mrb[0].mxu0
  %v1514 = vadd.f32 0.0, %v1513
  %v1515 = vpop.f32.mrb[0].mxu0
  %1516 = vmatprep.mubr.bf16.mxu0 0
  %1517 = vmatmul.mubr.bf16.gmra.mrb[0].mxu0 %v1456
  %v1518 = vpop.f32.mrb[0].mxu0
  %v1519 = vadd.f32 0.0, %v1518
  %v1520 = vpop.f32.mrb[0].mxu0
  %v1521 = vpop.f32.mrb[0].mxu0
  %v1522 = vadd.f32 0.0, %v1521
  %v1523 = vpop.f32.mrb[0].mxu0
  %1524 = vmatprep.mubr.bf16.mxu0 0
  %1525 = vmatmul.mubr.bf16.gmra.mrb[0].mxu0 %v1459
  %v1526 = vpop.f32.mrb[0].mxu0
  %v1527 = vadd.f32 0.0, %v1526
  %v1528 = vpop.f32.mrb[0].mxu0
  %v1529 = vpop.f32.mrb[0].mxu0
  %v1530 = vadd.f32 0.0, %v1529
  %v1531 = vpop.f32.mrb[0].mxu0
  %1532 = vmatprep.mubr.bf16.mxu0 0
  %1533 = vmatmul.mubr.bf16.gmra.mrb[0].mxu0 %v1462
  %v1534 = vpop.f32.mrb[0].mxu0
  %v1535 = vadd.f32 0.0, %v1534
  %v1536 = vpop.f32.mrb[0].mxu0
  %v1537 = vpop.f32.mrb[0].mxu0
  %v1538 = vadd.f32 0.0, %v1537
  %v1539 = vpop.f32.mrb[0].mxu0
  %1540 = vmatprep.mubr.bf16.mxu0 0
  %1541 = vmatmul.mubr.bf16.gmra.mrb[0].mxu0 %v1465
  %v1542 = vpop.f32.mrb[0].mxu0
  %v1543 = vadd.f32 0.0, %v1542
  %v1544 = vpop.f32.mrb[0].mxu0
  %v1545 = vpop.f32.mrb[0].mxu0
  %v1546 = vadd.f32 0.0, %v1545
  %v1547 = vpop.f32.mrb[0].mxu0
  %1548 = vmatprep.mubr.bf16.mxu0 0
  %1549 = vmatmul.mubr.bf16.gmra.mrb[0].mxu0 %v1468
  %v1550 = vpop.f32.mrb[0].mxu0
  %v1551 = vadd.f32 0.0, %v1550
  %v1552 = vpop.f32.mrb[0].mxu0
  %v1553 = vpop.f32.mrb[0].mxu0
  %v1554 = vadd.f32 0.0, %v1553
  %v1555 = vpop.f32.mrb[0].mxu0
  %1556 = vmatprep.mubr.bf16.mxu0 0
  %1557 = vmatmul.mubr.bf16.gmra.mrb[0].mxu0 %v1471
  %v1558 = vpop.f32.mrb[0].mxu0
  %v1559 = vadd.f32 0.0, %v1558
  %v1560 = vpop.f32.mrb[0].mxu0
  %v1561 = vpop.f32.mrb[0].mxu0
  %v1562 = vadd.f32 0.0, %v1561
  %v1563 = vpop.f32.mrb[0].mxu0
  %1564 = vmatprep.mubr.bf16.mxu0 0
  %1565 = vmatmul.mubr.bf16.gmra.mrb[0].mxu0 %v1474
  %v1566 = vpop.f32.mrb[0].mxu0
  %v1567 = vadd.f32 0.0, %v1566
  %v1568 = vpop.f32.mrb[0].mxu0
  %v1569 = vpop.f32.mrb[0].mxu0
  %v1570 = vadd.f32 0.0, %v1569
  %v1571 = vpop.f32.mrb[0].mxu0
  %1572 = vdwg.mxu0
  %v1573 = vadd.f32 %v1379, %v1511
  %v1574 = vadd.f32 %v1380, %v1514
  %v1575 = vadd.f32 %v1381, %v1519
  %v1576 = vadd.f32 %v1382, %v1522
  %v1577 = vadd.f32 %v1383, %v1527
  %v1578 = vadd.f32 %v1384, %v1530
  %v1579 = vadd.f32 %v1385, %v1535
  %v1580 = vadd.f32 %v1386, %v1538
  %v1581 = vadd.f32 %v1387, %v1543
  %v1582 = vadd.f32 %v1388, %v1546
  %v1583 = vadd.f32 %v1389, %v1551
  %v1584 = vadd.f32 %v1390, %v1554
  %v1585 = vadd.f32 %v1391, %v1559
  %v1586 = vadd.f32 %v1392, %v1562
  %v1587 = vadd.f32 %v1393, %v1567
  %v1588 = vadd.f32 %v1394, %v1570
  %s1589 = scalar_lea.vmem [#allocation2], 32
  %v1590 = vld [vmem:[%s1589] sm:$0xff]
  %v1591 = vld [vmem:[%s1589 + $0x10] sm:$0xff]
  %v1592 = vld [vmem:[%s1589 + $0x20] sm:$0xff]
  %v1593 = vld [vmem:[%s1589 + $0x30] sm:$0xff]
  %v1594 = vld [vmem:[%s1589 + $0x40] sm:$0xff]
  %v1595 = vld [vmem:[%s1589 + $0x50] sm:$0xff]
  %v1596 = vld [vmem:[%s1589 + $0x60] sm:$0xff]
  %v1597 = vld [vmem:[%s1589 + $0x70] sm:$0xff]
  %v1598 = vld [vmem:[%s1589 + $0xa0] sm:$0xff]
  %v1599 = vld [vmem:[%s1589 + $0xb0] sm:$0xff]
  %v1600 = vld [vmem:[%s1589 + $0xc0] sm:$0xff]
  %v1601 = vld [vmem:[%s1589 + $0xd0] sm:$0xff]
  %v1602 = vld [vmem:[%s1589 + $0xe0] sm:$0xff]
  %v1603 = vld [vmem:[%s1589 + $0xf0] sm:$0xff]
  %v1604 = vld [vmem:[%s1589 + $0x100] sm:$0xff]
  %v1605 = vld [vmem:[%s1589 + $0x110] sm:$0xff]
  %v1606 = vpack.c.bf16 %v1591, %v1590
  %v1607 = vpack.c.bf16 %v1593, %v1592
  %v1608 = vpack.c.bf16 %v1595, %v1594
  %v1609 = vpack.c.bf16 %v1597, %v1596
  %v1610 = vpack.c.bf16 %v1599, %v1598
  %v1611 = vpack.c.bf16 %v1601, %v1600
  %v1612 = vpack.c.bf16 %v1603, %v1602
  %v1613 = vpack.c.bf16 %v1605, %v1604
  %s1614 = scalar_lea.vmem %s1, 192
  %v1615 = vld [vmem:[%s1614] sm:$0xf]
  %v1616 = vld [vmem:[%s1614 + $0x4] sm:$0xf]
  %v1617 = vld [vmem:[%s1614 + $0x8] sm:$0xf]
  %v1618 = vld [vmem:[%s1614 + $0xc] sm:$0xf]
  %v1619 = vld [vmem:[%s1614 + $0x10] sm:$0xf]
  %v1620 = vld [vmem:[%s1614 + $0x14] sm:$0xf]
  %v1621 = vld [vmem:[%s1614 + $0x18] sm:$0xf]
  %v1622 = vld [vmem:[%s1614 + $0x1c] sm:$0xf]
  %v1631 = vunpack.c.l.b16 %v1615
  %v1632 = vunpack.c.l.b16 %v1616
  %v1633 = vunpack.c.l.b16 %v1617
  %v1634 = vunpack.c.l.b16 %v1618
  %v1635 = vunpack.c.l.b16 %v1619
  %v1636 = vunpack.c.l.b16 %v1620
  %v1637 = vunpack.c.l.b16 %v1621
  %v1638 = vunpack.c.l.b16 %v1622
  %v1639 = vpack.c.b16 %v1632, %v1631
  %v1640 = vpack.c.b16 %v1634, %v1633
  %v1641 = vpack.c.b16 %v1636, %v1635
  %v1642 = vpack.c.b16 %v1638, %v1637
  %v1648 = vsel %vm27, %v1606, 0
  %v1651 = vsel %vm27, %v1607, 0
  %v1654 = vsel %vm27, %v1608, 0
  %v1657 = vsel %vm27, %v1609, 0
  %v1660 = vsel %vm27, %v1610, 0
  %v1663 = vsel %vm27, %v1611, 0
  %v1666 = vsel %vm27, %v1612, 0
  %v1669 = vsel %vm27, %v1613, 0
  %1671 = vmatprep.subr.bf16.mxu0 0
  %1672 = vmatpush1.bf16.msra.mxu0 %v1639
  %1673 = vmatprep.subr.bf16.mxu0 0
  %1674 = vmatpush1.bf16.msra.mxu0 %v1640
  %1675 = vmatprep.subr.bf16.mxu0 0
  %1676 = vmatpush1.bf16.msra.mxu0 %v1641
  %1677 = vmatprep.subr.bf16.mxu0 0
  %1678 = vmatpush1.bf16.msra.mxu0 %v1642
  %1679 = vmatprep.subr.bf16.mxu0 0
  %1680 = vmatpush1.bf16.msra.mxu0 0
  %1681 = vmatprep.subr.bf16.mxu0 0
  %1682 = vmatpush1.bf16.msra.mxu0 0
  %1683 = vmatprep.subr.bf16.mxu0 0
  %1684 = vmatpush1.bf16.msra.mxu0 0
  %1685 = vmatprep.subr.bf16.mxu0 0
  %1686 = vmatpush1.bf16.msra.mxu0 0
  %1687 = vmatprep.subr.bf16.mxu0 0
  %1688 = vmatpush1.bf16.msra.mxu0 0
  %1689 = vmatprep.subr.bf16.mxu0 0
  %1690 = vmatpush1.bf16.msra.mxu0 0
  %1691 = vmatprep.subr.bf16.mxu0 0
  %1692 = vmatpush1.bf16.msra.mxu0 0
  %1693 = vmatprep.subr.bf16.mxu0 0
  %1694 = vmatpush1.bf16.msra.mxu0 0
  %1695 = vmatprep.subr.bf16.mxu0 0
  %1696 = vmatpush1.bf16.msra.mxu0 0
  %1697 = vmatprep.subr.bf16.mxu0 0
  %1698 = vmatpush1.bf16.msra.mxu0 0
  %1699 = vmatprep.subr.bf16.mxu0 0
  %1700 = vmatpush1.bf16.msra.mxu0 0
  %1701 = vmatprep.subr.bf16.mxu0 0
  %1702 = vmatpush1.bf16.msra.mxu0 0
  %1703 = vmatprep.mubr.bf16.mxu0 0
  %1704 = vmatmul.mubr.bf16.gmra.mrb[0].mxu0 %v1648
  %v1705 = vpop.f32.mrb[0].mxu0
  %v1706 = vadd.f32 0.0, %v1705
  %v1707 = vpop.f32.mrb[0].mxu0
  %v1708 = vpop.f32.mrb[0].mxu0
  %v1709 = vadd.f32 0.0, %v1708
  %v1710 = vpop.f32.mrb[0].mxu0
  %1711 = vmatprep.mubr.bf16.mxu0 0
  %1712 = vmatmul.mubr.bf16.gmra.mrb[0].mxu0 %v1651
  %v1713 = vpop.f32.mrb[0].mxu0
  %v1714 = vadd.f32 0.0, %v1713
  %v1715 = vpop.f32.mrb[0].mxu0
  %v1716 = vpop.f32.mrb[0].mxu0
  %v1717 = vadd.f32 0.0, %v1716
  %v1718 = vpop.f32.mrb[0].mxu0
  %1719 = vmatprep.mubr.bf16.mxu0 0
  %1720 = vmatmul.mubr.bf16.gmra.mrb[0].mxu0 %v1654
  %v1721 = vpop.f32.mrb[0].mxu0
  %v1722 = vadd.f32 0.0, %v1721
  %v1723 = vpop.f32.mrb[0].mxu0
  %v1724 = vpop.f32.mrb[0].mxu0
  %v1725 = vadd.f32 0.0, %v1724
  %v1726 = vpop.f32.mrb[0].mxu0
  %1727 = vmatprep.mubr.bf16.mxu0 0
  %1728 = vmatmul.mubr.bf16.gmra.mrb[0].mxu0 %v1657
  %v1729 = vpop.f32.mrb[0].mxu0
  %v1730 = vadd.f32 0.0, %v1729
  %v1731 = vpop.f32.mrb[0].mxu0
  %v1732 = vpop.f32.mrb[0].mxu0
  %v1733 = vadd.f32 0.0, %v1732
  %v1734 = vpop.f32.mrb[0].mxu0
  %1735 = vmatprep.mubr.bf16.mxu0 0
  %1736 = vmatmul.mubr.bf16.gmra.mrb[0].mxu0 %v1660
  %v1737 = vpop.f32.mrb[0].mxu0
  %v1738 = vadd.f32 0.0, %v1737
  %v1739 = vpop.f32.mrb[0].mxu0
  %v1740 = vpop.f32.mrb[0].mxu0
  %v1741 = vadd.f32 0.0, %v1740
  %v1742 = vpop.f32.mrb[0].mxu0
  %1743 = vmatprep.mubr.bf16.mxu0 0
  %1744 = vmatmul.mubr.bf16.gmra.mrb[0].mxu0 %v1663
  %v1745 = vpop.f32.mrb[0].mxu0
  %v1746 = vadd.f32 0.0, %v1745
  %v1747 = vpop.f32.mrb[0].mxu0
  %v1748 = vpop.f32.mrb[0].mxu0
  %v1749 = vadd.f32 0.0, %v1748
  %v1750 = vpop.f32.mrb[0].mxu0
  %1751 = vmatprep.mubr.bf16.mxu0 0
  %1752 = vmatmul.mubr.bf16.gmra.mrb[0].mxu0 %v1666
  %v1753 = vpop.f32.mrb[0].mxu0
  %v1754 = vadd.f32 0.0, %v1753
  %v1755 = vpop.f32.mrb[0].mxu0
  %v1756 = vpop.f32.mrb[0].mxu0
  %v1757 = vadd.f32 0.0, %v1756
  %v1758 = vpop.f32.mrb[0].mxu0
  %1759 = vmatprep.mubr.bf16.mxu0 0
  %1760 = vmatmul.mubr.bf16.gmra.mrb[0].mxu0 %v1669
  %v1761 = vpop.f32.mrb[0].mxu0
  %v1762 = vadd.f32 0.0, %v1761
  %v1763 = vpop.f32.mrb[0].mxu0
  %v1764 = vpop.f32.mrb[0].mxu0
  %v1765 = vadd.f32 0.0, %v1764
  %v1766 = vpop.f32.mrb[0].mxu0
  %1767 = vdwg.mxu0
  %v1768 = vadd.f32 %v1573, %v1706
  %v1769 = vadd.f32 %v1574, %v1709
  %v1770 = vadd.f32 %v1575, %v1714
  %v1771 = vadd.f32 %v1576, %v1717
  %v1772 = vadd.f32 %v1577, %v1722
  %v1773 = vadd.f32 %v1578, %v1725
  %v1774 = vadd.f32 %v1579, %v1730
  %v1775 = vadd.f32 %v1580, %v1733
  %v1776 = vadd.f32 %v1581, %v1738
  %v1777 = vadd.f32 %v1582, %v1741
  %v1778 = vadd.f32 %v1583, %v1746
  %v1779 = vadd.f32 %v1584, %v1749
  %v1780 = vadd.f32 %v1585, %v1754
  %v1781 = vadd.f32 %v1586, %v1757
  %v1782 = vadd.f32 %v1587, %v1762
  %v1783 = vadd.f32 %v1588, %v1765
  %v1784 = vld [vmem:[%s1589 + $0x1] sm:$0xff]
  %v1785 = vld [vmem:[%s1589 + $0x11] sm:$0xff]
  %v1786 = vld [vmem:[%s1589 + $0x21] sm:$0xff]
  %v1787 = vld [vmem:[%s1589 + $0x31] sm:$0xff]
  %v1788 = vld [vmem:[%s1589 + $0x41] sm:$0xff]
  %v1789 = vld [vmem:[%s1589 + $0x51] sm:$0xff]
  %v1790 = vld [vmem:[%s1589 + $0x61] sm:$0xff]
  %v1791 = vld [vmem:[%s1589 + $0x71] sm:$0xff]
  %v1792 = vld [vmem:[%s1589 + $0xa1] sm:$0xff]
  %v1793 = vld [vmem:[%s1589 + $0xb1] sm:$0xff]
  %v1794 = vld [vmem:[%s1589 + $0xc1] sm:$0xff]
  %v1795 = vld [vmem:[%s1589 + $0xd1] sm:$0xff]
  %v1796 = vld [vmem:[%s1589 + $0xe1] sm:$0xff]
  %v1797 = vld [vmem:[%s1589 + $0xf1] sm:$0xff]
  %v1798 = vld [vmem:[%s1589 + $0x101] sm:$0xff]
  %v1799 = vld [vmem:[%s1589 + $0x111] sm:$0xff]
  %v1800 = vpack.c.bf16 %v1785, %v1784
  %v1801 = vpack.c.bf16 %v1787, %v1786
  %v1802 = vpack.c.bf16 %v1789, %v1788
  %v1803 = vpack.c.bf16 %v1791, %v1790
  %v1804 = vpack.c.bf16 %v1793, %v1792
  %v1805 = vpack.c.bf16 %v1795, %v1794
  %v1806 = vpack.c.bf16 %v1797, %v1796
  %v1807 = vpack.c.bf16 %v1799, %v1798
  %s1808 = scalar_lea.vmem %s1, 224
  %v1809 = vld [vmem:[%s1808] sm:$0xf]
  %v1810 = vld [vmem:[%s1808 + $0x4] sm:$0xf]
  %v1811 = vld [vmem:[%s1808 + $0x8] sm:$0xf]
  %v1812 = vld [vmem:[%s1808 + $0xc] sm:$0xf]
  %v1813 = vld [vmem:[%s1808 + $0x10] sm:$0xf]
  %v1814 = vld [vmem:[%s1808 + $0x14] sm:$0xf]
  %v1815 = vld [vmem:[%s1808 + $0x18] sm:$0xf]
  %v1816 = vld [vmem:[%s1808 + $0x1c] sm:$0xf]
  %v1825 = vunpack.c.l.b16 %v1809
  %v1826 = vunpack.c.l.b16 %v1810
  %v1827 = vunpack.c.l.b16 %v1811
  %v1828 = vunpack.c.l.b16 %v1812
  %v1829 = vunpack.c.l.b16 %v1813
  %v1830 = vunpack.c.l.b16 %v1814
  %v1831 = vunpack.c.l.b16 %v1815
  %v1832 = vunpack.c.l.b16 %v1816
  %v1833 = vpack.c.b16 %v1826, %v1825
  %v1834 = vpack.c.b16 %v1828, %v1827
  %v1835 = vpack.c.b16 %v1830, %v1829
  %v1836 = vpack.c.b16 %v1832, %v1831
  %v1842 = vsel %vm27, %v1800, 0
  %v1845 = vsel %vm27, %v1801, 0
  %v1848 = vsel %vm27, %v1802, 0
  %v1851 = vsel %vm27, %v1803, 0
  %v1854 = vsel %vm27, %v1804, 0
  %v1857 = vsel %vm27, %v1805, 0
  %v1860 = vsel %vm27, %v1806, 0
  %v1863 = vsel %vm27, %v1807, 0
  %1865 = vmatprep.subr.bf16.mxu0 0
  %1866 = vmatpush1.bf16.msra.mxu0 %v1833
  %1867 = vmatprep.subr.bf16.mxu0 0
  %1868 = vmatpush1.bf16.msra.mxu0 %v1834
  %1869 = vmatprep.subr.bf16.mxu0 0
  %1870 = vmatpush1.bf16.msra.mxu0 %v1835
  %1871 = vmatprep.subr.bf16.mxu0 0
  %1872 = vmatpush1.bf16.msra.mxu0 %v1836
  %1873 = vmatprep.subr.bf16.mxu0 0
  %1874 = vmatpush1.bf16.msra.mxu0 0
  %1875 = vmatprep.subr.bf16.mxu0 0
  %1876 = vmatpush1.bf16.msra.mxu0 0
  %1877 = vmatprep.subr.bf16.mxu0 0
  %1878 = vmatpush1.bf16.msra.mxu0 0
  %1879 = vmatprep.subr.bf16.mxu0 0
  %1880 = vmatpush1.bf16.msra.mxu0 0
  %1881 = vmatprep.subr.bf16.mxu0 0
  %1882 = vmatpush1.bf16.msra.mxu0 0
  %1883 = vmatprep.subr.bf16.mxu0 0
  %1884 = vmatpush1.bf16.msra.mxu0 0
  %1885 = vmatprep.subr.bf16.mxu0 0
  %1886 = vmatpush1.bf16.msra.mxu0 0
  %1887 = vmatprep.subr.bf16.mxu0 0
  %1888 = vmatpush1.bf16.msra.mxu0 0
  %1889 = vmatprep.subr.bf16.mxu0 0
  %1890 = vmatpush1.bf16.msra.mxu0 0
  %1891 = vmatprep.subr.bf16.mxu0 0
  %1892 = vmatpush1.bf16.msra.mxu0 0
  %1893 = vmatprep.subr.bf16.mxu0 0
  %1894 = vmatpush1.bf16.msra.mxu0 0
  %1895 = vmatprep.subr.bf16.mxu0 0
  %1896 = vmatpush1.bf16.msra.mxu0 0
  %1897 = vmatprep.mubr.bf16.mxu0 0
  %1898 = vmatmul.mubr.bf16.gmra.mrb[0].mxu0 %v1842
  %v1899 = vpop.f32.mrb[0].mxu0
  %v1900 = vadd.f32 0.0, %v1899
  %v1901 = vpop.f32.mrb[0].mxu0
  %v1902 = vpop.f32.mrb[0].mxu0
  %v1903 = vadd.f32 0.0, %v1902
  %v1904 = vpop.f32.mrb[0].mxu0
  %1905 = vmatprep.mubr.bf16.mxu0 0
  %1906 = vmatmul.mubr.bf16.gmra.mrb[0].mxu0 %v1845
  %v1907 = vpop.f32.mrb[0].mxu0
  %v1908 = vadd.f32 0.0, %v1907
  %v1909 = vpop.f32.mrb[0].mxu0
  %v1910 = vpop.f32.mrb[0].mxu0
  %v1911 = vadd.f32 0.0, %v1910
  %v1912 = vpop.f32.mrb[0].mxu0
  %1913 = vmatprep.mubr.bf16.mxu0 0
  %1914 = vmatmul.mubr.bf16.gmra.mrb[0].mxu0 %v1848
  %v1915 = vpop.f32.mrb[0].mxu0
  %v1916 = vadd.f32 0.0, %v1915
  %v1917 = vpop.f32.mrb[0].mxu0
  %v1918 = vpop.f32.mrb[0].mxu0
  %v1919 = vadd.f32 0.0, %v1918
  %v1920 = vpop.f32.mrb[0].mxu0
  %1921 = vmatprep.mubr.bf16.mxu0 0
  %1922 = vmatmul.mubr.bf16.gmra.mrb[0].mxu0 %v1851
  %v1923 = vpop.f32.mrb[0].mxu0
  %v1924 = vadd.f32 0.0, %v1923
  %v1925 = vpop.f32.mrb[0].mxu0
  %v1926 = vpop.f32.mrb[0].mxu0
  %v1927 = vadd.f32 0.0, %v1926
  %v1928 = vpop.f32.mrb[0].mxu0
  %1929 = vmatprep.mubr.bf16.mxu0 0
  %1930 = vmatmul.mubr.bf16.gmra.mrb[0].mxu0 %v1854
  %v1931 = vpop.f32.mrb[0].mxu0
  %v1932 = vadd.f32 0.0, %v1931
  %v1933 = vpop.f32.mrb[0].mxu0
  %v1934 = vpop.f32.mrb[0].mxu0
  %v1935 = vadd.f32 0.0, %v1934
  %v1936 = vpop.f32.mrb[0].mxu0
  %1937 = vmatprep.mubr.bf16.mxu0 0
  %1938 = vmatmul.mubr.bf16.gmra.mrb[0].mxu0 %v1857
  %v1939 = vpop.f32.mrb[0].mxu0
  %v1940 = vadd.f32 0.0, %v1939
  %v1941 = vpop.f32.mrb[0].mxu0
  %v1942 = vpop.f32.mrb[0].mxu0
  %v1943 = vadd.f32 0.0, %v1942
  %v1944 = vpop.f32.mrb[0].mxu0
  %1945 = vmatprep.mubr.bf16.mxu0 0
  %1946 = vmatmul.mubr.bf16.gmra.mrb[0].mxu0 %v1860
  %v1947 = vpop.f32.mrb[0].mxu0
  %v1948 = vadd.f32 0.0, %v1947
  %v1949 = vpop.f32.mrb[0].mxu0
  %v1950 = vpop.f32.mrb[0].mxu0
  %v1951 = vadd.f32 0.0, %v1950
  %v1952 = vpop.f32.mrb[0].mxu0
  %1953 = vmatprep.mubr.bf16.mxu0 0
  %1954 = vmatmul.mubr.bf16.gmra.mrb[0].mxu0 %v1863
  %v1955 = vpop.f32.mrb[0].mxu0
  %v1956 = vadd.f32 0.0, %v1955
  %v1957 = vpop.f32.mrb[0].mxu0
  %v1958 = vpop.f32.mrb[0].mxu0
  %v1959 = vadd.f32 0.0, %v1958
  %v1960 = vpop.f32.mrb[0].mxu0
  %1961 = vdwg.mxu0
  %v1962 = vadd.f32 %v1768, %v1900
  %v1963 = vadd.f32 %v1769, %v1903
  %v1964 = vadd.f32 %v1770, %v1908
  %v1965 = vadd.f32 %v1771, %v1911
  %v1966 = vadd.f32 %v1772, %v1916
  %v1967 = vadd.f32 %v1773, %v1919
  %v1968 = vadd.f32 %v1774, %v1924
  %v1969 = vadd.f32 %v1775, %v1927
  %v1970 = vadd.f32 %v1776, %v1932
  %v1971 = vadd.f32 %v1777, %v1935
  %v1972 = vadd.f32 %v1778, %v1940
  %v1973 = vadd.f32 %v1779, %v1943
  %v1974 = vadd.f32 %v1780, %v1948
  %v1975 = vadd.f32 %v1781, %v1951
  %v1976 = vadd.f32 %v1782, %v1956
  %v1977 = vadd.f32 %v1783, %v1959
  %v1978 = vld [vmem:[%s1589 + $0x2] sm:$0xff]
  %v1979 = vld [vmem:[%s1589 + $0x12] sm:$0xff]
  %v1980 = vld [vmem:[%s1589 + $0x22] sm:$0xff]
  %v1981 = vld [vmem:[%s1589 + $0x32] sm:$0xff]
  %v1982 = vld [vmem:[%s1589 + $0x42] sm:$0xff]
  %v1983 = vld [vmem:[%s1589 + $0x52] sm:$0xff]
  %v1984 = vld [vmem:[%s1589 + $0x62] sm:$0xff]
  %v1985 = vld [vmem:[%s1589 + $0x72] sm:$0xff]
  %v1986 = vld [vmem:[%s1589 + $0xa2] sm:$0xff]
  %v1987 = vld [vmem:[%s1589 + $0xb2] sm:$0xff]
  %v1988 = vld [vmem:[%s1589 + $0xc2] sm:$0xff]
  %v1989 = vld [vmem:[%s1589 + $0xd2] sm:$0xff]
  %v1990 = vld [vmem:[%s1589 + $0xe2] sm:$0xff]
  %v1991 = vld [vmem:[%s1589 + $0xf2] sm:$0xff]
  %v1992 = vld [vmem:[%s1589 + $0x102] sm:$0xff]
  %v1993 = vld [vmem:[%s1589 + $0x112] sm:$0xff]
  %v1994 = vpack.c.bf16 %v1979, %v1978
  %v1995 = vpack.c.bf16 %v1981, %v1980
  %v1996 = vpack.c.bf16 %v1983, %v1982
  %v1997 = vpack.c.bf16 %v1985, %v1984
  %v1998 = vpack.c.bf16 %v1987, %v1986
  %v1999 = vpack.c.bf16 %v1989, %v1988
  %v2000 = vpack.c.bf16 %v1991, %v1990
  %v2001 = vpack.c.bf16 %v1993, %v1992
  %s2002 = scalar_lea.vmem %s1, 256
  %v2003 = vld [vmem:[%s2002] sm:$0xf]
  %v2004 = vld [vmem:[%s2002 + $0x4] sm:$0xf]
  %v2005 = vld [vmem:[%s2002 + $0x8] sm:$0xf]
  %v2006 = vld [vmem:[%s2002 + $0xc] sm:$0xf]
  %v2007 = vld [vmem:[%s2002 + $0x10] sm:$0xf]
  %v2008 = vld [vmem:[%s2002 + $0x14] sm:$0xf]
  %v2009 = vld [vmem:[%s2002 + $0x18] sm:$0xf]
  %v2010 = vld [vmem:[%s2002 + $0x1c] sm:$0xf]
  %v2019 = vunpack.c.l.b16 %v2003
  %v2020 = vunpack.c.l.b16 %v2004
  %v2021 = vunpack.c.l.b16 %v2005
  %v2022 = vunpack.c.l.b16 %v2006
  %v2023 = vunpack.c.l.b16 %v2007
  %v2024 = vunpack.c.l.b16 %v2008
  %v2025 = vunpack.c.l.b16 %v2009
  %v2026 = vunpack.c.l.b16 %v2010
  %v2027 = vpack.c.b16 %v2020, %v2019
  %v2028 = vpack.c.b16 %v2022, %v2021
  %v2029 = vpack.c.b16 %v2024, %v2023
  %v2030 = vpack.c.b16 %v2026, %v2025
  %v2036 = vsel %vm27, %v1994, 0
  %v2039 = vsel %vm27, %v1995, 0
  %v2042 = vsel %vm27, %v1996, 0
  %v2045 = vsel %vm27, %v1997, 0
  %v2048 = vsel %vm27, %v1998, 0
  %v2051 = vsel %vm27, %v1999, 0
  %v2054 = vsel %vm27, %v2000, 0
  %v2057 = vsel %vm27, %v2001, 0
  %2059 = vmatprep.subr.bf16.mxu0 0
  %2060 = vmatpush1.bf16.msra.mxu0 %v2027
  %2061 = vmatprep.subr.bf16.mxu0 0
  %2062 = vmatpush1.bf16.msra.mxu0 %v2028
  %2063 = vmatprep.subr.bf16.mxu0 0
  %2064 = vmatpush1.bf16.msra.mxu0 %v2029
  %2065 = vmatprep.subr.bf16.mxu0 0
  %2066 = vmatpush1.bf16.msra.mxu0 %v2030
  %2067 = vmatprep.subr.bf16.mxu0 0
  %2068 = vmatpush1.bf16.msra.mxu0 0
  %2069 = vmatprep.subr.bf16.mxu0 0
  %2070 = vmatpush1.bf16.msra.mxu0 0
  %2071 = vmatprep.subr.bf16.mxu0 0
  %2072 = vmatpush1.bf16.msra.mxu0 0
  %2073 = vmatprep.subr.bf16.mxu0 0
  %2074 = vmatpush1.bf16.msra.mxu0 0
  %2075 = vmatprep.subr.bf16.mxu0 0
  %2076 = vmatpush1.bf16.msra.mxu0 0
  %2077 = vmatprep.subr.bf16.mxu0 0
  %2078 = vmatpush1.bf16.msra.mxu0 0
  %2079 = vmatprep.subr.bf16.mxu0 0
  %2080 = vmatpush1.bf16.msra.mxu0 0
  %2081 = vmatprep.subr.bf16.mxu0 0
  %2082 = vmatpush1.bf16.msra.mxu0 0
  %2083 = vmatprep.subr.bf16.mxu0 0
  %2084 = vmatpush1.bf16.msra.mxu0 0
  %2085 = vmatprep.subr.bf16.mxu0 0
  %2086 = vmatpush1.bf16.msra.mxu0 0
  %2087 = vmatprep.subr.bf16.mxu0 0
  %2088 = vmatpush1.bf16.msra.mxu0 0
  %2089 = vmatprep.subr.bf16.mxu0 0
  %2090 = vmatpush1.bf16.msra.mxu0 0
  %2091 = vmatprep.mubr.bf16.mxu0 0
  %2092 = vmatmul.mubr.bf16.gmra.mrb[0].mxu0 %v2036
  %v2093 = vpop.f32.mrb[0].mxu0
  %v2094 = vadd.f32 0.0, %v2093
  %v2095 = vpop.f32.mrb[0].mxu0
  %v2096 = vpop.f32.mrb[0].mxu0
  %v2097 = vadd.f32 0.0, %v2096
  %v2098 = vpop.f32.mrb[0].mxu0
  %2099 = vmatprep.mubr.bf16.mxu0 0
  %2100 = vmatmul.mubr.bf16.gmra.mrb[0].mxu0 %v2039
  %v2101 = vpop.f32.mrb[0].mxu0
  %v2102 = vadd.f32 0.0, %v2101
  %v2103 = vpop.f32.mrb[0].mxu0
  %v2104 = vpop.f32.mrb[0].mxu0
  %v2105 = vadd.f32 0.0, %v2104
  %v2106 = vpop.f32.mrb[0].mxu0
  %2107 = vmatprep.mubr.bf16.mxu0 0
  %2108 = vmatmul.mubr.bf16.gmra.mrb[0].mxu0 %v2042
  %v2109 = vpop.f32.mrb[0].mxu0
  %v2110 = vadd.f32 0.0, %v2109
  %v2111 = vpop.f32.mrb[0].mxu0
  %v2112 = vpop.f32.mrb[0].mxu0
  %v2113 = vadd.f32 0.0, %v2112
  %v2114 = vpop.f32.mrb[0].mxu0
  %2115 = vmatprep.mubr.bf16.mxu0 0
  %2116 = vmatmul.mubr.bf16.gmra.mrb[0].mxu0 %v2045
  %v2117 = vpop.f32.mrb[0].mxu0
  %v2118 = vadd.f32 0.0, %v2117
  %v2119 = vpop.f32.mrb[0].mxu0
  %v2120 = vpop.f32.mrb[0].mxu0
  %v2121 = vadd.f32 0.0, %v2120
  %v2122 = vpop.f32.mrb[0].mxu0
  %2123 = vmatprep.mubr.bf16.mxu0 0
  %2124 = vmatmul.mubr.bf16.gmra.mrb[0].mxu0 %v2048
  %v2125 = vpop.f32.mrb[0].mxu0
  %v2126 = vadd.f32 0.0, %v2125
  %v2127 = vpop.f32.mrb[0].mxu0
  %v2128 = vpop.f32.mrb[0].mxu0
  %v2129 = vadd.f32 0.0, %v2128
  %v2130 = vpop.f32.mrb[0].mxu0
  %2131 = vmatprep.mubr.bf16.mxu0 0
  %2132 = vmatmul.mubr.bf16.gmra.mrb[0].mxu0 %v2051
  %v2133 = vpop.f32.mrb[0].mxu0
  %v2134 = vadd.f32 0.0, %v2133
  %v2135 = vpop.f32.mrb[0].mxu0
  %v2136 = vpop.f32.mrb[0].mxu0
  %v2137 = vadd.f32 0.0, %v2136
  %v2138 = vpop.f32.mrb[0].mxu0
  %2139 = vmatprep.mubr.bf16.mxu0 0
  %2140 = vmatmul.mubr.bf16.gmra.mrb[0].mxu0 %v2054
  %v2141 = vpop.f32.mrb[0].mxu0
  %v2142 = vadd.f32 0.0, %v2141
  %v2143 = vpop.f32.mrb[0].mxu0
  %v2144 = vpop.f32.mrb[0].mxu0
  %v2145 = vadd.f32 0.0, %v2144
  %v2146 = vpop.f32.mrb[0].mxu0
  %2147 = vmatprep.mubr.bf16.mxu0 0
  %2148 = vmatmul.mubr.bf16.gmra.mrb[0].mxu0 %v2057
  %v2149 = vpop.f32.mrb[0].mxu0
  %v2150 = vadd.f32 0.0, %v2149
  %v2151 = vpop.f32.mrb[0].mxu0
  %v2152 = vpop.f32.mrb[0].mxu0
  %v2153 = vadd.f32 0.0, %v2152
  %v2154 = vpop.f32.mrb[0].mxu0
  %2155 = vdwg.mxu0
  %v2156 = vadd.f32 %v1962, %v2094
  %v2157 = vadd.f32 %v1963, %v2097
  %v2158 = vadd.f32 %v1964, %v2102
  %v2159 = vadd.f32 %v1965, %v2105
  %v2160 = vadd.f32 %v1966, %v2110
  %v2161 = vadd.f32 %v1967, %v2113
  %v2162 = vadd.f32 %v1968, %v2118
  %v2163 = vadd.f32 %v1969, %v2121
  %v2164 = vadd.f32 %v1970, %v2126
  %v2165 = vadd.f32 %v1971, %v2129
  %v2166 = vadd.f32 %v1972, %v2134
  %v2167 = vadd.f32 %v1973, %v2137
  %v2168 = vadd.f32 %v1974, %v2142
  %v2169 = vadd.f32 %v1975, %v2145
  %v2170 = vadd.f32 %v1976, %v2150
  %v2171 = vadd.f32 %v1977, %v2153
  %v2172 = vld [vmem:[%s2] sm:$0x1]
  %v2174 = vlaneseq
  %v2175 = vshrl.u32 %v2174, 7
  %v2176 = vsub.s32 0, %v2175
  %v2177 = vrot.slane %v2172, %v2176
  %v2179 = vadd.f32 %v2156, %v2177
  %v2180 = vadd.f32 %v2157, %v2177
  %v2181 = vadd.f32 %v2158, %v2177
  %v2182 = vadd.f32 %v2159, %v2177
  %v2183 = vadd.f32 %v2160, %v2177
  %v2184 = vadd.f32 %v2161, %v2177
  %v2185 = vadd.f32 %v2162, %v2177
  %v2186 = vadd.f32 %v2163, %v2177
  %v2187 = vadd.f32 %v2164, %v2177
  %v2188 = vadd.f32 %v2165, %v2177
  %v2189 = vadd.f32 %v2166, %v2177
  %v2190 = vadd.f32 %v2167, %v2177
  %v2191 = vadd.f32 %v2168, %v2177
  %v2192 = vadd.f32 %v2169, %v2177
  %v2193 = vadd.f32 %v2170, %v2177
  %v2194 = vadd.f32 %v2171, %v2177
  %v2195 = vsel %vm79, %v2179, 0.0
  %v2196 = vsel %vm79, %v2180, 0.0
  %v2197 = vadd.f32 %v2195, %v2196
  %v2198 = vsel %vm79, %v2181, 0.0
  %v2199 = vadd.f32 %v2197, %v2198
  %v2200 = vsel %vm79, %v2182, 0.0
  %v2201 = vadd.f32 %v2199, %v2200
  %v2202 = vsel %vm79, %v2183, 0.0
  %v2203 = vadd.f32 %v2201, %v2202
  %v2204 = vsel %vm79, %v2184, 0.0
  %v2205 = vadd.f32 %v2203, %v2204
  %v2206 = vsel %vm79, %v2185, 0.0
  %v2207 = vadd.f32 %v2205, %v2206
  %v2208 = vsel %vm79, %v2186, 0.0
  %v2209 = vadd.f32 %v2207, %v2208
  %v2210 = vrot.slane %v2209, 4
  %v2211 = vadd.f32 %v2209, %v2210
  %v2212 = vrot.slane %v2211, 2
  %v2213 = vadd.f32 %v2211, %v2212
  %v2214 = vrot.slane %v2213, 1
  %v2215 = vadd.f32 %v2213, %v2214
  %v2216 = vsel %vm79, %v2187, 0.0
  %v2217 = vsel %vm79, %v2188, 0.0
  %v2218 = vadd.f32 %v2216, %v2217
  %v2219 = vsel %vm79, %v2189, 0.0
  %v2220 = vadd.f32 %v2218, %v2219
  %v2221 = vsel %vm79, %v2190, 0.0
  %v2222 = vadd.f32 %v2220, %v2221
  %v2223 = vsel %vm79, %v2191, 0.0
  %v2224 = vadd.f32 %v2222, %v2223
  %v2225 = vsel %vm79, %v2192, 0.0
  %v2226 = vadd.f32 %v2224, %v2225
  %v2227 = vsel %vm79, %v2193, 0.0
  %v2228 = vadd.f32 %v2226, %v2227
  %v2229 = vsel %vm79, %v2194, 0.0
  %v2230 = vadd.f32 %v2228, %v2229
  %v2231 = vrot.slane %v2230, 4
  %v2232 = vadd.f32 %v2230, %v2231
  %v2233 = vrot.slane %v2232, 2
  %v2234 = vadd.f32 %v2232, %v2233
  %v2235 = vrot.slane %v2234, 1
  %v2236 = vadd.f32 %v2234, %v2235
  %v2237 = vmul.f32 %v2179, %v2179
  %v2238 = vmul.f32 %v2180, %v2180
  %v2239 = vmul.f32 %v2181, %v2181
  %v2240 = vmul.f32 %v2182, %v2182
  %v2241 = vmul.f32 %v2183, %v2183
  %v2242 = vmul.f32 %v2184, %v2184
  %v2243 = vmul.f32 %v2185, %v2185
  %v2244 = vmul.f32 %v2186, %v2186
  %v2245 = vmul.f32 %v2187, %v2187
  %v2246 = vmul.f32 %v2188, %v2188
  %v2247 = vmul.f32 %v2189, %v2189
  %v2248 = vmul.f32 %v2190, %v2190
  %v2249 = vmul.f32 %v2191, %v2191
  %v2250 = vmul.f32 %v2192, %v2192
  %v2251 = vmul.f32 %v2193, %v2193
  %v2252 = vmul.f32 %v2194, %v2194
  %v2253 = vsel %vm79, %v2237, 0.0
  %v2254 = vsel %vm79, %v2238, 0.0
  %v2255 = vadd.f32 %v2253, %v2254
  %v2256 = vsel %vm79, %v2239, 0.0
  %v2257 = vadd.f32 %v2255, %v2256
  %v2258 = vsel %vm79, %v2240, 0.0
  %v2259 = vadd.f32 %v2257, %v2258
  %v2260 = vsel %vm79, %v2241, 0.0
  %v2261 = vadd.f32 %v2259, %v2260
  %v2262 = vsel %vm79, %v2242, 0.0
  %v2263 = vadd.f32 %v2261, %v2262
  %v2264 = vsel %vm79, %v2243, 0.0
  %v2265 = vadd.f32 %v2263, %v2264
  %v2266 = vsel %vm79, %v2244, 0.0
  %v2267 = vadd.f32 %v2265, %v2266
  %v2268 = vrot.slane %v2267, 4
  %v2269 = vadd.f32 %v2267, %v2268
  %v2270 = vrot.slane %v2269, 2
  %v2271 = vadd.f32 %v2269, %v2270
  %v2272 = vrot.slane %v2271, 1
  %v2273 = vadd.f32 %v2271, %v2272
  %v2274 = vsel %vm79, %v2245, 0.0
  %v2275 = vsel %vm79, %v2246, 0.0
  %v2276 = vadd.f32 %v2274, %v2275
  %v2277 = vsel %vm79, %v2247, 0.0
  %v2278 = vadd.f32 %v2276, %v2277
  %v2279 = vsel %vm79, %v2248, 0.0
  %v2280 = vadd.f32 %v2278, %v2279
  %v2281 = vsel %vm79, %v2249, 0.0
  %v2282 = vadd.f32 %v2280, %v2281
  %v2283 = vsel %vm79, %v2250, 0.0
  %v2284 = vadd.f32 %v2282, %v2283
  %v2285 = vsel %vm79, %v2251, 0.0
  %v2286 = vadd.f32 %v2284, %v2285
  %v2287 = vsel %vm79, %v2252, 0.0
  %v2288 = vadd.f32 %v2286, %v2287
  %v2289 = vrot.slane %v2288, 4
  %v2290 = vadd.f32 %v2288, %v2289
  %v2291 = vrot.slane %v2290, 2
  %v2292 = vadd.f32 %v2290, %v2291
  %v2293 = vrot.slane %v2292, 1
  %v2294 = vadd.f32 %v2292, %v2293
  %2297 = vrot.lane.b32.xlu0 %v2215, 112
  %v2298 = vpop.permute.xlu0 %2297
  %2299 = vrot.lane.b32.xlu0 %v2236, 112
  %v2300 = vpop.permute.xlu0 %2299
  %v2303 = vadd.f32 %v2215, %v2298
  %v2304 = vadd.f32 %v2236, %v2300
  %2307 = vrot.lane.b32.xlu0 %v2273, 112
  %v2308 = vpop.permute.xlu0 %2307
  %2309 = vrot.lane.b32.xlu0 %v2294, 112
  %v2310 = vpop.permute.xlu0 %2309
  %v2313 = vadd.f32 %v2273, %v2308
  %v2314 = vadd.f32 %v2294, %v2310
  %v2315 = vrcp.pop 128.0
  %v2316 = vmul.f32 %v2303, %v2315
  %v2317 = vmul.f32 %v2304, %v2315
  %v2318 = vmul.f32 %v2303, %v2316
  %v2319 = vmul.f32 %v2304, %v2317
  %v2320 = vsub.f32 %v2313, %v2318
  %v2321 = vsub.f32 %v2314, %v2319
  %v2322 = vrcp.pop 127.0
  %v2323 = vmul.f32 %v2320, %v2322
  %v2324 = vmul.f32 %v2321, %v2322
  %v2325 = vmax.f32 %v2323, 0.0
  %v2326 = vmax.f32 %v2324, 0.0
  %v2327 = vrsqrt.pop %v2325
  %v2328 = vmul.f32 %v2325, %v2327
  %vm2329 = vcmp.eq.f32.partialorder %v2325, inf
  %v2330 = vsel %vm2329, %v2325, %v2328
  %vm2331 = vcmp.eq.f32.partialorder %v2325, 0.0
  %v2332 = vand.u32 %v2325, 2147483648
  %v2333 = vsel %vm2331, %v2332, %v2330
  %v2334 = vrsqrt.pop %v2326
  %v2335 = vmul.f32 %v2326, %v2334
  %vm2336 = vcmp.eq.f32.partialorder %v2326, inf
  %v2337 = vsel %vm2336, %v2326, %v2335
  %vm2338 = vcmp.eq.f32.partialorder %v2326, 0.0
  %v2339 = vand.u32 %v2326, 2147483648
  %v2340 = vsel %vm2338, %v2339, %v2337
  %v2341 = vadd.f32 %v2333, 1e-10
  %v2342 = vadd.f32 %v2340, 1e-10
  %v2343 = vrcp.pop %v2341
  %v2344 = vmul.f32 1.0, %v2343
  %v2345 = vrcp.pop %v2342
  %v2346 = vmul.f32 1.0, %v2345
  %v2349 = vrot.slane %v2317, 7
  %vm2350 = vcmask 1041409
  %v2351 = vsel %vm2350, %v2349, %v2316
  %2353 = vrot.lane.b32.xlu0 %v2351, 16
  %v2354 = vpop.permute.xlu0 %2353
  %vm2356 = vcmask 130048
  %v2357 = vsel %vm2356, %v2351, %v2354
  %v2360 = vunpack.c.l.s4 1966171168
  %v2361 = vunpack.c.0.s8 %v2360
  %v2362 = vlaneseq
  %v2363 = vshrl.u32 %v2362, 7
  %v2364 = vsub.s32 %v2361, %v2363
  %v2365 = vrot.slane %v2357, %v2364
  %v2366 = vcombine.high %v2365, %v2365
  %v2368 = vunpack.c.l.s4 1966171168
  %v2369 = vunpack.c.0.s8 %v2368
  %v2370 = vlaneseq
  %v2371 = vshrl.u32 %v2370, 7
  %v2372 = vsub.s32 %v2369, %v2371
  %v2373 = vrot.slane %v2365, %v2372
  %v2375 = vunpack.c.l.s4 1966171168
  %v2376 = vunpack.c.0.s8 %v2375
  %v2377 = vlaneseq
  %v2378 = vshrl.u32 %v2377, 7
  %v2379 = vsub.s32 %v2376, %v2378
  %v2380 = vrot.slane %v2366, %v2379
  %v2383 = vrot.slane %v2346, 7
  %v2384 = vsel %vm2350, %v2383, %v2344
  %2386 = vrot.lane.b32.xlu0 %v2384, 16
  %v2387 = vpop.permute.xlu0 %2386
  %v2389 = vsel %vm2356, %v2384, %v2387
  %v2392 = vunpack.c.l.s4 1966171168
  %v2393 = vunpack.c.0.s8 %v2392
  %v2394 = vlaneseq
  %v2395 = vshrl.u32 %v2394, 7
  %v2396 = vsub.s32 %v2393, %v2395
  %v2397 = vrot.slane %v2389, %v2396
  %v2398 = vcombine.high %v2397, %v2397
  %v2400 = vunpack.c.l.s4 1966171168
  %v2401 = vunpack.c.0.s8 %v2400
  %v2402 = vlaneseq
  %v2403 = vshrl.u32 %v2402, 7
  %v2404 = vsub.s32 %v2401, %v2403
  %v2405 = vrot.slane %v2397, %v2404
  %v2407 = vunpack.c.l.s4 1966171168
  %v2408 = vunpack.c.0.s8 %v2407
  %v2409 = vlaneseq
  %v2410 = vshrl.u32 %v2409, 7
  %v2411 = vsub.s32 %v2408, %v2410
  %v2412 = vrot.slane %v2398, %v2411
  %v2413 = vlaneseq
  %v2414 = vshrl.u32 %v2413, 7
  %v2415 = vsub.s32 0, %v2414
  %v2416 = vrot.slane %v2373, %v2415
  %v2417 = vlaneseq
  %v2418 = vshrl.u32 %v2417, 7
  %v2419 = vsub.s32 0, %v2418
  %v2420 = vrot.slane %v2380, %v2419
  %v2423 = vsub.f32 %v2179, %v2416
  %v2424 = vsub.f32 %v2180, %v2416
  %v2425 = vsub.f32 %v2181, %v2416
  %v2426 = vsub.f32 %v2182, %v2416
  %v2427 = vsub.f32 %v2183, %v2416
  %v2428 = vsub.f32 %v2184, %v2416
  %v2429 = vsub.f32 %v2185, %v2416
  %v2430 = vsub.f32 %v2186, %v2416
  %v2431 = vsub.f32 %v2187, %v2420
  %v2432 = vsub.f32 %v2188, %v2420
  %v2433 = vsub.f32 %v2189, %v2420
  %v2434 = vsub.f32 %v2190, %v2420
  %v2435 = vsub.f32 %v2191, %v2420
  %v2436 = vsub.f32 %v2192, %v2420
  %v2437 = vsub.f32 %v2193, %v2420
  %v2438 = vsub.f32 %v2194, %v2420
  %v2439 = vlaneseq
  %v2440 = vshrl.u32 %v2439, 7
  %v2441 = vsub.s32 0, %v2440
  %v2442 = vrot.slane %v2405, %v2441
  %v2443 = vlaneseq
  %v2444 = vshrl.u32 %v2443, 7
  %v2445 = vsub.s32 0, %v2444
  %v2446 = vrot.slane %v2412, %v2445
  %v2449 = vmul.f32 %v2423, %v2442
  %v2450 = vmul.f32 %v2424, %v2442
  %v2451 = vmul.f32 %v2425, %v2442
  %v2452 = vmul.f32 %v2426, %v2442
  %v2453 = vmul.f32 %v2427, %v2442
  %v2454 = vmul.f32 %v2428, %v2442
  %v2455 = vmul.f32 %v2429, %v2442
  %v2456 = vmul.f32 %v2430, %v2442
  %v2457 = vmul.f32 %v2431, %v2446
  %v2458 = vmul.f32 %v2432, %v2446
  %v2459 = vmul.f32 %v2433, %v2446
  %v2460 = vmul.f32 %v2434, %v2446
  %v2461 = vmul.f32 %v2435, %v2446
  %v2462 = vmul.f32 %v2436, %v2446
  %v2463 = vmul.f32 %v2437, %v2446
  %v2464 = vmul.f32 %v2438, %v2446
  %s2465 = scalar_lea.vmem [#allocation3], 16
  %2466 = vst.msk [vmem:[%s2465 + $0x1] sm:$0xff] %vm79, %v2449
  %2467 = vst.msk [vmem:[%s2465 + $0x11] sm:$0xff] %vm79, %v2450
  %2468 = vst.msk [vmem:[%s2465 + $0x21] sm:$0xff] %vm79, %v2451
  %2469 = vst.msk [vmem:[%s2465 + $0x31] sm:$0xff] %vm79, %v2452
  %2470 = vst.msk [vmem:[%s2465 + $0x41] sm:$0xff] %vm79, %v2453
  %2471 = vst.msk [vmem:[%s2465 + $0x51] sm:$0xff] %vm79, %v2454
  %2472 = vst.msk [vmem:[%s2465 + $0x61] sm:$0xff] %vm79, %v2455
  %2473 = vst.msk [vmem:[%s2465 + $0x71] sm:$0xff] %vm79, %v2456
  %2474 = vst.msk [vmem:[%s2465 + $0xa1] sm:$0xff] %vm79, %v2457
  %2475 = vst.msk [vmem:[%s2465 + $0xb1] sm:$0xff] %vm79, %v2458
  %2476 = vst.msk [vmem:[%s2465 + $0xc1] sm:$0xff] %vm79, %v2459
  %2477 = vst.msk [vmem:[%s2465 + $0xd1] sm:$0xff] %vm79, %v2460
  %2478 = vst.msk [vmem:[%s2465 + $0xe1] sm:$0xff] %vm79, %v2461
  %2479 = vst.msk [vmem:[%s2465 + $0xf1] sm:$0xff] %vm79, %v2462
  %2480 = vst.msk [vmem:[%s2465 + $0x101] sm:$0xff] %vm79, %v2463
  %2481 = vst.msk [vmem:[%s2465 + $0x111] sm:$0xff] %vm79, %v2464
  %v2482 = vld [vmem:[#allocation3] sm:$0xff]
  %v2483 = vld [vmem:[#allocation3 + $0x10] sm:$0xff]
  %v2484 = vld [vmem:[#allocation3 + $0x20] sm:$0xff]
  %v2485 = vld [vmem:[#allocation3 + $0x30] sm:$0xff]
  %v2486 = vld [vmem:[#allocation3 + $0x40] sm:$0xff]
  %v2487 = vld [vmem:[#allocation3 + $0x50] sm:$0xff]
  %v2488 = vld [vmem:[#allocation3 + $0x60] sm:$0xff]
  %v2489 = vld [vmem:[#allocation3 + $0x70] sm:$0xff]
  %v2490 = vld [vmem:[#allocation3 + $0xa0] sm:$0xff]
  %v2491 = vld [vmem:[#allocation3 + $0xb0] sm:$0xff]
  %v2492 = vld [vmem:[#allocation3 + $0xc0] sm:$0xff]
  %v2493 = vld [vmem:[#allocation3 + $0xd0] sm:$0xff]
  %v2494 = vld [vmem:[#allocation3 + $0xe0] sm:$0xff]
  %v2495 = vld [vmem:[#allocation3 + $0xf0] sm:$0xff]
  %v2496 = vld [vmem:[#allocation3 + $0x100] sm:$0xff]
  %v2497 = vld [vmem:[#allocation3 + $0x110] sm:$0xff]
  %v2498 = vpack.c.bf16 %v2483, %v2482
  %v2499 = vpack.c.bf16 %v2485, %v2484
  %v2500 = vpack.c.bf16 %v2487, %v2486
  %v2501 = vpack.c.bf16 %v2489, %v2488
  %v2502 = vpack.c.bf16 %v2491, %v2490
  %v2503 = vpack.c.bf16 %v2493, %v2492
  %v2504 = vpack.c.bf16 %v2495, %v2494
  %v2505 = vpack.c.bf16 %v2497, %v2496
  %v2506 = vld [vmem:[%s3] sm:$0xf]
  %v2507 = vld [vmem:[%s3 + $0x4] sm:$0xf]
  %v2508 = vld [vmem:[%s3 + $0x8] sm:$0xf]
  %v2509 = vld [vmem:[%s3 + $0xc] sm:$0xf]
  %v2510 = vld [vmem:[#allocation3 + $0x1] sm:$0xff]
  %v2511 = vld [vmem:[#allocation3 + $0x11] sm:$0xff]
  %v2512 = vld [vmem:[#allocation3 + $0x21] sm:$0xff]
  %v2513 = vld [vmem:[#allocation3 + $0x31] sm:$0xff]
  %v2514 = vld [vmem:[#allocation3 + $0x41] sm:$0xff]
  %v2515 = vld [vmem:[#allocation3 + $0x51] sm:$0xff]
  %v2516 = vld [vmem:[#allocation3 + $0x61] sm:$0xff]
  %v2517 = vld [vmem:[#allocation3 + $0x71] sm:$0xff]
  %v2518 = vld [vmem:[#allocation3 + $0xa1] sm:$0xff]
  %v2519 = vld [vmem:[#allocation3 + $0xb1] sm:$0xff]
  %v2520 = vld [vmem:[#allocation3 + $0xc1] sm:$0xff]
  %v2521 = vld [vmem:[#allocation3 + $0xd1] sm:$0xff]
  %v2522 = vld [vmem:[#allocation3 + $0xe1] sm:$0xff]
  %v2523 = vld [vmem:[#allocation3 + $0xf1] sm:$0xff]
  %v2524 = vld [vmem:[#allocation3 + $0x101] sm:$0xff]
  %v2525 = vld [vmem:[#allocation3 + $0x111] sm:$0xff]
  %v2526 = vpack.c.bf16 %v2511, %v2510
  %v2527 = vpack.c.bf16 %v2513, %v2512
  %v2528 = vpack.c.bf16 %v2515, %v2514
  %v2529 = vpack.c.bf16 %v2517, %v2516
  %v2530 = vpack.c.bf16 %v2519, %v2518
  %v2531 = vpack.c.bf16 %v2521, %v2520
  %v2532 = vpack.c.bf16 %v2523, %v2522
  %v2533 = vpack.c.bf16 %v2525, %v2524
  %s2534 = scalar_lea.vmem %s3, 16
  %v2535 = vld [vmem:[%s2534] sm:$0xf]
  %v2536 = vld [vmem:[%s2534 + $0x4] sm:$0xf]
  %v2537 = vld [vmem:[%s2534 + $0x8] sm:$0xf]
  %v2538 = vld [vmem:[%s2534 + $0xc] sm:$0xf]
  %v2543 = vunpack.c.l.b16 %v2535
  %v2544 = vunpack.c.l.b16 %v2536
  %v2545 = vunpack.c.l.b16 %v2537
  %v2546 = vunpack.c.l.b16 %v2538
  %v2547 = vpack.c.b16 %v2544, %v2543
  %v2548 = vpack.c.b16 %v2546, %v2545
  %v2552 = vsel %vm79, %v2526, 0
  %v2555 = vsel %vm79, %v2527, 0
  %v2558 = vsel %vm79, %v2528, 0
  %v2561 = vsel %vm79, %v2529, 0
  %v2564 = vsel %vm79, %v2530, 0
  %v2567 = vsel %vm79, %v2531, 0
  %v2570 = vsel %vm79, %v2532, 0
  %v2573 = vsel %vm79, %v2533, 0
  %2575 = vmatprep.subr.bf16.mxu0 0
  %2576 = vmatpush1.bf16.msra.mxu0 %v2547
  %2577 = vmatprep.subr.bf16.mxu0 0
  %2578 = vmatpush1.bf16.msra.mxu0 %v2548
  %2579 = vmatprep.subr.bf16.mxu0 0
  %2580 = vmatpush1.bf16.msra.mxu0 0
  %2581 = vmatprep.subr.bf16.mxu0 0
  %2582 = vmatpush1.bf16.msra.mxu0 0
  %2583 = vmatprep.subr.bf16.mxu0 0
  %2584 = vmatpush1.bf16.msra.mxu0 0
  %2585 = vmatprep.subr.bf16.mxu0 0
  %2586 = vmatpush1.bf16.msra.mxu0 0
  %2587 = vmatprep.subr.bf16.mxu0 0
  %2588 = vmatpush1.bf16.msra.mxu0 0
  %2589 = vmatprep.subr.bf16.mxu0 0
  %2590 = vmatpush1.bf16.msra.mxu0 0
  %2591 = vmatprep.subr.bf16.mxu0 0
  %2592 = vmatpush1.bf16.msra.mxu0 0
  %2593 = vmatprep.subr.bf16.mxu0 0
  %2594 = vmatpush1.bf16.msra.mxu0 0
  %2595 = vmatprep.subr.bf16.mxu0 0
  %2596 = vmatpush1.bf16.msra.mxu0 0
  %2597 = vmatprep.subr.bf16.mxu0 0
  %2598 = vmatpush1.bf16.msra.mxu0 0
  %2599 = vmatprep.subr.bf16.mxu0 0
  %2600 = vmatpush1.bf16.msra.mxu0 0
  %2601 = vmatprep.subr.bf16.mxu0 0
  %2602 = vmatpush1.bf16.msra.mxu0 0
  %2603 = vmatprep.subr.bf16.mxu0 0
  %2604 = vmatpush1.bf16.msra.mxu0 0
  %2605 = vmatprep.subr.bf16.mxu0 0
  %2606 = vmatpush1.bf16.msra.mxu0 0
  %2607 = vmatprep.mubr.bf16.mxu0 0
  %2608 = vmatmul.mubr.bf16.gmra.mrb[0].mxu0 %v2552
  %v2609 = vpop.f32.mrb[0].mxu0
  %v2610 = vadd.f32 0.0, %v2609
  %v2611 = vpop.f32.mrb[0].mxu0
  %v2612 = vpop.f32.mrb[0].mxu0
  %v2613 = vadd.f32 0.0, %v2612
  %v2614 = vpop.f32.mrb[0].mxu0
  %2615 = vmatprep.mubr.bf16.mxu0 0
  %2616 = vmatmul.mubr.bf16.gmra.mrb[0].mxu0 %v2555
  %v2617 = vpop.f32.mrb[0].mxu0
  %v2618 = vadd.f32 0.0, %v2617
  %v2619 = vpop.f32.mrb[0].mxu0
  %v2620 = vpop.f32.mrb[0].mxu0
  %v2621 = vadd.f32 0.0, %v2620
  %v2622 = vpop.f32.mrb[0].mxu0
  %2623 = vmatprep.mubr.bf16.mxu0 0
  %2624 = vmatmul.mubr.bf16.gmra.mrb[0].mxu0 %v2558
  %v2625 = vpop.f32.mrb[0].mxu0
  %v2626 = vadd.f32 0.0, %v2625
  %v2627 = vpop.f32.mrb[0].mxu0
  %v2628 = vpop.f32.mrb[0].mxu0
  %v2629 = vadd.f32 0.0, %v2628
  %v2630 = vpop.f32.mrb[0].mxu0
  %2631 = vmatprep.mubr.bf16.mxu0 0
  %2632 = vmatmul.mubr.bf16.gmra.mrb[0].mxu0 %v2561
  %v2633 = vpop.f32.mrb[0].mxu0
  %v2634 = vadd.f32 0.0, %v2633
  %v2635 = vpop.f32.mrb[0].mxu0
  %v2636 = vpop.f32.mrb[0].mxu0
  %v2637 = vadd.f32 0.0, %v2636
  %v2638 = vpop.f32.mrb[0].mxu0
  %2639 = vmatprep.mubr.bf16.mxu0 0
  %2640 = vmatmul.mubr.bf16.gmra.mrb[0].mxu0 %v2564
  %v2641 = vpop.f32.mrb[0].mxu0
  %v2642 = vadd.f32 0.0, %v2641
  %v2643 = vpop.f32.mrb[0].mxu0
  %v2644 = vpop.f32.mrb[0].mxu0
  %v2645 = vadd.f32 0.0, %v2644
  %v2646 = vpop.f32.mrb[0].mxu0
  %2647 = vmatprep.mubr.bf16.mxu0 0
  %2648 = vmatmul.mubr.bf16.gmra.mrb[0].mxu0 %v2567
  %v2649 = vpop.f32.mrb[0].mxu0
  %v2650 = vadd.f32 0.0, %v2649
  %v2651 = vpop.f32.mrb[0].mxu0
  %v2652 = vpop.f32.mrb[0].mxu0
  %v2653 = vadd.f32 0.0, %v2652
  %v2654 = vpop.f32.mrb[0].mxu0
  %2655 = vmatprep.mubr.bf16.mxu0 0
  %2656 = vmatmul.mubr.bf16.gmra.mrb[0].mxu0 %v2570
  %v2657 = vpop.f32.mrb[0].mxu0
  %v2658 = vadd.f32 0.0, %v2657
  %v2659 = vpop.f32.mrb[0].mxu0
  %v2660 = vpop.f32.mrb[0].mxu0
  %v2661 = vadd.f32 0.0, %v2660
  %v2662 = vpop.f32.mrb[0].mxu0
  %2663 = vmatprep.mubr.bf16.mxu0 0
  %2664 = vmatmul.mubr.bf16.gmra.mrb[0].mxu0 %v2573
  %v2665 = vpop.f32.mrb[0].mxu0
  %v2666 = vadd.f32 0.0, %v2665
  %v2667 = vpop.f32.mrb[0].mxu0
  %v2668 = vpop.f32.mrb[0].mxu0
  %v2669 = vadd.f32 0.0, %v2668
  %v2670 = vpop.f32.mrb[0].mxu0
  %2671 = vdwg.mxu0
  %v2676 = vunpack.c.l.b16 %v2506
  %v2677 = vunpack.c.l.b16 %v2507
  %v2678 = vunpack.c.l.b16 %v2508
  %v2679 = vunpack.c.l.b16 %v2509
  %v2680 = vpack.c.b16 %v2677, %v2676
  %v2681 = vpack.c.b16 %v2679, %v2678
  %v2685 = vsel %vm79, %v2498, 0
  %v2688 = vsel %vm79, %v2499, 0
  %v2691 = vsel %vm79, %v2500, 0
  %v2694 = vsel %vm79, %v2501, 0
  %v2697 = vsel %vm79, %v2502, 0
  %v2700 = vsel %vm79, %v2503, 0
  %v2703 = vsel %vm79, %v2504, 0
  %v2706 = vsel %vm79, %v2505, 0
  %2708 = vmatprep.subr.bf16.mxu0 0
  %2709 = vmatpush1.bf16.msra.mxu0 %v2680
  %2710 = vmatprep.subr.bf16.mxu0 0
  %2711 = vmatpush1.bf16.msra.mxu0 %v2681
  %2712 = vmatprep.subr.bf16.mxu0 0
  %2713 = vmatpush1.bf16.msra.mxu0 0
  %2714 = vmatprep.subr.bf16.mxu0 0
  %2715 = vmatpush1.bf16.msra.mxu0 0
  %2716 = vmatprep.subr.bf16.mxu0 0
  %2717 = vmatpush1.bf16.msra.mxu0 0
  %2718 = vmatprep.subr.bf16.mxu0 0
  %2719 = vmatpush1.bf16.msra.mxu0 0
  %2720 = vmatprep.subr.bf16.mxu0 0
  %2721 = vmatpush1.bf16.msra.mxu0 0
  %2722 = vmatprep.subr.bf16.mxu0 0
  %2723 = vmatpush1.bf16.msra.mxu0 0
  %2724 = vmatprep.subr.bf16.mxu0 0
  %2725 = vmatpush1.bf16.msra.mxu0 0
  %2726 = vmatprep.subr.bf16.mxu0 0
  %2727 = vmatpush1.bf16.msra.mxu0 0
  %2728 = vmatprep.subr.bf16.mxu0 0
  %2729 = vmatpush1.bf16.msra.mxu0 0
  %2730 = vmatprep.subr.bf16.mxu0 0
  %2731 = vmatpush1.bf16.msra.mxu0 0
  %2732 = vmatprep.subr.bf16.mxu0 0
  %2733 = vmatpush1.bf16.msra.mxu0 0
  %2734 = vmatprep.subr.bf16.mxu0 0
  %2735 = vmatpush1.bf16.msra.mxu0 0
  %2736 = vmatprep.subr.bf16.mxu0 0
  %2737 = vmatpush1.bf16.msra.mxu0 0
  %2738 = vmatprep.subr.bf16.mxu0 0
  %2739 = vmatpush1.bf16.msra.mxu0 0
  %2740 = vmatprep.mubr.bf16.mxu0 0
  %2741 = vmatmul.mubr.bf16.gmra.mrb[0].mxu0 %v2685
  %v2742 = vpop.f32.mrb[0].mxu0
  %v2743 = vadd.f32 %v2610, %v2742
  %v2744 = vpop.f32.mrb[0].mxu0
  %v2745 = vpop.f32.mrb[0].mxu0
  %v2746 = vadd.f32 %v2613, %v2745
  %v2747 = vpop.f32.mrb[0].mxu0
  %2748 = vmatprep.mubr.bf16.mxu0 0
  %2749 = vmatmul.mubr.bf16.gmra.mrb[0].mxu0 %v2688
  %v2750 = vpop.f32.mrb[0].mxu0
  %v2751 = vadd.f32 %v2618, %v2750
  %v2752 = vpop.f32.mrb[0].mxu0
  %v2753 = vpop.f32.mrb[0].mxu0
  %v2754 = vadd.f32 %v2621, %v2753
  %v2755 = vpop.f32.mrb[0].mxu0
  %2756 = vmatprep.mubr.bf16.mxu0 0
  %2757 = vmatmul.mubr.bf16.gmra.mrb[0].mxu0 %v2691
  %v2758 = vpop.f32.mrb[0].mxu0
  %v2759 = vadd.f32 %v2626, %v2758
  %v2760 = vpop.f32.mrb[0].mxu0
  %v2761 = vpop.f32.mrb[0].mxu0
  %v2762 = vadd.f32 %v2629, %v2761
  %v2763 = vpop.f32.mrb[0].mxu0
  %2764 = vmatprep.mubr.bf16.mxu0 0
  %2765 = vmatmul.mubr.bf16.gmra.mrb[0].mxu0 %v2694
  %v2766 = vpop.f32.mrb[0].mxu0
  %v2767 = vadd.f32 %v2634, %v2766
  %v2768 = vpop.f32.mrb[0].mxu0
  %v2769 = vpop.f32.mrb[0].mxu0
  %v2770 = vadd.f32 %v2637, %v2769
  %v2771 = vpop.f32.mrb[0].mxu0
  %2772 = vmatprep.mubr.bf16.mxu0 0
  %2773 = vmatmul.mubr.bf16.gmra.mrb[0].mxu0 %v2697
  %v2774 = vpop.f32.mrb[0].mxu0
  %v2775 = vadd.f32 %v2642, %v2774
  %v2776 = vpop.f32.mrb[0].mxu0
  %v2777 = vpop.f32.mrb[0].mxu0
  %v2778 = vadd.f32 %v2645, %v2777
  %v2779 = vpop.f32.mrb[0].mxu0
  %2780 = vmatprep.mubr.bf16.mxu0 0
  %2781 = vmatmul.mubr.bf16.gmra.mrb[0].mxu0 %v2700
  %v2782 = vpop.f32.mrb[0].mxu0
  %v2783 = vadd.f32 %v2650, %v2782
  %v2784 = vpop.f32.mrb[0].mxu0
  %v2785 = vpop.f32.mrb[0].mxu0
  %v2786 = vadd.f32 %v2653, %v2785
  %v2787 = vpop.f32.mrb[0].mxu0
  %2788 = vmatprep.mubr.bf16.mxu0 0
  %2789 = vmatmul.mubr.bf16.gmra.mrb[0].mxu0 %v2703
  %v2790 = vpop.f32.mrb[0].mxu0
  %v2791 = vadd.f32 %v2658, %v2790
  %v2792 = vpop.f32.mrb[0].mxu0
  %v2793 = vpop.f32.mrb[0].mxu0
  %v2794 = vadd.f32 %v2661, %v2793
  %v2795 = vpop.f32.mrb[0].mxu0
  %2796 = vmatprep.mubr.bf16.mxu0 0
  %2797 = vmatmul.mubr.bf16.gmra.mrb[0].mxu0 %v2706
  %v2798 = vpop.f32.mrb[0].mxu0
  %v2799 = vadd.f32 %v2666, %v2798
  %v2800 = vpop.f32.mrb[0].mxu0
  %v2801 = vpop.f32.mrb[0].mxu0
  %v2802 = vadd.f32 %v2669, %v2801
  %v2803 = vpop.f32.mrb[0].mxu0
  %2804 = vdwg.mxu0
  %v2805 = vld [vmem:[#allocation3 + $0x2] sm:$0xff]
  %v2806 = vld [vmem:[#allocation3 + $0x12] sm:$0xff]
  %v2807 = vld [vmem:[#allocation3 + $0x22] sm:$0xff]
  %v2808 = vld [vmem:[#allocation3 + $0x32] sm:$0xff]
  %v2809 = vld [vmem:[#allocation3 + $0x42] sm:$0xff]
  %v2810 = vld [vmem:[#allocation3 + $0x52] sm:$0xff]
  %v2811 = vld [vmem:[#allocation3 + $0x62] sm:$0xff]
  %v2812 = vld [vmem:[#allocation3 + $0x72] sm:$0xff]
  %v2813 = vld [vmem:[#allocation3 + $0xa2] sm:$0xff]
  %v2814 = vld [vmem:[#allocation3 + $0xb2] sm:$0xff]
  %v2815 = vld [vmem:[#allocation3 + $0xc2] sm:$0xff]
  %v2816 = vld [vmem:[#allocation3 + $0xd2] sm:$0xff]
  %v2817 = vld [vmem:[#allocation3 + $0xe2] sm:$0xff]
  %v2818 = vld [vmem:[#allocation3 + $0xf2] sm:$0xff]
  %v2819 = vld [vmem:[#allocation3 + $0x102] sm:$0xff]
  %v2820 = vld [vmem:[#allocation3 + $0x112] sm:$0xff]
  %v2821 = vpack.c.bf16 %v2806, %v2805
  %v2822 = vpack.c.bf16 %v2808, %v2807
  %v2823 = vpack.c.bf16 %v2810, %v2809
  %v2824 = vpack.c.bf16 %v2812, %v2811
  %v2825 = vpack.c.bf16 %v2814, %v2813
  %v2826 = vpack.c.bf16 %v2816, %v2815
  %v2827 = vpack.c.bf16 %v2818, %v2817
  %v2828 = vpack.c.bf16 %v2820, %v2819
  %s2829 = scalar_lea.vmem %s3, 32
  %v2830 = vld [vmem:[%s2829] sm:$0xf]
  %v2831 = vld [vmem:[%s2829 + $0x4] sm:$0xf]
  %v2832 = vld [vmem:[%s2829 + $0x8] sm:$0xf]
  %v2833 = vld [vmem:[%s2829 + $0xc] sm:$0xf]
  %v2838 = vunpack.c.l.b16 %v2830
  %v2839 = vunpack.c.l.b16 %v2831
  %v2840 = vunpack.c.l.b16 %v2832
  %v2841 = vunpack.c.l.b16 %v2833
  %v2842 = vpack.c.b16 %v2839, %v2838
  %v2843 = vpack.c.b16 %v2841, %v2840
  %v2847 = vsel %vm79, %v2821, 0
  %v2850 = vsel %vm79, %v2822, 0
  %v2853 = vsel %vm79, %v2823, 0
  %v2856 = vsel %vm79, %v2824, 0
  %v2859 = vsel %vm79, %v2825, 0
  %v2862 = vsel %vm79, %v2826, 0
  %v2865 = vsel %vm79, %v2827, 0
  %v2868 = vsel %vm79, %v2828, 0
  %2870 = vmatprep.subr.bf16.mxu0 0
  %2871 = vmatpush1.bf16.msra.mxu0 %v2842
  %2872 = vmatprep.subr.bf16.mxu0 0
  %2873 = vmatpush1.bf16.msra.mxu0 %v2843
  %2874 = vmatprep.subr.bf16.mxu0 0
  %2875 = vmatpush1.bf16.msra.mxu0 0
  %2876 = vmatprep.subr.bf16.mxu0 0
  %2877 = vmatpush1.bf16.msra.mxu0 0
  %2878 = vmatprep.subr.bf16.mxu0 0
  %2879 = vmatpush1.bf16.msra.mxu0 0
  %2880 = vmatprep.subr.bf16.mxu0 0
  %2881 = vmatpush1.bf16.msra.mxu0 0
  %2882 = vmatprep.subr.bf16.mxu0 0
  %2883 = vmatpush1.bf16.msra.mxu0 0
  %2884 = vmatprep.subr.bf16.mxu0 0
  %2885 = vmatpush1.bf16.msra.mxu0 0
  %2886 = vmatprep.subr.bf16.mxu0 0
  %2887 = vmatpush1.bf16.msra.mxu0 0
  %2888 = vmatprep.subr.bf16.mxu0 0
  %2889 = vmatpush1.bf16.msra.mxu0 0
  %2890 = vmatprep.subr.bf16.mxu0 0
  %2891 = vmatpush1.bf16.msra.mxu0 0
  %2892 = vmatprep.subr.bf16.mxu0 0
  %2893 = vmatpush1.bf16.msra.mxu0 0
  %2894 = vmatprep.subr.bf16.mxu0 0
  %2895 = vmatpush1.bf16.msra.mxu0 0
  %2896 = vmatprep.subr.bf16.mxu0 0
  %2897 = vmatpush1.bf16.msra.mxu0 0
  %2898 = vmatprep.subr.bf16.mxu0 0
  %2899 = vmatpush1.bf16.msra.mxu0 0
  %2900 = vmatprep.subr.bf16.mxu0 0
  %2901 = vmatpush1.bf16.msra.mxu0 0
  %2902 = vmatprep.mubr.bf16.mxu0 0
  %2903 = vmatmul.mubr.bf16.gmra.mrb[0].mxu0 %v2847
  %v2904 = vpop.f32.mrb[0].mxu0
  %v2905 = vadd.f32 0.0, %v2904
  %v2906 = vpop.f32.mrb[0].mxu0
  %v2907 = vpop.f32.mrb[0].mxu0
  %v2908 = vadd.f32 0.0, %v2907
  %v2909 = vpop.f32.mrb[0].mxu0
  %2910 = vmatprep.mubr.bf16.mxu0 0
  %2911 = vmatmul.mubr.bf16.gmra.mrb[0].mxu0 %v2850
  %v2912 = vpop.f32.mrb[0].mxu0
  %v2913 = vadd.f32 0.0, %v2912
  %v2914 = vpop.f32.mrb[0].mxu0
  %v2915 = vpop.f32.mrb[0].mxu0
  %v2916 = vadd.f32 0.0, %v2915
  %v2917 = vpop.f32.mrb[0].mxu0
  %2918 = vmatprep.mubr.bf16.mxu0 0
  %2919 = vmatmul.mubr.bf16.gmra.mrb[0].mxu0 %v2853
  %v2920 = vpop.f32.mrb[0].mxu0
  %v2921 = vadd.f32 0.0, %v2920
  %v2922 = vpop.f32.mrb[0].mxu0
  %v2923 = vpop.f32.mrb[0].mxu0
  %v2924 = vadd.f32 0.0, %v2923
  %v2925 = vpop.f32.mrb[0].mxu0
  %2926 = vmatprep.mubr.bf16.mxu0 0
  %2927 = vmatmul.mubr.bf16.gmra.mrb[0].mxu0 %v2856
  %v2928 = vpop.f32.mrb[0].mxu0
  %v2929 = vadd.f32 0.0, %v2928
  %v2930 = vpop.f32.mrb[0].mxu0
  %v2931 = vpop.f32.mrb[0].mxu0
  %v2932 = vadd.f32 0.0, %v2931
  %v2933 = vpop.f32.mrb[0].mxu0
  %2934 = vmatprep.mubr.bf16.mxu0 0
  %2935 = vmatmul.mubr.bf16.gmra.mrb[0].mxu0 %v2859
  %v2936 = vpop.f32.mrb[0].mxu0
  %v2937 = vadd.f32 0.0, %v2936
  %v2938 = vpop.f32.mrb[0].mxu0
  %v2939 = vpop.f32.mrb[0].mxu0
  %v2940 = vadd.f32 0.0, %v2939
  %v2941 = vpop.f32.mrb[0].mxu0
  %2942 = vmatprep.mubr.bf16.mxu0 0
  %2943 = vmatmul.mubr.bf16.gmra.mrb[0].mxu0 %v2862
  %v2944 = vpop.f32.mrb[0].mxu0
  %v2945 = vadd.f32 0.0, %v2944
  %v2946 = vpop.f32.mrb[0].mxu0
  %v2947 = vpop.f32.mrb[0].mxu0
  %v2948 = vadd.f32 0.0, %v2947
  %v2949 = vpop.f32.mrb[0].mxu0
  %2950 = vmatprep.mubr.bf16.mxu0 0
  %2951 = vmatmul.mubr.bf16.gmra.mrb[0].mxu0 %v2865
  %v2952 = vpop.f32.mrb[0].mxu0
  %v2953 = vadd.f32 0.0, %v2952
  %v2954 = vpop.f32.mrb[0].mxu0
  %v2955 = vpop.f32.mrb[0].mxu0
  %v2956 = vadd.f32 0.0, %v2955
  %v2957 = vpop.f32.mrb[0].mxu0
  %2958 = vmatprep.mubr.bf16.mxu0 0
  %2959 = vmatmul.mubr.bf16.gmra.mrb[0].mxu0 %v2868
  %v2960 = vpop.f32.mrb[0].mxu0
  %v2961 = vadd.f32 0.0, %v2960
  %v2962 = vpop.f32.mrb[0].mxu0
  %v2963 = vpop.f32.mrb[0].mxu0
  %v2964 = vadd.f32 0.0, %v2963
  %v2965 = vpop.f32.mrb[0].mxu0
  %2966 = vdwg.mxu0
  %v2967 = vadd.f32 %v2743, %v2905
  %v2968 = vadd.f32 %v2746, %v2908
  %v2969 = vadd.f32 %v2751, %v2913
  %v2970 = vadd.f32 %v2754, %v2916
  %v2971 = vadd.f32 %v2759, %v2921
  %v2972 = vadd.f32 %v2762, %v2924
  %v2973 = vadd.f32 %v2767, %v2929
  %v2974 = vadd.f32 %v2770, %v2932
  %v2975 = vadd.f32 %v2775, %v2937
  %v2976 = vadd.f32 %v2778, %v2940
  %v2977 = vadd.f32 %v2783, %v2945
  %v2978 = vadd.f32 %v2786, %v2948
  %v2979 = vadd.f32 %v2791, %v2953
  %v2980 = vadd.f32 %v2794, %v2956
  %v2981 = vadd.f32 %v2799, %v2961
  %v2982 = vadd.f32 %v2802, %v2964
  %v2983 = vld [vmem:[%s2465] sm:$0xff]
  %v2984 = vld [vmem:[%s2465 + $0x10] sm:$0xff]
  %v2985 = vld [vmem:[%s2465 + $0x20] sm:$0xff]
  %v2986 = vld [vmem:[%s2465 + $0x30] sm:$0xff]
  %v2987 = vld [vmem:[%s2465 + $0x40] sm:$0xff]
  %v2988 = vld [vmem:[%s2465 + $0x50] sm:$0xff]
  %v2989 = vld [vmem:[%s2465 + $0x60] sm:$0xff]
  %v2990 = vld [vmem:[%s2465 + $0x70] sm:$0xff]
  %v2991 = vld [vmem:[%s2465 + $0xa0] sm:$0xff]
  %v2992 = vld [vmem:[%s2465 + $0xb0] sm:$0xff]
  %v2993 = vld [vmem:[%s2465 + $0xc0] sm:$0xff]
  %v2994 = vld [vmem:[%s2465 + $0xd0] sm:$0xff]
  %v2995 = vld [vmem:[%s2465 + $0xe0] sm:$0xff]
  %v2996 = vld [vmem:[%s2465 + $0xf0] sm:$0xff]
  %v2997 = vld [vmem:[%s2465 + $0x100] sm:$0xff]
  %v2998 = vld [vmem:[%s2465 + $0x110] sm:$0xff]
  %v2999 = vpack.c.bf16 %v2984, %v2983
  %v3000 = vpack.c.bf16 %v2986, %v2985
  %v3001 = vpack.c.bf16 %v2988, %v2987
  %v3002 = vpack.c.bf16 %v2990, %v2989
  %v3003 = vpack.c.bf16 %v2992, %v2991
  %v3004 = vpack.c.bf16 %v2994, %v2993
  %v3005 = vpack.c.bf16 %v2996, %v2995
  %v3006 = vpack.c.bf16 %v2998, %v2997
  %s3007 = scalar_lea.vmem %s3, 48
  %v3008 = vld [vmem:[%s3007] sm:$0xf]
  %v3009 = vld [vmem:[%s3007 + $0x4] sm:$0xf]
  %v3010 = vld [vmem:[%s3007 + $0x8] sm:$0xf]
  %v3011 = vld [vmem:[%s3007 + $0xc] sm:$0xf]
  %v3016 = vunpack.c.l.b16 %v3008
  %v3017 = vunpack.c.l.b16 %v3009
  %v3018 = vunpack.c.l.b16 %v3010
  %v3019 = vunpack.c.l.b16 %v3011
  %v3020 = vpack.c.b16 %v3017, %v3016
  %v3021 = vpack.c.b16 %v3019, %v3018
  %v3025 = vsel %vm79, %v2999, 0
  %v3028 = vsel %vm79, %v3000, 0
  %v3031 = vsel %vm79, %v3001, 0
  %v3034 = vsel %vm79, %v3002, 0
  %v3037 = vsel %vm79, %v3003, 0
  %v3040 = vsel %vm79, %v3004, 0
  %v3043 = vsel %vm79, %v3005, 0
  %v3046 = vsel %vm79, %v3006, 0
  %3048 = vmatprep.subr.bf16.mxu0 0
  %3049 = vmatpush1.bf16.msra.mxu0 %v3020
  %3050 = vmatprep.subr.bf16.mxu0 0
  %3051 = vmatpush1.bf16.msra.mxu0 %v3021
  %3052 = vmatprep.subr.bf16.mxu0 0
  %3053 = vmatpush1.bf16.msra.mxu0 0
  %3054 = vmatprep.subr.bf16.mxu0 0
  %3055 = vmatpush1.bf16.msra.mxu0 0
  %3056 = vmatprep.subr.bf16.mxu0 0
  %3057 = vmatpush1.bf16.msra.mxu0 0
  %3058 = vmatprep.subr.bf16.mxu0 0
  %3059 = vmatpush1.bf16.msra.mxu0 0
  %3060 = vmatprep.subr.bf16.mxu0 0
  %3061 = vmatpush1.bf16.msra.mxu0 0
  %3062 = vmatprep.subr.bf16.mxu0 0
  %3063 = vmatpush1.bf16.msra.mxu0 0
  %3064 = vmatprep.subr.bf16.mxu0 0
  %3065 = vmatpush1.bf16.msra.mxu0 0
  %3066 = vmatprep.subr.bf16.mxu0 0
  %3067 = vmatpush1.bf16.msra.mxu0 0
  %3068 = vmatprep.subr.bf16.mxu0 0
  %3069 = vmatpush1.bf16.msra.mxu0 0
  %3070 = vmatprep.subr.bf16.mxu0 0
  %3071 = vmatpush1.bf16.msra.mxu0 0
  %3072 = vmatprep.subr.bf16.mxu0 0
  %3073 = vmatpush1.bf16.msra.mxu0 0
  %3074 = vmatprep.subr.bf16.mxu0 0
  %3075 = vmatpush1.bf16.msra.mxu0 0
  %3076 = vmatprep.subr.bf16.mxu0 0
  %3077 = vmatpush1.bf16.msra.mxu0 0
  %3078 = vmatprep.subr.bf16.mxu0 0
  %3079 = vmatpush1.bf16.msra.mxu0 0
  %3080 = vmatprep.mubr.bf16.mxu0 0
  %3081 = vmatmul.mubr.bf16.gmra.mrb[0].mxu0 %v3025
  %v3082 = vpop.f32.mrb[0].mxu0
  %v3083 = vadd.f32 0.0, %v3082
  %v3084 = vpop.f32.mrb[0].mxu0
  %v3085 = vpop.f32.mrb[0].mxu0
  %v3086 = vadd.f32 0.0, %v3085
  %v3087 = vpop.f32.mrb[0].mxu0
  %3088 = vmatprep.mubr.bf16.mxu0 0
  %3089 = vmatmul.mubr.bf16.gmra.mrb[0].mxu0 %v3028
  %v3090 = vpop.f32.mrb[0].mxu0
  %v3091 = vadd.f32 0.0, %v3090
  %v3092 = vpop.f32.mrb[0].mxu0
  %v3093 = vpop.f32.mrb[0].mxu0
  %v3094 = vadd.f32 0.0, %v3093
  %v3095 = vpop.f32.mrb[0].mxu0
  %3096 = vmatprep.mubr.bf16.mxu0 0
  %3097 = vmatmul.mubr.bf16.gmra.mrb[0].mxu0 %v3031
  %v3098 = vpop.f32.mrb[0].mxu0
  %v3099 = vadd.f32 0.0, %v3098
  %v3100 = vpop.f32.mrb[0].mxu0
  %v3101 = vpop.f32.mrb[0].mxu0
  %v3102 = vadd.f32 0.0, %v3101
  %v3103 = vpop.f32.mrb[0].mxu0
  %3104 = vmatprep.mubr.bf16.mxu0 0
  %3105 = vmatmul.mubr.bf16.gmra.mrb[0].mxu0 %v3034
  %v3106 = vpop.f32.mrb[0].mxu0
  %v3107 = vadd.f32 0.0, %v3106
  %v3108 = vpop.f32.mrb[0].mxu0
  %v3109 = vpop.f32.mrb[0].mxu0
  %v3110 = vadd.f32 0.0, %v3109
  %v3111 = vpop.f32.mrb[0].mxu0
  %3112 = vmatprep.mubr.bf16.mxu0 0
  %3113 = vmatmul.mubr.bf16.gmra.mrb[0].mxu0 %v3037
  %v3114 = vpop.f32.mrb[0].mxu0
  %v3115 = vadd.f32 0.0, %v3114
  %v3116 = vpop.f32.mrb[0].mxu0
  %v3117 = vpop.f32.mrb[0].mxu0
  %v3118 = vadd.f32 0.0, %v3117
  %v3119 = vpop.f32.mrb[0].mxu0
  %3120 = vmatprep.mubr.bf16.mxu0 0
  %3121 = vmatmul.mubr.bf16.gmra.mrb[0].mxu0 %v3040
  %v3122 = vpop.f32.mrb[0].mxu0
  %v3123 = vadd.f32 0.0, %v3122
  %v3124 = vpop.f32.mrb[0].mxu0
  %v3125 = vpop.f32.mrb[0].mxu0
  %v3126 = vadd.f32 0.0, %v3125
  %v3127 = vpop.f32.mrb[0].mxu0
  %3128 = vmatprep.mubr.bf16.mxu0 0
  %3129 = vmatmul.mubr.bf16.gmra.mrb[0].mxu0 %v3043
  %v3130 = vpop.f32.mrb[0].mxu0
  %v3131 = vadd.f32 0.0, %v3130
  %v3132 = vpop.f32.mrb[0].mxu0
  %v3133 = vpop.f32.mrb[0].mxu0
  %v3134 = vadd.f32 0.0, %v3133
  %v3135 = vpop.f32.mrb[0].mxu0
  %3136 = vmatprep.mubr.bf16.mxu0 0
  %3137 = vmatmul.mubr.bf16.gmra.mrb[0].mxu0 %v3046
  %v3138 = vpop.f32.mrb[0].mxu0
  %v3139 = vadd.f32 0.0, %v3138
  %v3140 = vpop.f32.mrb[0].mxu0
  %v3141 = vpop.f32.mrb[0].mxu0
  %v3142 = vadd.f32 0.0, %v3141
  %v3143 = vpop.f32.mrb[0].mxu0
  %3144 = vdwg.mxu0
  %v3145 = vadd.f32 %v2967, %v3083
  %v3146 = vadd.f32 %v2968, %v3086
  %v3147 = vadd.f32 %v2969, %v3091
  %v3148 = vadd.f32 %v2970, %v3094
  %v3149 = vadd.f32 %v2971, %v3099
  %v3150 = vadd.f32 %v2972, %v3102
  %v3151 = vadd.f32 %v2973, %v3107
  %v3152 = vadd.f32 %v2974, %v3110
  %v3153 = vadd.f32 %v2975, %v3115
  %v3154 = vadd.f32 %v2976, %v3118
  %v3155 = vadd.f32 %v2977, %v3123
  %v3156 = vadd.f32 %v2978, %v3126
  %v3157 = vadd.f32 %v2979, %v3131
  %v3158 = vadd.f32 %v2980, %v3134
  %v3159 = vadd.f32 %v2981, %v3139
  %v3160 = vadd.f32 %v2982, %v3142
  %v3161 = vld [vmem:[%s2465 + $0x1] sm:$0xff]
  %v3162 = vld [vmem:[%s2465 + $0x11] sm:$0xff]
  %v3163 = vld [vmem:[%s2465 + $0x21] sm:$0xff]
  %v3164 = vld [vmem:[%s2465 + $0x31] sm:$0xff]
  %v3165 = vld [vmem:[%s2465 + $0x41] sm:$0xff]
  %v3166 = vld [vmem:[%s2465 + $0x51] sm:$0xff]
  %v3167 = vld [vmem:[%s2465 + $0x61] sm:$0xff]
  %v3168 = vld [vmem:[%s2465 + $0x71] sm:$0xff]
  %v3169 = vld [vmem:[%s2465 + $0xa1] sm:$0xff]
  %v3170 = vld [vmem:[%s2465 + $0xb1] sm:$0xff]
  %v3171 = vld [vmem:[%s2465 + $0xc1] sm:$0xff]
  %v3172 = vld [vmem:[%s2465 + $0xd1] sm:$0xff]
  %v3173 = vld [vmem:[%s2465 + $0xe1] sm:$0xff]
  %v3174 = vld [vmem:[%s2465 + $0xf1] sm:$0xff]
  %v3175 = vld [vmem:[%s2465 + $0x101] sm:$0xff]
  %v3176 = vld [vmem:[%s2465 + $0x111] sm:$0xff]
  %v3177 = vpack.c.bf16 %v3162, %v3161
  %v3178 = vpack.c.bf16 %v3164, %v3163
  %v3179 = vpack.c.bf16 %v3166, %v3165
  %v3180 = vpack.c.bf16 %v3168, %v3167
  %v3181 = vpack.c.bf16 %v3170, %v3169
  %v3182 = vpack.c.bf16 %v3172, %v3171
  %v3183 = vpack.c.bf16 %v3174, %v3173
  %v3184 = vpack.c.bf16 %v3176, %v3175
  %s3185 = scalar_lea.vmem %s3, 64
  %v3186 = vld [vmem:[%s3185] sm:$0xf]
  %v3187 = vld [vmem:[%s3185 + $0x4] sm:$0xf]
  %v3188 = vld [vmem:[%s3185 + $0x8] sm:$0xf]
  %v3189 = vld [vmem:[%s3185 + $0xc] sm:$0xf]
  %v3194 = vunpack.c.l.b16 %v3186
  %v3195 = vunpack.c.l.b16 %v3187
  %v3196 = vunpack.c.l.b16 %v3188
  %v3197 = vunpack.c.l.b16 %v3189
  %v3198 = vpack.c.b16 %v3195, %v3194
  %v3199 = vpack.c.b16 %v3197, %v3196
  %v3203 = vsel %vm79, %v3177, 0
  %v3206 = vsel %vm79, %v3178, 0
  %v3209 = vsel %vm79, %v3179, 0
  %v3212 = vsel %vm79, %v3180, 0
  %v3215 = vsel %vm79, %v3181, 0
  %v3218 = vsel %vm79, %v3182, 0
  %v3221 = vsel %vm79, %v3183, 0
  %v3224 = vsel %vm79, %v3184, 0
  %3226 = vmatprep.subr.bf16.mxu0 0
  %3227 = vmatpush1.bf16.msra.mxu0 %v3198
  %3228 = vmatprep.subr.bf16.mxu0 0
  %3229 = vmatpush1.bf16.msra.mxu0 %v3199
  %3230 = vmatprep.subr.bf16.mxu0 0
  %3231 = vmatpush1.bf16.msra.mxu0 0
  %3232 = vmatprep.subr.bf16.mxu0 0
  %3233 = vmatpush1.bf16.msra.mxu0 0
  %3234 = vmatprep.subr.bf16.mxu0 0
  %3235 = vmatpush1.bf16.msra.mxu0 0
  %3236 = vmatprep.subr.bf16.mxu0 0
  %3237 = vmatpush1.bf16.msra.mxu0 0
  %3238 = vmatprep.subr.bf16.mxu0 0
  %3239 = vmatpush1.bf16.msra.mxu0 0
  %3240 = vmatprep.subr.bf16.mxu0 0
  %3241 = vmatpush1.bf16.msra.mxu0 0
  %3242 = vmatprep.subr.bf16.mxu0 0
  %3243 = vmatpush1.bf16.msra.mxu0 0
  %3244 = vmatprep.subr.bf16.mxu0 0
  %3245 = vmatpush1.bf16.msra.mxu0 0
  %3246 = vmatprep.subr.bf16.mxu0 0
  %3247 = vmatpush1.bf16.msra.mxu0 0
  %3248 = vmatprep.subr.bf16.mxu0 0
  %3249 = vmatpush1.bf16.msra.mxu0 0
  %3250 = vmatprep.subr.bf16.mxu0 0
  %3251 = vmatpush1.bf16.msra.mxu0 0
  %3252 = vmatprep.subr.bf16.mxu0 0
  %3253 = vmatpush1.bf16.msra.mxu0 0
  %3254 = vmatprep.subr.bf16.mxu0 0
  %3255 = vmatpush1.bf16.msra.mxu0 0
  %3256 = vmatprep.subr.bf16.mxu0 0
  %3257 = vmatpush1.bf16.msra.mxu0 0
  %3258 = vmatprep.mubr.bf16.mxu0 0
  %3259 = vmatmul.mubr.bf16.gmra.mrb[0].mxu0 %v3203
  %v3260 = vpop.f32.mrb[0].mxu0
  %v3261 = vadd.f32 0.0, %v3260
  %v3262 = vpop.f32.mrb[0].mxu0
  %v3263 = vpop.f32.mrb[0].mxu0
  %v3264 = vadd.f32 0.0, %v3263
  %v3265 = vpop.f32.mrb[0].mxu0
  %3266 = vmatprep.mubr.bf16.mxu0 0
  %3267 = vmatmul.mubr.bf16.gmra.mrb[0].mxu0 %v3206
  %v3268 = vpop.f32.mrb[0].mxu0
  %v3269 = vadd.f32 0.0, %v3268
  %v3270 = vpop.f32.mrb[0].mxu0
  %v3271 = vpop.f32.mrb[0].mxu0
  %v3272 = vadd.f32 0.0, %v3271
  %v3273 = vpop.f32.mrb[0].mxu0
  %3274 = vmatprep.mubr.bf16.mxu0 0
  %3275 = vmatmul.mubr.bf16.gmra.mrb[0].mxu0 %v3209
  %v3276 = vpop.f32.mrb[0].mxu0
  %v3277 = vadd.f32 0.0, %v3276
  %v3278 = vpop.f32.mrb[0].mxu0
  %v3279 = vpop.f32.mrb[0].mxu0
  %v3280 = vadd.f32 0.0, %v3279
  %v3281 = vpop.f32.mrb[0].mxu0
  %3282 = vmatprep.mubr.bf16.mxu0 0
  %3283 = vmatmul.mubr.bf16.gmra.mrb[0].mxu0 %v3212
  %v3284 = vpop.f32.mrb[0].mxu0
  %v3285 = vadd.f32 0.0, %v3284
  %v3286 = vpop.f32.mrb[0].mxu0
  %v3287 = vpop.f32.mrb[0].mxu0
  %v3288 = vadd.f32 0.0, %v3287
  %v3289 = vpop.f32.mrb[0].mxu0
  %3290 = vmatprep.mubr.bf16.mxu0 0
  %3291 = vmatmul.mubr.bf16.gmra.mrb[0].mxu0 %v3215
  %v3292 = vpop.f32.mrb[0].mxu0
  %v3293 = vadd.f32 0.0, %v3292
  %v3294 = vpop.f32.mrb[0].mxu0
  %v3295 = vpop.f32.mrb[0].mxu0
  %v3296 = vadd.f32 0.0, %v3295
  %v3297 = vpop.f32.mrb[0].mxu0
  %3298 = vmatprep.mubr.bf16.mxu0 0
  %3299 = vmatmul.mubr.bf16.gmra.mrb[0].mxu0 %v3218
  %v3300 = vpop.f32.mrb[0].mxu0
  %v3301 = vadd.f32 0.0, %v3300
  %v3302 = vpop.f32.mrb[0].mxu0
  %v3303 = vpop.f32.mrb[0].mxu0
  %v3304 = vadd.f32 0.0, %v3303
  %v3305 = vpop.f32.mrb[0].mxu0
  %3306 = vmatprep.mubr.bf16.mxu0 0
  %3307 = vmatmul.mubr.bf16.gmra.mrb[0].mxu0 %v3221
  %v3308 = vpop.f32.mrb[0].mxu0
  %v3309 = vadd.f32 0.0, %v3308
  %v3310 = vpop.f32.mrb[0].mxu0
  %v3311 = vpop.f32.mrb[0].mxu0
  %v3312 = vadd.f32 0.0, %v3311
  %v3313 = vpop.f32.mrb[0].mxu0
  %3314 = vmatprep.mubr.bf16.mxu0 0
  %3315 = vmatmul.mubr.bf16.gmra.mrb[0].mxu0 %v3224
  %v3316 = vpop.f32.mrb[0].mxu0
  %v3317 = vadd.f32 0.0, %v3316
  %v3318 = vpop.f32.mrb[0].mxu0
  %v3319 = vpop.f32.mrb[0].mxu0
  %v3320 = vadd.f32 0.0, %v3319
  %v3321 = vpop.f32.mrb[0].mxu0
  %3322 = vdwg.mxu0
  %v3323 = vadd.f32 %v3145, %v3261
  %v3324 = vadd.f32 %v3146, %v3264
  %v3325 = vadd.f32 %v3147, %v3269
  %v3326 = vadd.f32 %v3148, %v3272
  %v3327 = vadd.f32 %v3149, %v3277
  %v3328 = vadd.f32 %v3150, %v3280
  %v3329 = vadd.f32 %v3151, %v3285
  %v3330 = vadd.f32 %v3152, %v3288
  %v3331 = vadd.f32 %v3153, %v3293
  %v3332 = vadd.f32 %v3154, %v3296
  %v3333 = vadd.f32 %v3155, %v3301
  %v3334 = vadd.f32 %v3156, %v3304
  %v3335 = vadd.f32 %v3157, %v3309
  %v3336 = vadd.f32 %v3158, %v3312
  %v3337 = vadd.f32 %v3159, %v3317
  %v3338 = vadd.f32 %v3160, %v3320
  %v3339 = vld [vmem:[%s2465 + $0x2] sm:$0xff]
  %v3340 = vld [vmem:[%s2465 + $0x12] sm:$0xff]
  %v3341 = vld [vmem:[%s2465 + $0x22] sm:$0xff]
  %v3342 = vld [vmem:[%s2465 + $0x32] sm:$0xff]
  %v3343 = vld [vmem:[%s2465 + $0x42] sm:$0xff]
  %v3344 = vld [vmem:[%s2465 + $0x52] sm:$0xff]
  %v3345 = vld [vmem:[%s2465 + $0x62] sm:$0xff]
  %v3346 = vld [vmem:[%s2465 + $0x72] sm:$0xff]
  %v3347 = vld [vmem:[%s2465 + $0xa2] sm:$0xff]
  %v3348 = vld [vmem:[%s2465 + $0xb2] sm:$0xff]
  %v3349 = vld [vmem:[%s2465 + $0xc2] sm:$0xff]
  %v3350 = vld [vmem:[%s2465 + $0xd2] sm:$0xff]
  %v3351 = vld [vmem:[%s2465 + $0xe2] sm:$0xff]
  %v3352 = vld [vmem:[%s2465 + $0xf2] sm:$0xff]
  %v3353 = vld [vmem:[%s2465 + $0x102] sm:$0xff]
  %v3354 = vld [vmem:[%s2465 + $0x112] sm:$0xff]
  %v3355 = vpack.c.bf16 %v3340, %v3339
  %v3356 = vpack.c.bf16 %v3342, %v3341
  %v3357 = vpack.c.bf16 %v3344, %v3343
  %v3358 = vpack.c.bf16 %v3346, %v3345
  %v3359 = vpack.c.bf16 %v3348, %v3347
  %v3360 = vpack.c.bf16 %v3350, %v3349
  %v3361 = vpack.c.bf16 %v3352, %v3351
  %v3362 = vpack.c.bf16 %v3354, %v3353
  %s3363 = scalar_lea.vmem %s3, 80
  %v3364 = vld [vmem:[%s3363] sm:$0xf]
  %v3365 = vld [vmem:[%s3363 + $0x4] sm:$0xf]
  %v3366 = vld [vmem:[%s3363 + $0x8] sm:$0xf]
  %v3367 = vld [vmem:[%s3363 + $0xc] sm:$0xf]
  %v3372 = vunpack.c.l.b16 %v3364
  %v3373 = vunpack.c.l.b16 %v3365
  %v3374 = vunpack.c.l.b16 %v3366
  %v3375 = vunpack.c.l.b16 %v3367
  %v3376 = vpack.c.b16 %v3373, %v3372
  %v3377 = vpack.c.b16 %v3375, %v3374
  %v3381 = vsel %vm79, %v3355, 0
  %v3384 = vsel %vm79, %v3356, 0
  %v3387 = vsel %vm79, %v3357, 0
  %v3390 = vsel %vm79, %v3358, 0
  %v3393 = vsel %vm79, %v3359, 0
  %v3396 = vsel %vm79, %v3360, 0
  %v3399 = vsel %vm79, %v3361, 0
  %v3402 = vsel %vm79, %v3362, 0
  %3404 = vmatprep.subr.bf16.mxu0 0
  %3405 = vmatpush1.bf16.msra.mxu0 %v3376
  %3406 = vmatprep.subr.bf16.mxu0 0
  %3407 = vmatpush1.bf16.msra.mxu0 %v3377
  %3408 = vmatprep.subr.bf16.mxu0 0
  %3409 = vmatpush1.bf16.msra.mxu0 0
  %3410 = vmatprep.subr.bf16.mxu0 0
  %3411 = vmatpush1.bf16.msra.mxu0 0
  %3412 = vmatprep.subr.bf16.mxu0 0
  %3413 = vmatpush1.bf16.msra.mxu0 0
  %3414 = vmatprep.subr.bf16.mxu0 0
  %3415 = vmatpush1.bf16.msra.mxu0 0
  %3416 = vmatprep.subr.bf16.mxu0 0
  %3417 = vmatpush1.bf16.msra.mxu0 0
  %3418 = vmatprep.subr.bf16.mxu0 0
  %3419 = vmatpush1.bf16.msra.mxu0 0
  %3420 = vmatprep.subr.bf16.mxu0 0
  %3421 = vmatpush1.bf16.msra.mxu0 0
  %3422 = vmatprep.subr.bf16.mxu0 0
  %3423 = vmatpush1.bf16.msra.mxu0 0
  %3424 = vmatprep.subr.bf16.mxu0 0
  %3425 = vmatpush1.bf16.msra.mxu0 0
  %3426 = vmatprep.subr.bf16.mxu0 0
  %3427 = vmatpush1.bf16.msra.mxu0 0
  %3428 = vmatprep.subr.bf16.mxu0 0
  %3429 = vmatpush1.bf16.msra.mxu0 0
  %3430 = vmatprep.subr.bf16.mxu0 0
  %3431 = vmatpush1.bf16.msra.mxu0 0
  %3432 = vmatprep.subr.bf16.mxu0 0
  %3433 = vmatpush1.bf16.msra.mxu0 0
  %3434 = vmatprep.subr.bf16.mxu0 0
  %3435 = vmatpush1.bf16.msra.mxu0 0
  %3436 = vmatprep.mubr.bf16.mxu0 0
  %3437 = vmatmul.mubr.bf16.gmra.mrb[0].mxu0 %v3381
  %v3438 = vpop.f32.mrb[0].mxu0
  %v3439 = vadd.f32 0.0, %v3438
  %v3440 = vpop.f32.mrb[0].mxu0
  %v3441 = vpop.f32.mrb[0].mxu0
  %v3442 = vadd.f32 0.0, %v3441
  %v3443 = vpop.f32.mrb[0].mxu0
  %3444 = vmatprep.mubr.bf16.mxu0 0
  %3445 = vmatmul.mubr.bf16.gmra.mrb[0].mxu0 %v3384
  %v3446 = vpop.f32.mrb[0].mxu0
  %v3447 = vadd.f32 0.0, %v3446
  %v3448 = vpop.f32.mrb[0].mxu0
  %v3449 = vpop.f32.mrb[0].mxu0
  %v3450 = vadd.f32 0.0, %v3449
  %v3451 = vpop.f32.mrb[0].mxu0
  %3452 = vmatprep.mubr.bf16.mxu0 0
  %3453 = vmatmul.mubr.bf16.gmra.mrb[0].mxu0 %v3387
  %v3454 = vpop.f32.mrb[0].mxu0
  %v3455 = vadd.f32 0.0, %v3454
  %v3456 = vpop.f32.mrb[0].mxu0
  %v3457 = vpop.f32.mrb[0].mxu0
  %v3458 = vadd.f32 0.0, %v3457
  %v3459 = vpop.f32.mrb[0].mxu0
  %3460 = vmatprep.mubr.bf16.mxu0 0
  %3461 = vmatmul.mubr.bf16.gmra.mrb[0].mxu0 %v3390
  %v3462 = vpop.f32.mrb[0].mxu0
  %v3463 = vadd.f32 0.0, %v3462
  %v3464 = vpop.f32.mrb[0].mxu0
  %v3465 = vpop.f32.mrb[0].mxu0
  %v3466 = vadd.f32 0.0, %v3465
  %v3467 = vpop.f32.mrb[0].mxu0
  %3468 = vmatprep.mubr.bf16.mxu0 0
  %3469 = vmatmul.mubr.bf16.gmra.mrb[0].mxu0 %v3393
  %v3470 = vpop.f32.mrb[0].mxu0
  %v3471 = vadd.f32 0.0, %v3470
  %v3472 = vpop.f32.mrb[0].mxu0
  %v3473 = vpop.f32.mrb[0].mxu0
  %v3474 = vadd.f32 0.0, %v3473
  %v3475 = vpop.f32.mrb[0].mxu0
  %3476 = vmatprep.mubr.bf16.mxu0 0
  %3477 = vmatmul.mubr.bf16.gmra.mrb[0].mxu0 %v3396
  %v3478 = vpop.f32.mrb[0].mxu0
  %v3479 = vadd.f32 0.0, %v3478
  %v3480 = vpop.f32.mrb[0].mxu0
  %v3481 = vpop.f32.mrb[0].mxu0
  %v3482 = vadd.f32 0.0, %v3481
  %v3483 = vpop.f32.mrb[0].mxu0
  %3484 = vmatprep.mubr.bf16.mxu0 0
  %3485 = vmatmul.mubr.bf16.gmra.mrb[0].mxu0 %v3399
  %v3486 = vpop.f32.mrb[0].mxu0
  %v3487 = vadd.f32 0.0, %v3486
  %v3488 = vpop.f32.mrb[0].mxu0
  %v3489 = vpop.f32.mrb[0].mxu0
  %v3490 = vadd.f32 0.0, %v3489
  %v3491 = vpop.f32.mrb[0].mxu0
  %3492 = vmatprep.mubr.bf16.mxu0 0
  %3493 = vmatmul.mubr.bf16.gmra.mrb[0].mxu0 %v3402
  %v3494 = vpop.f32.mrb[0].mxu0
  %v3495 = vadd.f32 0.0, %v3494
  %v3496 = vpop.f32.mrb[0].mxu0
  %v3497 = vpop.f32.mrb[0].mxu0
  %v3498 = vadd.f32 0.0, %v3497
  %v3499 = vpop.f32.mrb[0].mxu0
  %3500 = vdwg.mxu0
  %v3501 = vadd.f32 %v3323, %v3439
  %v3502 = vadd.f32 %v3324, %v3442
  %v3503 = vadd.f32 %v3325, %v3447
  %v3504 = vadd.f32 %v3326, %v3450
  %v3505 = vadd.f32 %v3327, %v3455
  %v3506 = vadd.f32 %v3328, %v3458
  %v3507 = vadd.f32 %v3329, %v3463
  %v3508 = vadd.f32 %v3330, %v3466
  %v3509 = vadd.f32 %v3331, %v3471
  %v3510 = vadd.f32 %v3332, %v3474
  %v3511 = vadd.f32 %v3333, %v3479
  %v3512 = vadd.f32 %v3334, %v3482
  %v3513 = vadd.f32 %v3335, %v3487
  %v3514 = vadd.f32 %v3336, %v3490
  %v3515 = vadd.f32 %v3337, %v3495
  %v3516 = vadd.f32 %v3338, %v3498
  %s3517 = scalar_lea.vmem [#allocation3], 32
  %v3518 = vld [vmem:[%s3517] sm:$0xff]
  %v3519 = vld [vmem:[%s3517 + $0x10] sm:$0xff]
  %v3520 = vld [vmem:[%s3517 + $0x20] sm:$0xff]
  %v3521 = vld [vmem:[%s3517 + $0x30] sm:$0xff]
  %v3522 = vld [vmem:[%s3517 + $0x40] sm:$0xff]
  %v3523 = vld [vmem:[%s3517 + $0x50] sm:$0xff]
  %v3524 = vld [vmem:[%s3517 + $0x60] sm:$0xff]
  %v3525 = vld [vmem:[%s3517 + $0x70] sm:$0xff]
  %v3526 = vld [vmem:[%s3517 + $0xa0] sm:$0xff]
  %v3527 = vld [vmem:[%s3517 + $0xb0] sm:$0xff]
  %v3528 = vld [vmem:[%s3517 + $0xc0] sm:$0xff]
  %v3529 = vld [vmem:[%s3517 + $0xd0] sm:$0xff]
  %v3530 = vld [vmem:[%s3517 + $0xe0] sm:$0xff]
  %v3531 = vld [vmem:[%s3517 + $0xf0] sm:$0xff]
  %v3532 = vld [vmem:[%s3517 + $0x100] sm:$0xff]
  %v3533 = vld [vmem:[%s3517 + $0x110] sm:$0xff]
  %v3534 = vpack.c.bf16 %v3519, %v3518
  %v3535 = vpack.c.bf16 %v3521, %v3520
  %v3536 = vpack.c.bf16 %v3523, %v3522
  %v3537 = vpack.c.bf16 %v3525, %v3524
  %v3538 = vpack.c.bf16 %v3527, %v3526
  %v3539 = vpack.c.bf16 %v3529, %v3528
  %v3540 = vpack.c.bf16 %v3531, %v3530
  %v3541 = vpack.c.bf16 %v3533, %v3532
  %s3542 = scalar_lea.vmem %s3, 96
  %v3543 = vld [vmem:[%s3542] sm:$0xf]
  %v3544 = vld [vmem:[%s3542 + $0x4] sm:$0xf]
  %v3545 = vld [vmem:[%s3542 + $0x8] sm:$0xf]
  %v3546 = vld [vmem:[%s3542 + $0xc] sm:$0xf]
  %v3551 = vunpack.c.l.b16 %v3543
  %v3552 = vunpack.c.l.b16 %v3544
  %v3553 = vunpack.c.l.b16 %v3545
  %v3554 = vunpack.c.l.b16 %v3546
  %v3555 = vpack.c.b16 %v3552, %v3551
  %v3556 = vpack.c.b16 %v3554, %v3553
  %v3560 = vsel %vm79, %v3534, 0
  %v3563 = vsel %vm79, %v3535, 0
  %v3566 = vsel %vm79, %v3536, 0
  %v3569 = vsel %vm79, %v3537, 0
  %v3572 = vsel %vm79, %v3538, 0
  %v3575 = vsel %vm79, %v3539, 0
  %v3578 = vsel %vm79, %v3540, 0
  %v3581 = vsel %vm79, %v3541, 0
  %3583 = vmatprep.subr.bf16.mxu0 0
  %3584 = vmatpush1.bf16.msra.mxu0 %v3555
  %3585 = vmatprep.subr.bf16.mxu0 0
  %3586 = vmatpush1.bf16.msra.mxu0 %v3556
  %3587 = vmatprep.subr.bf16.mxu0 0
  %3588 = vmatpush1.bf16.msra.mxu0 0
  %3589 = vmatprep.subr.bf16.mxu0 0
  %3590 = vmatpush1.bf16.msra.mxu0 0
  %3591 = vmatprep.subr.bf16.mxu0 0
  %3592 = vmatpush1.bf16.msra.mxu0 0
  %3593 = vmatprep.subr.bf16.mxu0 0
  %3594 = vmatpush1.bf16.msra.mxu0 0
  %3595 = vmatprep.subr.bf16.mxu0 0
  %3596 = vmatpush1.bf16.msra.mxu0 0
  %3597 = vmatprep.subr.bf16.mxu0 0
  %3598 = vmatpush1.bf16.msra.mxu0 0
  %3599 = vmatprep.subr.bf16.mxu0 0
  %3600 = vmatpush1.bf16.msra.mxu0 0
  %3601 = vmatprep.subr.bf16.mxu0 0
  %3602 = vmatpush1.bf16.msra.mxu0 0
  %3603 = vmatprep.subr.bf16.mxu0 0
  %3604 = vmatpush1.bf16.msra.mxu0 0
  %3605 = vmatprep.subr.bf16.mxu0 0
  %3606 = vmatpush1.bf16.msra.mxu0 0
  %3607 = vmatprep.subr.bf16.mxu0 0
  %3608 = vmatpush1.bf16.msra.mxu0 0
  %3609 = vmatprep.subr.bf16.mxu0 0
  %3610 = vmatpush1.bf16.msra.mxu0 0
  %3611 = vmatprep.subr.bf16.mxu0 0
  %3612 = vmatpush1.bf16.msra.mxu0 0
  %3613 = vmatprep.subr.bf16.mxu0 0
  %3614 = vmatpush1.bf16.msra.mxu0 0
  %3615 = vmatprep.mubr.bf16.mxu0 0
  %3616 = vmatmul.mubr.bf16.gmra.mrb[0].mxu0 %v3560
  %v3617 = vpop.f32.mrb[0].mxu0
  %v3618 = vadd.f32 0.0, %v3617
  %v3619 = vpop.f32.mrb[0].mxu0
  %v3620 = vpop.f32.mrb[0].mxu0
  %v3621 = vadd.f32 0.0, %v3620
  %v3622 = vpop.f32.mrb[0].mxu0
  %3623 = vmatprep.mubr.bf16.mxu0 0
  %3624 = vmatmul.mubr.bf16.gmra.mrb[0].mxu0 %v3563
  %v3625 = vpop.f32.mrb[0].mxu0
  %v3626 = vadd.f32 0.0, %v3625
  %v3627 = vpop.f32.mrb[0].mxu0
  %v3628 = vpop.f32.mrb[0].mxu0
  %v3629 = vadd.f32 0.0, %v3628
  %v3630 = vpop.f32.mrb[0].mxu0
  %3631 = vmatprep.mubr.bf16.mxu0 0
  %3632 = vmatmul.mubr.bf16.gmra.mrb[0].mxu0 %v3566
  %v3633 = vpop.f32.mrb[0].mxu0
  %v3634 = vadd.f32 0.0, %v3633
  %v3635 = vpop.f32.mrb[0].mxu0
  %v3636 = vpop.f32.mrb[0].mxu0
  %v3637 = vadd.f32 0.0, %v3636
  %v3638 = vpop.f32.mrb[0].mxu0
  %3639 = vmatprep.mubr.bf16.mxu0 0
  %3640 = vmatmul.mubr.bf16.gmra.mrb[0].mxu0 %v3569
  %v3641 = vpop.f32.mrb[0].mxu0
  %v3642 = vadd.f32 0.0, %v3641
  %v3643 = vpop.f32.mrb[0].mxu0
  %v3644 = vpop.f32.mrb[0].mxu0
  %v3645 = vadd.f32 0.0, %v3644
  %v3646 = vpop.f32.mrb[0].mxu0
  %3647 = vmatprep.mubr.bf16.mxu0 0
  %3648 = vmatmul.mubr.bf16.gmra.mrb[0].mxu0 %v3572
  %v3649 = vpop.f32.mrb[0].mxu0
  %v3650 = vadd.f32 0.0, %v3649
  %v3651 = vpop.f32.mrb[0].mxu0
  %v3652 = vpop.f32.mrb[0].mxu0
  %v3653 = vadd.f32 0.0, %v3652
  %v3654 = vpop.f32.mrb[0].mxu0
  %3655 = vmatprep.mubr.bf16.mxu0 0
  %3656 = vmatmul.mubr.bf16.gmra.mrb[0].mxu0 %v3575
  %v3657 = vpop.f32.mrb[0].mxu0
  %v3658 = vadd.f32 0.0, %v3657
  %v3659 = vpop.f32.mrb[0].mxu0
  %v3660 = vpop.f32.mrb[0].mxu0
  %v3661 = vadd.f32 0.0, %v3660
  %v3662 = vpop.f32.mrb[0].mxu0
  %3663 = vmatprep.mubr.bf16.mxu0 0
  %3664 = vmatmul.mubr.bf16.gmra.mrb[0].mxu0 %v3578
  %v3665 = vpop.f32.mrb[0].mxu0
  %v3666 = vadd.f32 0.0, %v3665
  %v3667 = vpop.f32.mrb[0].mxu0
  %v3668 = vpop.f32.mrb[0].mxu0
  %v3669 = vadd.f32 0.0, %v3668
  %v3670 = vpop.f32.mrb[0].mxu0
  %3671 = vmatprep.mubr.bf16.mxu0 0
  %3672 = vmatmul.mubr.bf16.gmra.mrb[0].mxu0 %v3581
  %v3673 = vpop.f32.mrb[0].mxu0
  %v3674 = vadd.f32 0.0, %v3673
  %v3675 = vpop.f32.mrb[0].mxu0
  %v3676 = vpop.f32.mrb[0].mxu0
  %v3677 = vadd.f32 0.0, %v3676
  %v3678 = vpop.f32.mrb[0].mxu0
  %3679 = vdwg.mxu0
  %v3680 = vadd.f32 %v3501, %v3618
  %v3681 = vadd.f32 %v3502, %v3621
  %v3682 = vadd.f32 %v3503, %v3626
  %v3683 = vadd.f32 %v3504, %v3629
  %v3684 = vadd.f32 %v3505, %v3634
  %v3685 = vadd.f32 %v3506, %v3637
  %v3686 = vadd.f32 %v3507, %v3642
  %v3687 = vadd.f32 %v3508, %v3645
  %v3688 = vadd.f32 %v3509, %v3650
  %v3689 = vadd.f32 %v3510, %v3653
  %v3690 = vadd.f32 %v3511, %v3658
  %v3691 = vadd.f32 %v3512, %v3661
  %v3692 = vadd.f32 %v3513, %v3666
  %v3693 = vadd.f32 %v3514, %v3669
  %v3694 = vadd.f32 %v3515, %v3674
  %v3695 = vadd.f32 %v3516, %v3677
  %v3696 = vld [vmem:[%s3517 + $0x1] sm:$0xff]
  %v3697 = vld [vmem:[%s3517 + $0x11] sm:$0xff]
  %v3698 = vld [vmem:[%s3517 + $0x21] sm:$0xff]
  %v3699 = vld [vmem:[%s3517 + $0x31] sm:$0xff]
  %v3700 = vld [vmem:[%s3517 + $0x41] sm:$0xff]
  %v3701 = vld [vmem:[%s3517 + $0x51] sm:$0xff]
  %v3702 = vld [vmem:[%s3517 + $0x61] sm:$0xff]
  %v3703 = vld [vmem:[%s3517 + $0x71] sm:$0xff]
  %v3704 = vld [vmem:[%s3517 + $0xa1] sm:$0xff]
  %v3705 = vld [vmem:[%s3517 + $0xb1] sm:$0xff]
  %v3706 = vld [vmem:[%s3517 + $0xc1] sm:$0xff]
  %v3707 = vld [vmem:[%s3517 + $0xd1] sm:$0xff]
  %v3708 = vld [vmem:[%s3517 + $0xe1] sm:$0xff]
  %v3709 = vld [vmem:[%s3517 + $0xf1] sm:$0xff]
  %v3710 = vld [vmem:[%s3517 + $0x101] sm:$0xff]
  %v3711 = vld [vmem:[%s3517 + $0x111] sm:$0xff]
  %v3712 = vpack.c.bf16 %v3697, %v3696
  %v3713 = vpack.c.bf16 %v3699, %v3698
  %v3714 = vpack.c.bf16 %v3701, %v3700
  %v3715 = vpack.c.bf16 %v3703, %v3702
  %v3716 = vpack.c.bf16 %v3705, %v3704
  %v3717 = vpack.c.bf16 %v3707, %v3706
  %v3718 = vpack.c.bf16 %v3709, %v3708
  %v3719 = vpack.c.bf16 %v3711, %v3710
  %s3720 = scalar_lea.vmem %s3, 112
  %v3721 = vld [vmem:[%s3720] sm:$0xf]
  %v3722 = vld [vmem:[%s3720 + $0x4] sm:$0xf]
  %v3723 = vld [vmem:[%s3720 + $0x8] sm:$0xf]
  %v3724 = vld [vmem:[%s3720 + $0xc] sm:$0xf]
  %v3729 = vunpack.c.l.b16 %v3721
  %v3730 = vunpack.c.l.b16 %v3722
  %v3731 = vunpack.c.l.b16 %v3723
  %v3732 = vunpack.c.l.b16 %v3724
  %v3733 = vpack.c.b16 %v3730, %v3729
  %v3734 = vpack.c.b16 %v3732, %v3731
  %v3738 = vsel %vm79, %v3712, 0
  %v3741 = vsel %vm79, %v3713, 0
  %v3744 = vsel %vm79, %v3714, 0
  %v3747 = vsel %vm79, %v3715, 0
  %v3750 = vsel %vm79, %v3716, 0
  %v3753 = vsel %vm79, %v3717, 0
  %v3756 = vsel %vm79, %v3718, 0
  %v3759 = vsel %vm79, %v3719, 0
  %3761 = vmatprep.subr.bf16.mxu0 0
  %3762 = vmatpush1.bf16.msra.mxu0 %v3733
  %3763 = vmatprep.subr.bf16.mxu0 0
  %3764 = vmatpush1.bf16.msra.mxu0 %v3734
  %3765 = vmatprep.subr.bf16.mxu0 0
  %3766 = vmatpush1.bf16.msra.mxu0 0
  %3767 = vmatprep.subr.bf16.mxu0 0
  %3768 = vmatpush1.bf16.msra.mxu0 0
  %3769 = vmatprep.subr.bf16.mxu0 0
  %3770 = vmatpush1.bf16.msra.mxu0 0
  %3771 = vmatprep.subr.bf16.mxu0 0
  %3772 = vmatpush1.bf16.msra.mxu0 0
  %3773 = vmatprep.subr.bf16.mxu0 0
  %3774 = vmatpush1.bf16.msra.mxu0 0
  %3775 = vmatprep.subr.bf16.mxu0 0
  %3776 = vmatpush1.bf16.msra.mxu0 0
  %3777 = vmatprep.subr.bf16.mxu0 0
  %3778 = vmatpush1.bf16.msra.mxu0 0
  %3779 = vmatprep.subr.bf16.mxu0 0
  %3780 = vmatpush1.bf16.msra.mxu0 0
  %3781 = vmatprep.subr.bf16.mxu0 0
  %3782 = vmatpush1.bf16.msra.mxu0 0
  %3783 = vmatprep.subr.bf16.mxu0 0
  %3784 = vmatpush1.bf16.msra.mxu0 0
  %3785 = vmatprep.subr.bf16.mxu0 0
  %3786 = vmatpush1.bf16.msra.mxu0 0
  %3787 = vmatprep.subr.bf16.mxu0 0
  %3788 = vmatpush1.bf16.msra.mxu0 0
  %3789 = vmatprep.subr.bf16.mxu0 0
  %3790 = vmatpush1.bf16.msra.mxu0 0
  %3791 = vmatprep.subr.bf16.mxu0 0
  %3792 = vmatpush1.bf16.msra.mxu0 0
  %3793 = vmatprep.mubr.bf16.mxu0 0
  %3794 = vmatmul.mubr.bf16.gmra.mrb[0].mxu0 %v3738
  %v3795 = vpop.f32.mrb[0].mxu0
  %v3796 = vadd.f32 0.0, %v3795
  %v3797 = vpop.f32.mrb[0].mxu0
  %v3798 = vpop.f32.mrb[0].mxu0
  %v3799 = vadd.f32 0.0, %v3798
  %v3800 = vpop.f32.mrb[0].mxu0
  %3801 = vmatprep.mubr.bf16.mxu0 0
  %3802 = vmatmul.mubr.bf16.gmra.mrb[0].mxu0 %v3741
  %v3803 = vpop.f32.mrb[0].mxu0
  %v3804 = vadd.f32 0.0, %v3803
  %v3805 = vpop.f32.mrb[0].mxu0
  %v3806 = vpop.f32.mrb[0].mxu0
  %v3807 = vadd.f32 0.0, %v3806
  %v3808 = vpop.f32.mrb[0].mxu0
  %3809 = vmatprep.mubr.bf16.mxu0 0
  %3810 = vmatmul.mubr.bf16.gmra.mrb[0].mxu0 %v3744
  %v3811 = vpop.f32.mrb[0].mxu0
  %v3812 = vadd.f32 0.0, %v3811
  %v3813 = vpop.f32.mrb[0].mxu0
  %v3814 = vpop.f32.mrb[0].mxu0
  %v3815 = vadd.f32 0.0, %v3814
  %v3816 = vpop.f32.mrb[0].mxu0
  %3817 = vmatprep.mubr.bf16.mxu0 0
  %3818 = vmatmul.mubr.bf16.gmra.mrb[0].mxu0 %v3747
  %v3819 = vpop.f32.mrb[0].mxu0
  %v3820 = vadd.f32 0.0, %v3819
  %v3821 = vpop.f32.mrb[0].mxu0
  %v3822 = vpop.f32.mrb[0].mxu0
  %v3823 = vadd.f32 0.0, %v3822
  %v3824 = vpop.f32.mrb[0].mxu0
  %3825 = vmatprep.mubr.bf16.mxu0 0
  %3826 = vmatmul.mubr.bf16.gmra.mrb[0].mxu0 %v3750
  %v3827 = vpop.f32.mrb[0].mxu0
  %v3828 = vadd.f32 0.0, %v3827
  %v3829 = vpop.f32.mrb[0].mxu0
  %v3830 = vpop.f32.mrb[0].mxu0
  %v3831 = vadd.f32 0.0, %v3830
  %v3832 = vpop.f32.mrb[0].mxu0
  %3833 = vmatprep.mubr.bf16.mxu0 0
  %3834 = vmatmul.mubr.bf16.gmra.mrb[0].mxu0 %v3753
  %v3835 = vpop.f32.mrb[0].mxu0
  %v3836 = vadd.f32 0.0, %v3835
  %v3837 = vpop.f32.mrb[0].mxu0
  %v3838 = vpop.f32.mrb[0].mxu0
  %v3839 = vadd.f32 0.0, %v3838
  %v3840 = vpop.f32.mrb[0].mxu0
  %3841 = vmatprep.mubr.bf16.mxu0 0
  %3842 = vmatmul.mubr.bf16.gmra.mrb[0].mxu0 %v3756
  %v3843 = vpop.f32.mrb[0].mxu0
  %v3844 = vadd.f32 0.0, %v3843
  %v3845 = vpop.f32.mrb[0].mxu0
  %v3846 = vpop.f32.mrb[0].mxu0
  %v3847 = vadd.f32 0.0, %v3846
  %v3848 = vpop.f32.mrb[0].mxu0
  %3849 = vmatprep.mubr.bf16.mxu0 0
  %3850 = vmatmul.mubr.bf16.gmra.mrb[0].mxu0 %v3759
  %v3851 = vpop.f32.mrb[0].mxu0
  %v3852 = vadd.f32 0.0, %v3851
  %v3853 = vpop.f32.mrb[0].mxu0
  %v3854 = vpop.f32.mrb[0].mxu0
  %v3855 = vadd.f32 0.0, %v3854
  %v3856 = vpop.f32.mrb[0].mxu0
  %3857 = vdwg.mxu0
  %v3858 = vadd.f32 %v3680, %v3796
  %v3859 = vadd.f32 %v3681, %v3799
  %v3860 = vadd.f32 %v3682, %v3804
  %v3861 = vadd.f32 %v3683, %v3807
  %v3862 = vadd.f32 %v3684, %v3812
  %v3863 = vadd.f32 %v3685, %v3815
  %v3864 = vadd.f32 %v3686, %v3820
  %v3865 = vadd.f32 %v3687, %v3823
  %v3866 = vadd.f32 %v3688, %v3828
  %v3867 = vadd.f32 %v3689, %v3831
  %v3868 = vadd.f32 %v3690, %v3836
  %v3869 = vadd.f32 %v3691, %v3839
  %v3870 = vadd.f32 %v3692, %v3844
  %v3871 = vadd.f32 %v3693, %v3847
  %v3872 = vadd.f32 %v3694, %v3852
  %v3873 = vadd.f32 %v3695, %v3855
  %v3874 = vld [vmem:[%s3517 + $0x2] sm:$0xff]
  %v3875 = vld [vmem:[%s3517 + $0x12] sm:$0xff]
  %v3876 = vld [vmem:[%s3517 + $0x22] sm:$0xff]
  %v3877 = vld [vmem:[%s3517 + $0x32] sm:$0xff]
  %v3878 = vld [vmem:[%s3517 + $0x42] sm:$0xff]
  %v3879 = vld [vmem:[%s3517 + $0x52] sm:$0xff]
  %v3880 = vld [vmem:[%s3517 + $0x62] sm:$0xff]
  %v3881 = vld [vmem:[%s3517 + $0x72] sm:$0xff]
  %v3882 = vld [vmem:[%s3517 + $0xa2] sm:$0xff]
  %v3883 = vld [vmem:[%s3517 + $0xb2] sm:$0xff]
  %v3884 = vld [vmem:[%s3517 + $0xc2] sm:$0xff]
  %v3885 = vld [vmem:[%s3517 + $0xd2] sm:$0xff]
  %v3886 = vld [vmem:[%s3517 + $0xe2] sm:$0xff]
  %v3887 = vld [vmem:[%s3517 + $0xf2] sm:$0xff]
  %v3888 = vld [vmem:[%s3517 + $0x102] sm:$0xff]
  %v3889 = vld [vmem:[%s3517 + $0x112] sm:$0xff]
  %v3890 = vpack.c.bf16 %v3875, %v3874
  %v3891 = vpack.c.bf16 %v3877, %v3876
  %v3892 = vpack.c.bf16 %v3879, %v3878
  %v3893 = vpack.c.bf16 %v3881, %v3880
  %v3894 = vpack.c.bf16 %v3883, %v3882
  %v3895 = vpack.c.bf16 %v3885, %v3884
  %v3896 = vpack.c.bf16 %v3887, %v3886
  %v3897 = vpack.c.bf16 %v3889, %v3888
  %s3898 = scalar_lea.vmem %s3, 128
  %v3899 = vld [vmem:[%s3898] sm:$0xf]
  %v3900 = vld [vmem:[%s3898 + $0x4] sm:$0xf]
  %v3901 = vld [vmem:[%s3898 + $0x8] sm:$0xf]
  %v3902 = vld [vmem:[%s3898 + $0xc] sm:$0xf]
  %v3907 = vunpack.c.l.b16 %v3899
  %v3908 = vunpack.c.l.b16 %v3900
  %v3909 = vunpack.c.l.b16 %v3901
  %v3910 = vunpack.c.l.b16 %v3902
  %v3911 = vpack.c.b16 %v3908, %v3907
  %v3912 = vpack.c.b16 %v3910, %v3909
  %v3916 = vsel %vm79, %v3890, 0
  %v3919 = vsel %vm79, %v3891, 0
  %v3922 = vsel %vm79, %v3892, 0
  %v3925 = vsel %vm79, %v3893, 0
  %v3928 = vsel %vm79, %v3894, 0
  %v3931 = vsel %vm79, %v3895, 0
  %v3934 = vsel %vm79, %v3896, 0
  %v3937 = vsel %vm79, %v3897, 0
  %3939 = vmatprep.subr.bf16.mxu0 0
  %3940 = vmatpush1.bf16.msra.mxu0 %v3911
  %3941 = vmatprep.subr.bf16.mxu0 0
  %3942 = vmatpush1.bf16.msra.mxu0 %v3912
  %3943 = vmatprep.subr.bf16.mxu0 0
  %3944 = vmatpush1.bf16.msra.mxu0 0
  %3945 = vmatprep.subr.bf16.mxu0 0
  %3946 = vmatpush1.bf16.msra.mxu0 0
  %3947 = vmatprep.subr.bf16.mxu0 0
  %3948 = vmatpush1.bf16.msra.mxu0 0
  %3949 = vmatprep.subr.bf16.mxu0 0
  %3950 = vmatpush1.bf16.msra.mxu0 0
  %3951 = vmatprep.subr.bf16.mxu0 0
  %3952 = vmatpush1.bf16.msra.mxu0 0
  %3953 = vmatprep.subr.bf16.mxu0 0
  %3954 = vmatpush1.bf16.msra.mxu0 0
  %3955 = vmatprep.subr.bf16.mxu0 0
  %3956 = vmatpush1.bf16.msra.mxu0 0
  %3957 = vmatprep.subr.bf16.mxu0 0
  %3958 = vmatpush1.bf16.msra.mxu0 0
  %3959 = vmatprep.subr.bf16.mxu0 0
  %3960 = vmatpush1.bf16.msra.mxu0 0
  %3961 = vmatprep.subr.bf16.mxu0 0
  %3962 = vmatpush1.bf16.msra.mxu0 0
  %3963 = vmatprep.subr.bf16.mxu0 0
  %3964 = vmatpush1.bf16.msra.mxu0 0
  %3965 = vmatprep.subr.bf16.mxu0 0
  %3966 = vmatpush1.bf16.msra.mxu0 0
  %3967 = vmatprep.subr.bf16.mxu0 0
  %3968 = vmatpush1.bf16.msra.mxu0 0
  %3969 = vmatprep.subr.bf16.mxu0 0
  %3970 = vmatpush1.bf16.msra.mxu0 0
  %3971 = vmatprep.mubr.bf16.mxu0 0
  %3972 = vmatmul.mubr.bf16.gmra.mrb[0].mxu0 %v3916
  %v3973 = vpop.f32.mrb[0].mxu0
  %v3974 = vadd.f32 0.0, %v3973
  %v3975 = vpop.f32.mrb[0].mxu0
  %v3976 = vpop.f32.mrb[0].mxu0
  %v3977 = vadd.f32 0.0, %v3976
  %v3978 = vpop.f32.mrb[0].mxu0
  %3979 = vmatprep.mubr.bf16.mxu0 0
  %3980 = vmatmul.mubr.bf16.gmra.mrb[0].mxu0 %v3919
  %v3981 = vpop.f32.mrb[0].mxu0
  %v3982 = vadd.f32 0.0, %v3981
  %v3983 = vpop.f32.mrb[0].mxu0
  %v3984 = vpop.f32.mrb[0].mxu0
  %v3985 = vadd.f32 0.0, %v3984
  %v3986 = vpop.f32.mrb[0].mxu0
  %3987 = vmatprep.mubr.bf16.mxu0 0
  %3988 = vmatmul.mubr.bf16.gmra.mrb[0].mxu0 %v3922
  %v3989 = vpop.f32.mrb[0].mxu0
  %v3990 = vadd.f32 0.0, %v3989
  %v3991 = vpop.f32.mrb[0].mxu0
  %v3992 = vpop.f32.mrb[0].mxu0
  %v3993 = vadd.f32 0.0, %v3992
  %v3994 = vpop.f32.mrb[0].mxu0
  %3995 = vmatprep.mubr.bf16.mxu0 0
  %3996 = vmatmul.mubr.bf16.gmra.mrb[0].mxu0 %v3925
  %v3997 = vpop.f32.mrb[0].mxu0
  %v3998 = vadd.f32 0.0, %v3997
  %v3999 = vpop.f32.mrb[0].mxu0
  %v4000 = vpop.f32.mrb[0].mxu0
  %v4001 = vadd.f32 0.0, %v4000
  %v4002 = vpop.f32.mrb[0].mxu0
  %4003 = vmatprep.mubr.bf16.mxu0 0
  %4004 = vmatmul.mubr.bf16.gmra.mrb[0].mxu0 %v3928
  %v4005 = vpop.f32.mrb[0].mxu0
  %v4006 = vadd.f32 0.0, %v4005
  %v4007 = vpop.f32.mrb[0].mxu0
  %v4008 = vpop.f32.mrb[0].mxu0
  %v4009 = vadd.f32 0.0, %v4008
  %v4010 = vpop.f32.mrb[0].mxu0
  %4011 = vmatprep.mubr.bf16.mxu0 0
  %4012 = vmatmul.mubr.bf16.gmra.mrb[0].mxu0 %v3931
  %v4013 = vpop.f32.mrb[0].mxu0
  %v4014 = vadd.f32 0.0, %v4013
  %v4015 = vpop.f32.mrb[0].mxu0
  %v4016 = vpop.f32.mrb[0].mxu0
  %v4017 = vadd.f32 0.0, %v4016
  %v4018 = vpop.f32.mrb[0].mxu0
  %4019 = vmatprep.mubr.bf16.mxu0 0
  %4020 = vmatmul.mubr.bf16.gmra.mrb[0].mxu0 %v3934
  %v4021 = vpop.f32.mrb[0].mxu0
  %v4022 = vadd.f32 0.0, %v4021
  %v4023 = vpop.f32.mrb[0].mxu0
  %v4024 = vpop.f32.mrb[0].mxu0
  %v4025 = vadd.f32 0.0, %v4024
  %v4026 = vpop.f32.mrb[0].mxu0
  %4027 = vmatprep.mubr.bf16.mxu0 0
  %4028 = vmatmul.mubr.bf16.gmra.mrb[0].mxu0 %v3937
  %v4029 = vpop.f32.mrb[0].mxu0
  %v4030 = vadd.f32 0.0, %v4029
  %v4031 = vpop.f32.mrb[0].mxu0
  %v4032 = vpop.f32.mrb[0].mxu0
  %v4033 = vadd.f32 0.0, %v4032
  %v4034 = vpop.f32.mrb[0].mxu0
  %4035 = vdwg.mxu0
  %v4036 = vadd.f32 %v3858, %v3974
  %v4037 = vadd.f32 %v3859, %v3977
  %v4038 = vadd.f32 %v3860, %v3982
  %v4039 = vadd.f32 %v3861, %v3985
  %v4040 = vadd.f32 %v3862, %v3990
  %v4041 = vadd.f32 %v3863, %v3993
  %v4042 = vadd.f32 %v3864, %v3998
  %v4043 = vadd.f32 %v3865, %v4001
  %v4044 = vadd.f32 %v3866, %v4006
  %v4045 = vadd.f32 %v3867, %v4009
  %v4046 = vadd.f32 %v3868, %v4014
  %v4047 = vadd.f32 %v3869, %v4017
  %v4048 = vadd.f32 %v3870, %v4022
  %v4049 = vadd.f32 %v3871, %v4025
  %v4050 = vadd.f32 %v3872, %v4030
  %v4051 = vadd.f32 %v3873, %v4033
  %v4052 = vld [vmem:[%s4] sm:$0x1]
  %v4054 = vlaneseq
  %v4055 = vshrl.u32 %v4054, 7
  %v4056 = vsub.s32 0, %v4055
  %v4057 = vrot.slane %v4052, %v4056
  %v4059 = vadd.f32 %v4036, %v4057
  %v4060 = vadd.f32 %v4037, %v4057
  %v4061 = vadd.f32 %v4038, %v4057
  %v4062 = vadd.f32 %v4039, %v4057
  %v4063 = vadd.f32 %v4040, %v4057
  %v4064 = vadd.f32 %v4041, %v4057
  %v4065 = vadd.f32 %v4042, %v4057
  %v4066 = vadd.f32 %v4043, %v4057
  %v4067 = vadd.f32 %v4044, %v4057
  %v4068 = vadd.f32 %v4045, %v4057
  %v4069 = vadd.f32 %v4046, %v4057
  %v4070 = vadd.f32 %v4047, %v4057
  %v4071 = vadd.f32 %v4048, %v4057
  %v4072 = vadd.f32 %v4049, %v4057
  %v4073 = vadd.f32 %v4050, %v4057
  %v4074 = vadd.f32 %v4051, %v4057
  %v4075 = vpack.c.bf16 %v4060, %v4059
  %v4076 = vpack.c.bf16 %v4062, %v4061
  %v4077 = vpack.c.bf16 %v4064, %v4063
  %v4078 = vpack.c.bf16 %v4066, %v4065
  %v4079 = vpack.c.bf16 %v4068, %v4067
  %v4080 = vpack.c.bf16 %v4070, %v4069
  %v4081 = vpack.c.bf16 %v4072, %v4071
  %v4082 = vpack.c.bf16 %v4074, %v4073
  %v4083 = vld [vmem:[%s5] sm:$0xf]
  %v4084 = vld [vmem:[%s5 + $0x4] sm:$0xf]
  %v4085 = vld [vmem:[%s5 + $0x8] sm:$0xf]
  %v4086 = vld [vmem:[%s5 + $0xc] sm:$0xf]
  %v4087 = vld [vmem:[%s6] sm:$0x1]
  %v4089 = vlaneseq
  %v4090 = vshrl.u32 %v4089, 7
  %v4091 = vsub.s32 0, %v4090
  %v4092 = vrot.slane %v4087, %v4091
  %v4098 = vunpack.c.l.b16 %v4083
  %v4099 = vunpack.c.l.b16 %v4084
  %v4100 = vunpack.c.l.b16 %v4085
  %v4101 = vunpack.c.l.b16 %v4086
  %v4102 = vpack.c.b16 %v4099, %v4098
  %v4103 = vpack.c.b16 %v4101, %v4100
  %v4107 = vsel %vm79, %v4075, 0
  %v4110 = vsel %vm79, %v4076, 0
  %v4113 = vsel %vm79, %v4077, 0
  %v4116 = vsel %vm79, %v4078, 0
  %v4119 = vsel %vm79, %v4079, 0
  %v4122 = vsel %vm79, %v4080, 0
  %v4125 = vsel %vm79, %v4081, 0
  %v4128 = vsel %vm79, %v4082, 0
  %4130 = vmatprep.subr.bf16.mxu0 0
  %4131 = vmatpush1.bf16.msra.mxu0 %v4102
  %4132 = vmatprep.subr.bf16.mxu0 0
  %4133 = vmatpush1.bf16.msra.mxu0 %v4103
  %4134 = vmatprep.subr.bf16.mxu0 0
  %4135 = vmatpush1.bf16.msra.mxu0 0
  %4136 = vmatprep.subr.bf16.mxu0 0
  %4137 = vmatpush1.bf16.msra.mxu0 0
  %4138 = vmatprep.subr.bf16.mxu0 0
  %4139 = vmatpush1.bf16.msra.mxu0 0
  %4140 = vmatprep.subr.bf16.mxu0 0
  %4141 = vmatpush1.bf16.msra.mxu0 0
  %4142 = vmatprep.subr.bf16.mxu0 0
  %4143 = vmatpush1.bf16.msra.mxu0 0
  %4144 = vmatprep.subr.bf16.mxu0 0
  %4145 = vmatpush1.bf16.msra.mxu0 0
  %4146 = vmatprep.subr.bf16.mxu0 0
  %4147 = vmatpush1.bf16.msra.mxu0 0
  %4148 = vmatprep.subr.bf16.mxu0 0
  %4149 = vmatpush1.bf16.msra.mxu0 0
  %4150 = vmatprep.subr.bf16.mxu0 0
  %4151 = vmatpush1.bf16.msra.mxu0 0
  %4152 = vmatprep.subr.bf16.mxu0 0
  %4153 = vmatpush1.bf16.msra.mxu0 0
  %4154 = vmatprep.subr.bf16.mxu0 0
  %4155 = vmatpush1.bf16.msra.mxu0 0
  %4156 = vmatprep.subr.bf16.mxu0 0
  %4157 = vmatpush1.bf16.msra.mxu0 0
  %4158 = vmatprep.subr.bf16.mxu0 0
  %4159 = vmatpush1.bf16.msra.mxu0 0
  %4160 = vmatprep.subr.bf16.mxu0 0
  %4161 = vmatpush1.bf16.msra.mxu0 0
  %4162 = vmatprep.mubr.bf16.mxu0 0
  %4163 = vmatmul.mubr.bf16.gmra.mrb[0].mxu0 %v4107
  %v4164 = vpop.f32.mrb[0].mxu0
  %v4165 = vadd.f32 %v4092, %v4164
  %v4166 = vpop.f32.mrb[0].mxu0
  %v4167 = vpop.f32.mrb[0].mxu0
  %v4168 = vadd.f32 %v4092, %v4167
  %v4169 = vpop.f32.mrb[0].mxu0
  %4170 = vmatprep.mubr.bf16.mxu0 0
  %4171 = vmatmul.mubr.bf16.gmra.mrb[0].mxu0 %v4110
  %v4172 = vpop.f32.mrb[0].mxu0
  %v4173 = vadd.f32 %v4092, %v4172
  %v4174 = vpop.f32.mrb[0].mxu0
  %v4175 = vpop.f32.mrb[0].mxu0
  %v4176 = vadd.f32 %v4092, %v4175
  %v4177 = vpop.f32.mrb[0].mxu0
  %4178 = vmatprep.mubr.bf16.mxu0 0
  %4179 = vmatmul.mubr.bf16.gmra.mrb[0].mxu0 %v4113
  %v4180 = vpop.f32.mrb[0].mxu0
  %v4181 = vadd.f32 %v4092, %v4180
  %v4182 = vpop.f32.mrb[0].mxu0
  %v4183 = vpop.f32.mrb[0].mxu0
  %v4184 = vadd.f32 %v4092, %v4183
  %v4185 = vpop.f32.mrb[0].mxu0
  %4186 = vmatprep.mubr.bf16.mxu0 0
  %4187 = vmatmul.mubr.bf16.gmra.mrb[0].mxu0 %v4116
  %v4188 = vpop.f32.mrb[0].mxu0
  %v4189 = vadd.f32 %v4092, %v4188
  %v4190 = vpop.f32.mrb[0].mxu0
  %v4191 = vpop.f32.mrb[0].mxu0
  %v4192 = vadd.f32 %v4092, %v4191
  %v4193 = vpop.f32.mrb[0].mxu0
  %4194 = vmatprep.mubr.bf16.mxu0 0
  %4195 = vmatmul.mubr.bf16.gmra.mrb[0].mxu0 %v4119
  %v4196 = vpop.f32.mrb[0].mxu0
  %v4197 = vadd.f32 %v4092, %v4196
  %v4198 = vpop.f32.mrb[0].mxu0
  %v4199 = vpop.f32.mrb[0].mxu0
  %v4200 = vadd.f32 %v4092, %v4199
  %v4201 = vpop.f32.mrb[0].mxu0
  %4202 = vmatprep.mubr.bf16.mxu0 0
  %4203 = vmatmul.mubr.bf16.gmra.mrb[0].mxu0 %v4122
  %v4204 = vpop.f32.mrb[0].mxu0
  %v4205 = vadd.f32 %v4092, %v4204
  %v4206 = vpop.f32.mrb[0].mxu0
  %v4207 = vpop.f32.mrb[0].mxu0
  %v4208 = vadd.f32 %v4092, %v4207
  %v4209 = vpop.f32.mrb[0].mxu0
  %4210 = vmatprep.mubr.bf16.mxu0 0
  %4211 = vmatmul.mubr.bf16.gmra.mrb[0].mxu0 %v4125
  %v4212 = vpop.f32.mrb[0].mxu0
  %v4213 = vadd.f32 %v4092, %v4212
  %v4214 = vpop.f32.mrb[0].mxu0
  %v4215 = vpop.f32.mrb[0].mxu0
  %v4216 = vadd.f32 %v4092, %v4215
  %v4217 = vpop.f32.mrb[0].mxu0
  %4218 = vmatprep.mubr.bf16.mxu0 0
  %4219 = vmatmul.mubr.bf16.gmra.mrb[0].mxu0 %v4128
  %v4220 = vpop.f32.mrb[0].mxu0
  %v4221 = vadd.f32 %v4092, %v4220
  %v4222 = vpop.f32.mrb[0].mxu0
  %v4223 = vpop.f32.mrb[0].mxu0
  %v4224 = vadd.f32 %v4092, %v4223
  %v4225 = vpop.f32.mrb[0].mxu0
  %4226 = vdwg.mxu0
  %v4227 = vsel %vm79, %v4165, 0.0
  %v4228 = vsel %vm79, %v4168, 0.0
  %v4229 = vadd.f32 %v4227, %v4228
  %v4230 = vsel %vm79, %v4173, 0.0
  %v4231 = vadd.f32 %v4229, %v4230
  %v4232 = vsel %vm79, %v4176, 0.0
  %v4233 = vadd.f32 %v4231, %v4232
  %v4234 = vsel %vm79, %v4181, 0.0
  %v4235 = vadd.f32 %v4233, %v4234
  %v4236 = vsel %vm79, %v4184, 0.0
  %v4237 = vadd.f32 %v4235, %v4236
  %v4238 = vsel %vm79, %v4189, 0.0
  %v4239 = vadd.f32 %v4237, %v4238
  %v4240 = vsel %vm79, %v4192, 0.0
  %v4241 = vadd.f32 %v4239, %v4240
  %v4242 = vsel %vm79, %v4197, 0.0
  %v4243 = vadd.f32 %v4241, %v4242
  %v4244 = vsel %vm79, %v4200, 0.0
  %v4245 = vadd.f32 %v4243, %v4244
  %v4246 = vsel %vm79, %v4205, 0.0
  %v4247 = vadd.f32 %v4245, %v4246
  %v4248 = vsel %vm79, %v4208, 0.0
  %v4249 = vadd.f32 %v4247, %v4248
  %v4250 = vsel %vm79, %v4213, 0.0
  %v4251 = vadd.f32 %v4249, %v4250
  %v4252 = vsel %vm79, %v4216, 0.0
  %v4253 = vadd.f32 %v4251, %v4252
  %v4254 = vsel %vm79, %v4221, 0.0
  %v4255 = vadd.f32 %v4253, %v4254
  %v4256 = vsel %vm79, %v4224, 0.0
  %v4257 = vadd.f32 %v4255, %v4256
  %v4258 = vrot.slane %v4257, 4
  %v4259 = vadd.f32 %v4257, %v4258
  %v4260 = vrot.slane %v4259, 2
  %v4261 = vadd.f32 %v4259, %v4260
  %v4262 = vrot.slane %v4261, 1
  %v4263 = vadd.f32 %v4261, %v4262
  %v4264 = vmul.f32 %v4165, %v4165
  %v4265 = vmul.f32 %v4168, %v4168
  %v4266 = vmul.f32 %v4173, %v4173
  %v4267 = vmul.f32 %v4176, %v4176
  %v4268 = vmul.f32 %v4181, %v4181
  %v4269 = vmul.f32 %v4184, %v4184
  %v4270 = vmul.f32 %v4189, %v4189
  %v4271 = vmul.f32 %v4192, %v4192
  %v4272 = vmul.f32 %v4197, %v4197
  %v4273 = vmul.f32 %v4200, %v4200
  %v4274 = vmul.f32 %v4205, %v4205
  %v4275 = vmul.f32 %v4208, %v4208
  %v4276 = vmul.f32 %v4213, %v4213
  %v4277 = vmul.f32 %v4216, %v4216
  %v4278 = vmul.f32 %v4221, %v4221
  %v4279 = vmul.f32 %v4224, %v4224
  %v4280 = vsel %vm79, %v4264, 0.0
  %v4281 = vsel %vm79, %v4265, 0.0
  %v4282 = vadd.f32 %v4280, %v4281
  %v4283 = vsel %vm79, %v4266, 0.0
  %v4284 = vadd.f32 %v4282, %v4283
  %v4285 = vsel %vm79, %v4267, 0.0
  %v4286 = vadd.f32 %v4284, %v4285
  %v4287 = vsel %vm79, %v4268, 0.0
  %v4288 = vadd.f32 %v4286, %v4287
  %v4289 = vsel %vm79, %v4269, 0.0
  %v4290 = vadd.f32 %v4288, %v4289
  %v4291 = vsel %vm79, %v4270, 0.0
  %v4292 = vadd.f32 %v4290, %v4291
  %v4293 = vsel %vm79, %v4271, 0.0
  %v4294 = vadd.f32 %v4292, %v4293
  %v4295 = vsel %vm79, %v4272, 0.0
  %v4296 = vadd.f32 %v4294, %v4295
  %v4297 = vsel %vm79, %v4273, 0.0
  %v4298 = vadd.f32 %v4296, %v4297
  %v4299 = vsel %vm79, %v4274, 0.0
  %v4300 = vadd.f32 %v4298, %v4299
  %v4301 = vsel %vm79, %v4275, 0.0
  %v4302 = vadd.f32 %v4300, %v4301
  %v4303 = vsel %vm79, %v4276, 0.0
  %v4304 = vadd.f32 %v4302, %v4303
  %v4305 = vsel %vm79, %v4277, 0.0
  %v4306 = vadd.f32 %v4304, %v4305
  %v4307 = vsel %vm79, %v4278, 0.0
  %v4308 = vadd.f32 %v4306, %v4307
  %v4309 = vsel %vm79, %v4279, 0.0
  %v4310 = vadd.f32 %v4308, %v4309
  %v4311 = vrot.slane %v4310, 4
  %v4312 = vadd.f32 %v4310, %v4311
  %v4313 = vrot.slane %v4312, 2
  %v4314 = vadd.f32 %v4312, %v4313
  %v4315 = vrot.slane %v4314, 1
  %v4316 = vadd.f32 %v4314, %v4315
  %v4317 = vmul.f32 %v4263, 0.0078125
  %v4318 = vmul.f32 %v4316, 0.0078125
  %v4319 = vmul.f32 %v4317, %v4317
  %v4320 = vsub.f32 %v4318, %v4319
  %v4321 = vmax.f32 %v4320, 0.0
  %v4322 = vsub.f32 %v4165, %v4317
  %v4323 = vsub.f32 %v4168, %v4317
  %v4324 = vsub.f32 %v4173, %v4317
  %v4325 = vsub.f32 %v4176, %v4317
  %v4326 = vsub.f32 %v4181, %v4317
  %v4327 = vsub.f32 %v4184, %v4317
  %v4328 = vsub.f32 %v4189, %v4317
  %v4329 = vsub.f32 %v4192, %v4317
  %v4330 = vsub.f32 %v4197, %v4317
  %v4331 = vsub.f32 %v4200, %v4317
  %v4332 = vsub.f32 %v4205, %v4317
  %v4333 = vsub.f32 %v4208, %v4317
  %v4334 = vsub.f32 %v4213, %v4317
  %v4335 = vsub.f32 %v4216, %v4317
  %v4336 = vsub.f32 %v4221, %v4317
  %v4337 = vsub.f32 %v4224, %v4317
  %v4338 = vadd.f32 %v4321, 1e-05
  %v4339 = vrsqrt.pop %v4338
  %v4340 = vmul.f32 %v4322, %v4339
  %v4341 = vmul.f32 %v4323, %v4339
  %v4342 = vmul.f32 %v4324, %v4339
  %v4343 = vmul.f32 %v4325, %v4339
  %v4344 = vmul.f32 %v4326, %v4339
  %v4345 = vmul.f32 %v4327, %v4339
  %v4346 = vmul.f32 %v4328, %v4339
  %v4347 = vmul.f32 %v4329, %v4339
  %v4348 = vmul.f32 %v4330, %v4339
  %v4349 = vmul.f32 %v4331, %v4339
  %v4350 = vmul.f32 %v4332, %v4339
  %v4351 = vmul.f32 %v4333, %v4339
  %v4352 = vmul.f32 %v4334, %v4339
  %v4353 = vmul.f32 %v4335, %v4339
  %v4354 = vmul.f32 %v4336, %v4339
  %v4355 = vmul.f32 %v4337, %v4339
  %v4356 = vmax.f32 %v4340, 0.0
  %v4357 = vmax.f32 %v4341, 0.0
  %v4358 = vmax.f32 %v4342, 0.0
  %v4359 = vmax.f32 %v4343, 0.0
  %v4360 = vmax.f32 %v4344, 0.0
  %v4361 = vmax.f32 %v4345, 0.0
  %v4362 = vmax.f32 %v4346, 0.0
  %v4363 = vmax.f32 %v4347, 0.0
  %v4364 = vmax.f32 %v4348, 0.0
  %v4365 = vmax.f32 %v4349, 0.0
  %v4366 = vmax.f32 %v4350, 0.0
  %v4367 = vmax.f32 %v4351, 0.0
  %v4368 = vmax.f32 %v4352, 0.0
  %v4369 = vmax.f32 %v4353, 0.0
  %v4370 = vmax.f32 %v4354, 0.0
  %v4371 = vmax.f32 %v4355, 0.0
  %v4372 = vadd.f32 %v4356, %v131
  %v4373 = vadd.f32 %v4357, %v132
  %v4374 = vadd.f32 %v4358, %v133
  %v4375 = vadd.f32 %v4359, %v134
  %v4376 = vadd.f32 %v4360, %v135
  %v4377 = vadd.f32 %v4361, %v136
  %v4378 = vadd.f32 %v4362, %v137
  %v4379 = vadd.f32 %v4363, %v138
  %v4380 = vadd.f32 %v4364, %v139
  %v4381 = vadd.f32 %v4365, %v140
  %v4382 = vadd.f32 %v4366, %v141
  %v4383 = vadd.f32 %v4367, %v142
  %v4384 = vadd.f32 %v4368, %v143
  %v4385 = vadd.f32 %v4369, %v144
  %v4386 = vadd.f32 %v4370, %v145
  %v4387 = vadd.f32 %v4371, %v146
  %4388 = vst.msk [vmem:[%s7] sm:$0xff] %vm79, %v4372
  %4389 = vst.msk [vmem:[%s7 + $0x8] sm:$0xff] %vm79, %v4373
  %4390 = vst.msk [vmem:[%s7 + $0x10] sm:$0xff] %vm79, %v4374
  %4391 = vst.msk [vmem:[%s7 + $0x18] sm:$0xff] %vm79, %v4375
  %4392 = vst.msk [vmem:[%s7 + $0x20] sm:$0xff] %vm79, %v4376
  %4393 = vst.msk [vmem:[%s7 + $0x28] sm:$0xff] %vm79, %v4377
  %4394 = vst.msk [vmem:[%s7 + $0x30] sm:$0xff] %vm79, %v4378
  %4395 = vst.msk [vmem:[%s7 + $0x38] sm:$0xff] %vm79, %v4379
  %4396 = vst.msk [vmem:[%s7 + $0x40] sm:$0xff] %vm79, %v4380
  %4397 = vst.msk [vmem:[%s7 + $0x48] sm:$0xff] %vm79, %v4381
  %4398 = vst.msk [vmem:[%s7 + $0x50] sm:$0xff] %vm79, %v4382
  %4399 = vst.msk [vmem:[%s7 + $0x58] sm:$0xff] %vm79, %v4383
  %4400 = vst.msk [vmem:[%s7 + $0x60] sm:$0xff] %vm79, %v4384
  %4401 = vst.msk [vmem:[%s7 + $0x68] sm:$0xff] %vm79, %v4385
  %4402 = vst.msk [vmem:[%s7 + $0x70] sm:$0xff] %vm79, %v4386
  %4403 = vst.msk [vmem:[%s7 + $0x78] sm:$0xff] %vm79, %v4387
  // Predicated region
  $region30: #{tpu_custom_call.1} parent=0 // pred_check
    _
  $region31: #{tpu_custom_call.1} parent=0 // pred_check_branch
    %4405 = sbr.rel (0) target = $region33
  $region32: #{tpu_custom_call.1} parent=0 // pred_region
    _
  $region33: #{tpu_custom_call.1} parent=0 // pred_fallthru
    _
  // Predicated region
  $region34: #{tpu_custom_call.1} parent=0 // pred_check
    _
  $region35: #{tpu_custom_call.1} parent=0 // pred_check_branch
    %4407 = sbr.rel (0) target = $region37
  $region36: #{tpu_custom_call.1} parent=0 // pred_region
    _
  $region37: #{tpu_custom_call.1} parent=0 // pred_fallthru
    _

</llo_original>
